<compile_context>
chip_gen: v7x
topology: tpu7x:2x2x1
jax: 0.10.0
libtpu: 0.0.40
codegen_flags: <defaults>
</compile_context>

<pallas_src>
import functools
import math

import jax
import jax.numpy as jnp
from jax.experimental import pallas as pl
from jax.experimental.pallas import tpu as pltpu


# --------------------------------------------------------------------------------------
# Kernel
# --------------------------------------------------------------------------------------
def transformer_block_kernel(
    v_ref, k_ref, q_ref, m_ref,
    wv_ref, bv_ref, wk_ref, bk_ref, wq_ref, bq_ref, wo_ref, bo_ref,
    g1_ref, be1_ref, w1_ref, bf1_ref, w2_ref, bf2_ref, g2_ref, be2_ref,
    out_ref,
    qh_sc, m_sc, l_sc, acc_sc,
    *, heads, head_dim):
    """Grid = (batch_tile, q_tile, kv_tile); kv is an 'arbitrary' online-softmax axis."""
    B, Tq, E = q_ref.shape
    Tk = k_ref.shape[1]
    H, D = heads, head_dim
    kv = pl.program_id(2)
    bf16 = jnp.bfloat16

    def split_heads(x2d, L):
        # (B*L, E) -> (B*H, L, D).
        # TODO(synk): drop this relayout via einsum('bqhd,bkhd->bhqk') once Mosaic
        #             dot_general non-leading batch dims are confirmed to lower cleanly.
        return x2d.reshape(B, L, H, D).transpose(0, 2, 1, 3).reshape(B * H, L, D)

    # ---- first kv step of this (batch, q) tile: project Q once, reset accumulators ----
    @pl.when(kv == 0)
    def _init():
        q_in = q_ref[...].reshape(B * Tq, E)
        # 1/sqrt(E) is already folded into wq/bq by the wrapper.
        qp = jnp.dot(q_in.astype(bf16), wq_ref[...],
                     preferred_element_type=jnp.float32) + bq_ref[...]
        qh_sc[...] = split_heads(qp, Tq).astype(qh_sc.dtype)
        m_sc[...] = jnp.full_like(m_sc, -jnp.inf)
        l_sc[...] = jnp.zeros_like(l_sc)
        acc_sc[...] = jnp.zeros_like(acc_sc)

    # ---- every kv step: project this K/V chunk and do an online-softmax update --------
    k_in = k_ref[...].reshape(B * Tk, E)
    v_in = v_ref[...].reshape(B * Tk, E)
    kp = jnp.dot(k_in.astype(bf16), wk_ref[...],
                 preferred_element_type=jnp.float32) + bk_ref[...]
    vp = jnp.dot(v_in.astype(bf16), wv_ref[...],
                 preferred_element_type=jnp.float32) + bv_ref[...]
    kh = split_heads(kp, Tk).astype(bf16)
    vh = split_heads(vp, Tk).astype(bf16)

    s = jnp.einsum('bqd,bkd->bqk', qh_sc[...], kh,
                   preferred_element_type=jnp.float32)               # (B*H, Tq, Tk)
    valid = m_ref[...] != 0                                          # one compare per step
    s = jnp.where(valid[:, None, :, :], s.reshape(B, H, Tq, Tk),
                  -1e30).reshape(B * H, Tq, Tk)

    m_prev = m_sc[...]
    m_new = jnp.maximum(m_prev, jnp.max(s, axis=-1, keepdims=True))
    alpha = jnp.exp(m_prev - m_new)
    p = jnp.exp(s - m_new)
    l_sc[...] = alpha * l_sc[...] + jnp.sum(p, axis=-1, keepdims=True)
    acc_sc[...] = alpha * acc_sc[...] + jnp.einsum(
        'bqk,bkd->bqd', p.astype(bf16), vh, preferred_element_type=jnp.float32)
    m_sc[...] = m_new

    # ---- last kv step: fc_out, residual+LN, FFN, residual+LN, write the tile ----------
    @pl.when(kv == pl.num_programs(2) - 1)
    def _finalize():
        # approx reciprocal (EUP slot) is fine at inference tolerances; use approx=False
        # if this kernel is ever reused for training.
        ctx = acc_sc[...] * pl.reciprocal(l_sc[...], approx=True)    # (B*H, Tq, D)
        ctx = ctx.reshape(B, H, Tq, D).transpose(0, 2, 1, 3).reshape(B * Tq, E)
        attn_out = jnp.dot(ctx.astype(bf16), wo_ref[...],
                           preferred_element_type=jnp.float32) + bo_ref[...]

        def layer_norm(x, g, b, eps=1e-5):            # stats stay in f32
            mu = jnp.mean(x, axis=-1, keepdims=True)
            xc = x - mu
            var = jnp.mean(xc * xc, axis=-1, keepdims=True)
            return xc * jax.lax.rsqrt(var + eps) * g + b

        q_in = q_ref[...].reshape(B * Tq, E)
        x = layer_norm(q_in + attn_out, g1_ref[...], be1_ref[...])   # dropout == identity
        # TODO(synk): tile the FFN hidden dim (loop over Hf chunks) for very large E on
        #             v7x so h1 + w1/w2 never dominate the 64 MiB VMEM.
        h1 = jnp.dot(x.astype(bf16), w1_ref[...],
                     preferred_element_type=jnp.float32) + bf1_ref[...]
        h1 = jnp.maximum(h1, 0.0)
        ff = jnp.dot(h1.astype(bf16), w2_ref[...],
                     preferred_element_type=jnp.float32) + bf2_ref[...]
        out = layer_norm(ff + x, g2_ref[...], be2_ref[...])
        # TODO(synk): for E % 128 != 0 this store is a masked vst; pad E to a lane-dense
        #             multiple of 128 in a production variant.
        out_ref[...] = out.reshape(B, Tq, E).astype(out_ref.dtype)


# --------------------------------------------------------------------------------------
# Tiling / VMEM heuristics (generation-aware)
# --------------------------------------------------------------------------------------
def _vmem_capacity_bytes():
    try:
        return int(pltpu.get_tpu_info().vmem_capacity_bytes)
    except Exception:                      # conservative default: v7x per-TC VMEM
        return 64 * 2**20


def _step_bytes(B, tq, tk, E, heads, hidden):
    """Rough per-grid-step VMEM footprint (activations only), in bytes."""
    D = E // heads
    f32, bf16 = 4, 2
    io = 2 * B * (tq * E * f32 + 2 * tk * E * f32 + tq * tk)     # dbl-buffered q,k,v + i8 mask
    out = 2 * B * tq * E * f32
    scratch = B * heads * tq * (D * (f32 + bf16) + 2 * f32)
    interm = (2 * B * heads * tq * tk * f32                      # scores + probs
              + 2 * B * heads * tk * D * bf16 + 2 * B * tk * E * f32
              + B * tq * hidden * f32                            # FFN hidden (untiled)
              + 6 * B * tq * E * f32)                            # ctx / x / ff / out temps
    return io + out + scratch + interm


def _largest_divisor_tile(total, target, align):
    """Largest multiple of `align` that divides `total` and is <= target, else `total`
    (a full, un-tiled dim is always a legal Pallas block)."""
    if total <= target:
        return total
    t = (min(target, total) // align) * align
    while t >= align:
        if total % t == 0:
            return t
        t -= align
    return total


def _plan_tiles(N, Lq, Lk, E, heads, hidden, weight_bytes, vmem_cap):
    """Tq multiple of 8 (sublane), Tk multiple of 128 (lane dim of the mask block) unless
    the dim is left un-tiled.  Bigger tiles on 128 MiB chips (v5e/v6e), smaller on v7x."""
    big = vmem_cap >= 96 * 2**20
    tq = _largest_divisor_tile(Lq, 512 if big else 256, 8)
    tk = _largest_divisor_tile(Lk, 1024 if big else 512, 128)
    budget = max(int(vmem_cap * (0.55 if big else 0.45)) - 2 * weight_bytes, 2 * 2**20)
    row_target = 1024 if big else 512
    b = max(1, min(N, row_target // max(tq, 1)))
    while b > 1 and (N % b != 0 or _step_bytes(b, tq, tk, E, heads, hidden) > budget):
        b -= 1
    return b, tq, tk


# --------------------------------------------------------------------------------------
# Wrapper
# --------------------------------------------------------------------------------------
def transformer_block(value, key, query, mask, params, *, heads):
    N, Lq, E = query.shape
    Lk = key.shape[1]
    assert value.shape[1] == Lk, "attention requires len(value) == len(key)"
    head_dim = E // heads
    hidden = params["w1"].shape[1]

    # Fold the 1/sqrt(embed_size) softmax scale into the query projection and ship every
    # matmul weight as bf16 (f32 accumulation happens inside the kernel).
    # TODO(synk): when value/key/query alias (pure self-attention) fuse wq/wk/wv into one
    #             (E, 3E) matmul in the kernel.
    scale = 1.0 / math.sqrt(float(E))
    bf16, f32 = jnp.bfloat16, jnp.float32
    weight_args = (
        params["wv"].astype(bf16), params["bv"].astype(f32),
        params["wk"].astype(bf16), params["bk"].astype(f32),
        (params["wq"] * scale).astype(bf16), (params["bq"] * scale).astype(f32),
        params["wo"].astype(bf16), params["bo"].astype(f32),
        params["g1"].astype(f32), params["beta1"].astype(f32),
        params["w1"].astype(bf16), params["b1"].astype(f32),
        params["w2"].astype(bf16), params["b2"].astype(f32),
        params["g2"].astype(f32), params["beta2"].astype(f32),
    )
    weight_bytes = sum(math.prod(a.shape) * a.dtype.itemsize for a in weight_args)

    cap = _vmem_capacity_bytes()
    B, Tq, Tk = _plan_tiles(N, Lq, Lk, E, heads, hidden, weight_bytes, cap)
    grid = (N // B, Lq // Tq, Lk // Tk)

    mask_i8 = (mask != 0).astype(jnp.int8)

    kernel = functools.partial(transformer_block_kernel, heads=heads, head_dim=head_dim)

    est = 2 * weight_bytes + _step_bytes(B, Tq, Tk, E, heads, hidden)
    vmem_limit = int(min(cap - 16 * 2**20, max(32 * 2**20, int(1.3 * est))))
    vmem_limit = max(vmem_limit, 24 * 2**20)
    compiler_params = pltpu.CompilerParams(
        dimension_semantics=("parallel", "parallel", "arbitrary"),
        vmem_limit_bytes=vmem_limit)

    out_spec = pl.BlockSpec((B, Tq, E), lambda b, q, k: (b, q, 0))
    out_shape = jax.ShapeDtypeStruct((N, Lq, E), jnp.float32)
    scratch_shapes = [
        pltpu.VMEM((B * heads, Tq, head_dim), jnp.bfloat16),   # Q heads (scaled), cached
        pltpu.VMEM((B * heads, Tq, 1), jnp.float32),           # running max
        pltpu.VMEM((B * heads, Tq, 1), jnp.float32),           # running denom
        pltpu.VMEM((B * heads, Tq, head_dim), jnp.float32),    # context accumulator
    ]

    def build_in_specs(weight_mode):
        def wspec(arr):
            imap = lambda b, q, k, _nd=arr.ndim: (0,) * _nd    # constant block index
            if weight_mode is None:
                return pl.BlockSpec(arr.shape, imap)
            return pl.BlockSpec(arr.shape, imap, pipeline_mode=weight_mode)
        return ([
            pl.BlockSpec((B, Tk, E), lambda b, q, k: (b, k, 0)),    # value
            pl.BlockSpec((B, Tk, E), lambda b, q, k: (b, k, 0)),    # key
            pl.BlockSpec((B, Tq, E), lambda b, q, k: (b, q, 0)),    # query
            pl.BlockSpec((B, Tq, Tk), lambda b, q, k: (b, q, k)),   # mask (int8)
        ] + [wspec(a) for a in weight_args])

    def run(weight_mode):
        return pl.pallas_call(
            kernel,
            grid=grid,
            in_specs=build_in_specs(weight_mode),
            out_specs=out_spec,
            out_shape=out_shape,
            scratch_shapes=scratch_shapes,
            compiler_params=compiler_params,
        )(value, key, query, mask_i8, *weight_args)

    try:
        # Weights: constant block index -> single VMEM buffer, fetched once.
        return run(pl.Buffered(1))
    except (TypeError, ValueError, NotImplementedError):
        # pipeline_mode / Buffered(1) not plumbed on this jax: plain specs (constant
        # index map still avoids repeated weight HBM traffic, just costs a 2nd buffer).
        return run(None)


# --------------------------------------------------------------------------------------
# Plain-JAX reference (replicates the PyTorch forward in eval mode)
# --------------------------------------------------------------------------------------
def reference_transformer_block(value, key, query, mask, params, *, heads):
    N, Lq, E = query.shape
    D = E // heads
    v = value @ params["wv"] + params["bv"]
    k = key @ params["wk"] + params["bk"]
    q = query @ params["wq"] + params["bq"]
    v = v.reshape(N, -1, heads, D)
    k = k.reshape(N, -1, heads, D)
    q = q.reshape(N, Lq, heads, D)
    energy = jnp.einsum("nqhd,nkhd->nhqk", q, k)
    energy = jnp.where(mask[:, None, :, :] == 0, -1e20, energy)
    attn = jax.nn.softmax(energy / (E ** 0.5), axis=3)
    out = jnp.einsum("nhql,nlhd->nqhd", attn, v).reshape(N, Lq, E)
    attn_out = out @ params["wo"] + params["bo"]

    def ln(x, g, b, eps=1e-5):
        mu = jnp.mean(x, axis=-1, keepdims=True)
        var = jnp.mean((x - mu) ** 2, axis=-1, keepdims=True)
        return (x - mu) / jnp.sqrt(var + eps) * g + b

    x = ln(query + attn_out, params["g1"], params["beta1"])
    ff = jnp.maximum(x @ params["w1"] + params["b1"], 0.0) @ params["w2"] + params["b2"]
    return ln(ff + x, params["g2"], params["beta2"])


if __name__ == "__main__":
    N, L, E, heads, fwd_exp = 2, 8, 32, 4, 4
    Hf = fwd_exp * E

    root = jax.random.PRNGKey(0)
    ks = jax.random.split(root, 16)

    def w(k, shape, scale=0.05):
        return (scale * jax.random.normal(k, shape)).astype(jnp.float32)

    params = {
        "wv": w(ks[0], (E, E)), "bv": w(ks[1], (1, E)),
        "wk": w(ks[2], (E, E)), "bk": w(ks[3], (1, E)),
        "wq": w(ks[4], (E, E)), "bq": w(ks[5], (1, E)),
        "wo": w(ks[6], (E, E)), "bo": w(ks[7], (1, E)),
        "g1": jnp.ones((1, E), jnp.float32), "beta1": jnp.zeros((1, E), jnp.float32),
        "w1": w(ks[8], (E, Hf)), "b1": w(ks[9], (1, Hf)),
        "w2": w(ks[10], (Hf, E)), "b2": w(ks[11], (1, E)),
        "g2": jnp.ones((1, E), jnp.float32), "beta2": jnp.zeros((1, E), jnp.float32),
    }

    value = jax.random.normal(ks[12], (N, L, E), jnp.float32)
    key = jax.random.normal(ks[13], (N, L, E), jnp.float32)
    query = jax.random.normal(ks[14], (N, L, E), jnp.float32)

    # mask: [N, Lq, Lk]; batch 0 fully visible, batch 1 has the last 2 key positions masked
    mask = jnp.ones((N, L, L), jnp.float32)
    mask = mask.at[1, :, L - 2:].set(0.0)

    out = transformer_block(value, key, query, mask, params, heads=heads)
    out = jax.block_until_ready(out)

    ref = reference_transformer_block(value, key, query, mask, params, heads=heads)
    assert out.shape == (N, L, E)
    assert bool(jnp.all(jnp.isfinite(out)))
    assert bool(jnp.allclose(out, ref, atol=1e-2, rtol=1e-2)), \
        float(jnp.max(jnp.abs(out - ref)))

    print("KERNEL_OK")
</pallas_src>

<mosaic_0001>
module attributes {stable_mosaic.version = 11 : i64} {
  func.func @transformer_block_kernel(%arg0: i32, %arg1: i32, %arg2: i32, %arg3: memref<2x8x32xf32, #tpu.memory_space<vmem>>, %arg4: memref<2x8x32xf32, #tpu.memory_space<vmem>>, %arg5: memref<2x8x32xf32, #tpu.memory_space<vmem>>, %arg6: memref<2x8x8xi8, #tpu.memory_space<vmem>>, %arg7: memref<32x32xbf16, #tpu.memory_space<vmem>>, %arg8: memref<1x32xf32, #tpu.memory_space<vmem>>, %arg9: memref<32x32xbf16, #tpu.memory_space<vmem>>, %arg10: memref<1x32xf32, #tpu.memory_space<vmem>>, %arg11: memref<32x32xbf16, #tpu.memory_space<vmem>>, %arg12: memref<1x32xf32, #tpu.memory_space<vmem>>, %arg13: memref<32x32xbf16, #tpu.memory_space<vmem>>, %arg14: memref<1x32xf32, #tpu.memory_space<vmem>>, %arg15: memref<1x32xf32, #tpu.memory_space<vmem>>, %arg16: memref<1x32xf32, #tpu.memory_space<vmem>>, %arg17: memref<32x128xbf16, #tpu.memory_space<vmem>>, %arg18: memref<1x128xf32, #tpu.memory_space<vmem>>, %arg19: memref<128x32xbf16, #tpu.memory_space<vmem>>, %arg20: memref<1x32xf32, #tpu.memory_space<vmem>>, %arg21: memref<1x32xf32, #tpu.memory_space<vmem>>, %arg22: memref<1x32xf32, #tpu.memory_space<vmem>>, %arg23: memref<2x8x32xf32, #tpu.memory_space<vmem>>, %arg24: memref<8x8x8xbf16, #tpu.memory_space<vmem>>, %arg25: memref<8x8x1xf32, #tpu.memory_space<vmem>>, %arg26: memref<8x8x1xf32, #tpu.memory_space<vmem>>, %arg27: memref<8x8x8xf32, #tpu.memory_space<vmem>>) attributes {dimension_semantics = [#tpu.dimension_semantics<parallel>, #tpu.dimension_semantics<parallel>, #tpu.dimension_semantics<arbitrary>], iteration_bounds = array<i64: 1, 1, 1>, scalar_prefetch = 0 : i64, scratch_operands = 4 : i64, tpu.core_type = #tpu.core_type<tc>, window_params = [{transform_indices = @transform_0, window_bounds = array<i64: 2, 8, 32>}, {transform_indices = @transform_1, window_bounds = array<i64: 2, 8, 32>}, {transform_indices = @transform_2, window_bounds = array<i64: 2, 8, 32>}, {transform_indices = @transform_3, window_bounds = array<i64: 2, 8, 8>}, {pipeline_mode = #tpu.pipeline_mode<synchronous>, transform_indices = @transform_4, window_bounds = array<i64: 32, 32>}, {pipeline_mode = #tpu.pipeline_mode<synchronous>, transform_indices = @transform_5, window_bounds = array<i64: 1, 32>}, {pipeline_mode = #tpu.pipeline_mode<synchronous>, transform_indices = @transform_6, window_bounds = array<i64: 32, 32>}, {pipeline_mode = #tpu.pipeline_mode<synchronous>, transform_indices = @transform_7, window_bounds = array<i64: 1, 32>}, {pipeline_mode = #tpu.pipeline_mode<synchronous>, transform_indices = @transform_8, window_bounds = array<i64: 32, 32>}, {pipeline_mode = #tpu.pipeline_mode<synchronous>, transform_indices = @transform_9, window_bounds = array<i64: 1, 32>}, {pipeline_mode = #tpu.pipeline_mode<synchronous>, transform_indices = @transform_10, window_bounds = array<i64: 32, 32>}, {pipeline_mode = #tpu.pipeline_mode<synchronous>, transform_indices = @transform_11, window_bounds = array<i64: 1, 32>}, {pipeline_mode = #tpu.pipeline_mode<synchronous>, transform_indices = @transform_12, window_bounds = array<i64: 1, 32>}, {pipeline_mode = #tpu.pipeline_mode<synchronous>, transform_indices = @transform_13, window_bounds = array<i64: 1, 32>}, {pipeline_mode = #tpu.pipeline_mode<synchronous>, transform_indices = @transform_14, window_bounds = array<i64: 32, 128>}, {pipeline_mode = #tpu.pipeline_mode<synchronous>, transform_indices = @transform_15, window_bounds = array<i64: 1, 128>}, {pipeline_mode = #tpu.pipeline_mode<synchronous>, transform_indices = @transform_16, window_bounds = array<i64: 128, 32>}, {pipeline_mode = #tpu.pipeline_mode<synchronous>, transform_indices = @transform_17, window_bounds = array<i64: 1, 32>}, {pipeline_mode = #tpu.pipeline_mode<synchronous>, transform_indices = @transform_18, window_bounds = array<i64: 1, 32>}, {pipeline_mode = #tpu.pipeline_mode<synchronous>, transform_indices = @transform_19, window_bounds = array<i64: 1, 32>}, {transform_indices = @transform_20, window_bounds = array<i64: 2, 8, 32>}]} {
    %c0_i32 = arith.constant 0 : i32
    %0 = arith.cmpi eq, %arg2, %c0_i32 : i32
    %1 = arith.extui %0 : i1 to i32
    %c0_i32_0 = arith.constant 0 : i32
    %2 = arith.cmpi ne, %1, %c0_i32_0 : i32
    scf.if %2 {
      %c0_46 = arith.constant 0 : index
      %c0_47 = arith.constant 0 : index
      %c0_48 = arith.constant 0 : index
      %65 = vector.load %arg5[%c0_46, %c0_47, %c0_48] : memref<2x8x32xf32, #tpu.memory_space<vmem>>, vector<2x8x32xf32>
      %66 = vector.shape_cast %65 : vector<2x8x32xf32> to vector<16x32xf32>
      %67 = arith.truncf %66 : vector<16x32xf32> to vector<16x32xbf16>
      %c0_49 = arith.constant 0 : index
      %c0_50 = arith.constant 0 : index
      %68 = vector.load %arg11[%c0_49, %c0_50] : memref<32x32xbf16, #tpu.memory_space<vmem>>, vector<32x32xbf16>
      %cst_51 = arith.constant dense<0.000000e+00> : vector<16x32xf32>
      %69 = tpu.matmul %67, %68, %cst_51 {dimension_numbers = #tpu.dot_dimension_numbers<[1], [0], [0], [1], [0, 0, 1, 1], [], []>} : vector<16x32xbf16>, vector<32x32xbf16>, vector<16x32xf32> -> vector<16x32xf32>
      %c0_52 = arith.constant 0 : index
      %c0_53 = arith.constant 0 : index
      %70 = vector.load %arg12[%c0_52, %c0_53] : memref<1x32xf32, #tpu.memory_space<vmem>>, vector<1x32xf32>
      %71 = vector.broadcast %70 : vector<1x32xf32> to vector<16x32xf32>
      %72 = arith.addf %69, %71 : vector<16x32xf32>
      %73 = vector.shape_cast %72 : vector<16x32xf32> to vector<2x8x4x8xf32>
      %74 = tpu.transpose %73, [0, 2, 1, 3] : vector<2x8x4x8xf32> -> vector<2x4x8x8xf32>
      %75 = vector.shape_cast %74 : vector<2x4x8x8xf32> to vector<8x8x8xf32>
      %76 = arith.truncf %75 : vector<8x8x8xf32> to vector<8x8x8xbf16>
      %c0_54 = arith.constant 0 : index
      %c0_55 = arith.constant 0 : index
      %c0_56 = arith.constant 0 : index
      %77 = vector.load %arg24[%c0_54, %c0_55, %c0_56] : memref<8x8x8xbf16, #tpu.memory_space<vmem>>, vector<8x8x8xbf16>
      tpu.vector_store %arg24[%c0_54, %c0_55, %c0_56], %76 {strides = array<i32>} : memref<8x8x8xbf16, #tpu.memory_space<vmem>>, vector<8x8x8xbf16>,
      %cst_57 = arith.constant 0xFF800000 : f32
      %78 = vector.broadcast %cst_57 : f32 to vector<8x8x1xf32>
      %c0_58 = arith.constant 0 : index
      %c0_59 = arith.constant 0 : index
      %c0_60 = arith.constant 0 : index
      %79 = vector.load %arg25[%c0_58, %c0_59, %c0_60] : memref<8x8x1xf32, #tpu.memory_space<vmem>>, vector<8x8x1xf32>
      tpu.vector_store %arg25[%c0_58, %c0_59, %c0_60], %78 {strides = array<i32>} : memref<8x8x1xf32, #tpu.memory_space<vmem>>, vector<8x8x1xf32>,
      %cst_61 = arith.constant 0.000000e+00 : f32
      %80 = vector.broadcast %cst_61 : f32 to vector<8x8x1xf32>
      %c0_62 = arith.constant 0 : index
      %c0_63 = arith.constant 0 : index
      %c0_64 = arith.constant 0 : index
      %81 = vector.load %arg26[%c0_62, %c0_63, %c0_64] : memref<8x8x1xf32, #tpu.memory_space<vmem>>, vector<8x8x1xf32>
      tpu.vector_store %arg26[%c0_62, %c0_63, %c0_64], %80 {strides = array<i32>} : memref<8x8x1xf32, #tpu.memory_space<vmem>>, vector<8x8x1xf32>,
      %cst_65 = arith.constant 0.000000e+00 : f32
      %82 = vector.broadcast %cst_65 : f32 to vector<8x8x8xf32>
      %c0_66 = arith.constant 0 : index
      %c0_67 = arith.constant 0 : index
      %c0_68 = arith.constant 0 : index
      %83 = vector.load %arg27[%c0_66, %c0_67, %c0_68] : memref<8x8x8xf32, #tpu.memory_space<vmem>>, vector<8x8x8xf32>
      tpu.vector_store %arg27[%c0_66, %c0_67, %c0_68], %82 {strides = array<i32>} : memref<8x8x8xf32, #tpu.memory_space<vmem>>, vector<8x8x8xf32>,
    } else {
    }
    %c0 = arith.constant 0 : index
    %c0_1 = arith.constant 0 : index
    %c0_2 = arith.constant 0 : index
    %3 = vector.load %arg4[%c0, %c0_1, %c0_2] : memref<2x8x32xf32, #tpu.memory_space<vmem>>, vector<2x8x32xf32>
    %4 = vector.shape_cast %3 : vector<2x8x32xf32> to vector<16x32xf32>
    %c0_3 = arith.constant 0 : index
    %c0_4 = arith.constant 0 : index
    %c0_5 = arith.constant 0 : index
    %5 = vector.load %arg3[%c0_3, %c0_4, %c0_5] : memref<2x8x32xf32, #tpu.memory_space<vmem>>, vector<2x8x32xf32>
    %6 = vector.shape_cast %5 : vector<2x8x32xf32> to vector<16x32xf32>
    %7 = arith.truncf %4 : vector<16x32xf32> to vector<16x32xbf16>
    %c0_6 = arith.constant 0 : index
    %c0_7 = arith.constant 0 : index
    %8 = vector.load %arg9[%c0_6, %c0_7] : memref<32x32xbf16, #tpu.memory_space<vmem>>, vector<32x32xbf16>
    %cst = arith.constant dense<0.000000e+00> : vector<16x32xf32>
    %9 = tpu.matmul %7, %8, %cst {dimension_numbers = #tpu.dot_dimension_numbers<[1], [0], [0], [1], [0, 0, 1, 1], [], []>} : vector<16x32xbf16>, vector<32x32xbf16>, vector<16x32xf32> -> vector<16x32xf32>
    %c0_8 = arith.constant 0 : index
    %c0_9 = arith.constant 0 : index
    %10 = vector.load %arg10[%c0_8, %c0_9] : memref<1x32xf32, #tpu.memory_space<vmem>>, vector<1x32xf32>
    %11 = vector.broadcast %10 : vector<1x32xf32> to vector<16x32xf32>
    %12 = arith.addf %9, %11 : vector<16x32xf32>
    %13 = arith.truncf %6 : vector<16x32xf32> to vector<16x32xbf16>
    %c0_10 = arith.constant 0 : index
    %c0_11 = arith.constant 0 : index
    %14 = vector.load %arg7[%c0_10, %c0_11] : memref<32x32xbf16, #tpu.memory_space<vmem>>, vector<32x32xbf16>
    %cst_12 = arith.constant dense<0.000000e+00> : vector<16x32xf32>
    %15 = tpu.matmul %13, %14, %cst_12 {dimension_numbers = #tpu.dot_dimension_numbers<[1], [0], [0], [1], [0, 0, 1, 1], [], []>} : vector<16x32xbf16>, vector<32x32xbf16>, vector<16x32xf32> -> vector<16x32xf32>
    %c0_13 = arith.constant 0 : index
    %c0_14 = arith.constant 0 : index
    %16 = vector.load %arg8[%c0_13, %c0_14] : memref<1x32xf32, #tpu.memory_space<vmem>>, vector<1x32xf32>
    %17 = vector.broadcast %16 : vector<1x32xf32> to vector<16x32xf32>
    %18 = arith.addf %15, %17 : vector<16x32xf32>
    %19 = vector.shape_cast %12 : vector<16x32xf32> to vector<2x8x4x8xf32>
    %20 = tpu.transpose %19, [0, 2, 1, 3] : vector<2x8x4x8xf32> -> vector<2x4x8x8xf32>
    %21 = vector.shape_cast %20 : vector<2x4x8x8xf32> to vector<8x8x8xf32>
    %22 = arith.truncf %21 : vector<8x8x8xf32> to vector<8x8x8xbf16>
    %23 = vector.shape_cast %18 : vector<16x32xf32> to vector<2x8x4x8xf32>
    %24 = tpu.transpose %23, [0, 2, 1, 3] : vector<2x8x4x8xf32> -> vector<2x4x8x8xf32>
    %25 = vector.shape_cast %24 : vector<2x4x8x8xf32> to vector<8x8x8xf32>
    %26 = arith.truncf %25 : vector<8x8x8xf32> to vector<8x8x8xbf16>
    %c0_15 = arith.constant 0 : index
    %c0_16 = arith.constant 0 : index
    %c0_17 = arith.constant 0 : index
    %27 = vector.load %arg24[%c0_15, %c0_16, %c0_17] : memref<8x8x8xbf16, #tpu.memory_space<vmem>>, vector<8x8x8xbf16>
    "tpu.trace_start"() <{level = 10 : i32, message = "bqd,bkd->bqk"}> : () -> ()
    %cst_18 = arith.constant dense<0.000000e+00> : vector<8x8x8xf32>
    %28 = tpu.matmul %27, %22, %cst_18 {dimension_numbers = #tpu.dot_dimension_numbers<[2], [2], [1], [1], [0, 0, 0, 1, 1, 1], [0], [0]>} : vector<8x8x8xbf16>, vector<8x8x8xbf16>, vector<8x8x8xf32> -> vector<8x8x8xf32>
    "tpu.trace_stop"() : () -> ()
    %c0_19 = arith.constant 0 : index
    %c0_20 = arith.constant 0 : index
    %c0_21 = arith.constant 0 : index
    %29 = vector.load %arg6[%c0_19, %c0_20, %c0_21] : memref<2x8x8xi8, #tpu.memory_space<vmem>>, vector<2x8x8xi8>
    %c0_i8 = arith.constant 0 : i8
    %30 = vector.broadcast %c0_i8 : i8 to vector<2x8x8xi8>
    %31 = arith.cmpi ne, %29, %30 : vector<2x8x8xi8>
    %32 = vector.shape_cast %31 : vector<2x8x8xi1> to vector<2x1x8x8xi1>
    %33 = vector.shape_cast %28 : vector<8x8x8xf32> to vector<2x4x8x8xf32>
    %cst_22 = arith.constant -1.000000e+30 : f32
    %34 = vector.shape_cast %32 : vector<2x1x8x8xi1> to vector<2x1x8x8xi1>
    %35 = vector.broadcast %34 : vector<2x1x8x8xi1> to vector<2x4x8x8xi1>
    %36 = vector.broadcast %cst_22 : f32 to vector<2x4x8x8xf32>
    %37 = arith.select %35, %33, %36 : vector<2x4x8x8xi1>, vector<2x4x8x8xf32>
    %38 = vector.shape_cast %37 : vector<2x4x8x8xf32> to vector<8x8x8xf32>
    %c0_23 = arith.constant 0 : index
    %c0_24 = arith.constant 0 : index
    %c0_25 = arith.constant 0 : index
    %39 = vector.load %arg25[%c0_23, %c0_24, %c0_25] : memref<8x8x1xf32, #tpu.memory_space<vmem>>, vector<8x8x1xf32>
    %cst_26 = arith.constant dense<0xFF800000> : vector<8x8xf32>
    %40 = vector.multi_reduction <maximumf>, %38, %cst_26 [2] : vector<8x8x8xf32> to vector<8x8xf32>
    %41 = vector.shape_cast %40 : vector<8x8xf32> to vector<8x8x1xf32>
    %42 = arith.maximumf %39, %41 : vector<8x8x1xf32>
    %43 = arith.subf %39, %42 : vector<8x8x1xf32>
    %44 = math.exp %43 : vector<8x8x1xf32>
    %45 = vector.broadcast %42 : vector<8x8x1xf32> to vector<8x8x8xf32>
    %46 = arith.subf %38, %45 : vector<8x8x8xf32>
    %47 = math.exp %46 : vector<8x8x8xf32>
    %c0_27 = arith.constant 0 : index
    %c0_28 = arith.constant 0 : index
    %c0_29 = arith.constant 0 : index
    %48 = vector.load %arg26[%c0_27, %c0_28, %c0_29] : memref<8x8x1xf32, #tpu.memory_space<vmem>>, vector<8x8x1xf32>
    %49 = arith.mulf %44, %48 : vector<8x8x1xf32>
    %cst_30 = arith.constant dense<0.000000e+00> : vector<8x8xf32>
    %50 = vector.multi_reduction <add>, %47, %cst_30 [2] : vector<8x8x8xf32> to vector<8x8xf32>
    %51 = vector.shape_cast %50 : vector<8x8xf32> to vector<8x8x1xf32>
    %52 = arith.addf %49, %51 : vector<8x8x1xf32>
    %c0_31 = arith.constant 0 : index
    %c0_32 = arith.constant 0 : index
    %c0_33 = arith.constant 0 : index
    %53 = vector.load %arg26[%c0_31, %c0_32, %c0_33] : memref<8x8x1xf32, #tpu.memory_space<vmem>>, vector<8x8x1xf32>
    tpu.vector_store %arg26[%c0_31, %c0_32, %c0_33], %52 {strides = array<i32>} : memref<8x8x1xf32, #tpu.memory_space<vmem>>, vector<8x8x1xf32>,
    %c0_34 = arith.constant 0 : index
    %c0_35 = arith.constant 0 : index
    %c0_36 = arith.constant 0 : index
    %54 = vector.load %arg27[%c0_34, %c0_35, %c0_36] : memref<8x8x8xf32, #tpu.memory_space<vmem>>, vector<8x8x8xf32>
    %55 = vector.broadcast %44 : vector<8x8x1xf32> to vector<8x8x8xf32>
    %56 = arith.mulf %55, %54 : vector<8x8x8xf32>
    %57 = arith.truncf %47 : vector<8x8x8xf32> to vector<8x8x8xbf16>
    "tpu.trace_start"() <{level = 10 : i32, message = "bqk,bkd->bqd"}> : () -> ()
    %cst_37 = arith.constant dense<0.000000e+00> : vector<8x8x8xf32>
    %58 = tpu.matmul %57, %26, %cst_37 {dimension_numbers = #tpu.dot_dimension_numbers<[2], [1], [1], [2], [0, 0, 0, 1, 1, 2], [0], [0]>} : vector<8x8x8xbf16>, vector<8x8x8xbf16>, vector<8x8x8xf32> -> vector<8x8x8xf32>
    "tpu.trace_stop"() : () -> ()
    %59 = arith.addf %56, %58 : vector<8x8x8xf32>
    %c0_38 = arith.constant 0 : index
    %c0_39 = arith.constant 0 : index
    %c0_40 = arith.constant 0 : index
    %60 = vector.load %arg27[%c0_38, %c0_39, %c0_40] : memref<8x8x8xf32, #tpu.memory_space<vmem>>, vector<8x8x8xf32>
    tpu.vector_store %arg27[%c0_38, %c0_39, %c0_40], %59 {strides = array<i32>} : memref<8x8x8xf32, #tpu.memory_space<vmem>>, vector<8x8x8xf32>,
    %c0_41 = arith.constant 0 : index
    %c0_42 = arith.constant 0 : index
    %c0_43 = arith.constant 0 : index
    %61 = vector.load %arg25[%c0_41, %c0_42, %c0_43] : memref<8x8x1xf32, #tpu.memory_space<vmem>>, vector<8x8x1xf32>
    tpu.vector_store %arg25[%c0_41, %c0_42, %c0_43], %42 {strides = array<i32>} : memref<8x8x1xf32, #tpu.memory_space<vmem>>, vector<8x8x1xf32>,
    %c0_i32_44 = arith.constant 0 : i32
    %62 = arith.cmpi eq, %arg2, %c0_i32_44 : i32
    %63 = arith.extui %62 : i1 to i32
    %c0_i32_45 = arith.constant 0 : i32
    %64 = arith.cmpi ne, %63, %c0_i32_45 : i32
    scf.if %64 {
      %c0_46 = arith.constant 0 : index
      %c0_47 = arith.constant 0 : index
      %c0_48 = arith.constant 0 : index
      %65 = vector.load %arg27[%c0_46, %c0_47, %c0_48] : memref<8x8x8xf32, #tpu.memory_space<vmem>>, vector<8x8x8xf32>
      %c0_49 = arith.constant 0 : index
      %c0_50 = arith.constant 0 : index
      %c0_51 = arith.constant 0 : index
      %66 = vector.load %arg26[%c0_49, %c0_50, %c0_51] : memref<8x8x1xf32, #tpu.memory_space<vmem>>, vector<8x8x1xf32>
      %67 = tpu.reciprocal %66 {approx = true} : vector<8x8x1xf32> -> vector<8x8x1xf32>
      %68 = vector.broadcast %67 : vector<8x8x1xf32> to vector<8x8x8xf32>
      %69 = arith.mulf %65, %68 : vector<8x8x8xf32>
      %70 = vector.shape_cast %69 : vector<8x8x8xf32> to vector<2x4x8x8xf32>
      %71 = tpu.transpose %70, [0, 2, 1, 3] : vector<2x4x8x8xf32> -> vector<2x8x4x8xf32>
      %72 = vector.shape_cast %71 : vector<2x8x4x8xf32> to vector<16x32xf32>
      %73 = arith.truncf %72 : vector<16x32xf32> to vector<16x32xbf16>
      %c0_52 = arith.constant 0 : index
      %c0_53 = arith.constant 0 : index
      %74 = vector.load %arg13[%c0_52, %c0_53] : memref<32x32xbf16, #tpu.memory_space<vmem>>, vector<32x32xbf16>
      %cst_54 = arith.constant dense<0.000000e+00> : vector<16x32xf32>
      %75 = tpu.matmul %73, %74, %cst_54 {dimension_numbers = #tpu.dot_dimension_numbers<[1], [0], [0], [1], [0, 0, 1, 1], [], []>} : vector<16x32xbf16>, vector<32x32xbf16>, vector<16x32xf32> -> vector<16x32xf32>
      %c0_55 = arith.constant 0 : index
      %c0_56 = arith.constant 0 : index
      %76 = vector.load %arg14[%c0_55, %c0_56] : memref<1x32xf32, #tpu.memory_space<vmem>>, vector<1x32xf32>
      %77 = vector.broadcast %76 : vector<1x32xf32> to vector<16x32xf32>
      %78 = arith.addf %75, %77 : vector<16x32xf32>
      %c0_57 = arith.constant 0 : index
      %c0_58 = arith.constant 0 : index
      %c0_59 = arith.constant 0 : index
      %79 = vector.load %arg5[%c0_57, %c0_58, %c0_59] : memref<2x8x32xf32, #tpu.memory_space<vmem>>, vector<2x8x32xf32>
      %80 = vector.shape_cast %79 : vector<2x8x32xf32> to vector<16x32xf32>
      %81 = arith.addf %80, %78 : vector<16x32xf32>
      %c0_60 = arith.constant 0 : index
      %c0_61 = arith.constant 0 : index
      %82 = vector.load %arg15[%c0_60, %c0_61] : memref<1x32xf32, #tpu.memory_space<vmem>>, vector<1x32xf32>
      %c0_62 = arith.constant 0 : index
      %c0_63 = arith.constant 0 : index
      %83 = vector.load %arg16[%c0_62, %c0_63] : memref<1x32xf32, #tpu.memory_space<vmem>>, vector<1x32xf32>
      %cst_64 = arith.constant dense<0.000000e+00> : vector<16xf32>
      %84 = vector.multi_reduction <add>, %81, %cst_64 [1] : vector<16x32xf32> to vector<16xf32>
      %85 = vector.shape_cast %84 : vector<16xf32> to vector<16x1xf32>
      %cst_65 = arith.constant 3.200000e+01 : f32
      %86 = vector.broadcast %cst_65 : f32 to vector<16x1xf32>
      %87 = arith.divf %85, %86 : vector<16x1xf32>
      %88 = vector.broadcast %87 : vector<16x1xf32> to vector<16x32xf32>
      %89 = arith.subf %81, %88 : vector<16x32xf32>
      %90 = arith.mulf %89, %89 : vector<16x32xf32>
      %cst_66 = arith.constant dense<0.000000e+00> : vector<16xf32>
      %91 = vector.multi_reduction <add>, %90, %cst_66 [1] : vector<16x32xf32> to vector<16xf32>
      %92 = vector.shape_cast %91 : vector<16xf32> to vector<16x1xf32>
      %cst_67 = arith.constant 3.200000e+01 : f32
      %93 = vector.broadcast %cst_67 : f32 to vector<16x1xf32>
      %94 = arith.divf %92, %93 : vector<16x1xf32>
      %cst_68 = arith.constant 9.99999974E-6 : f32
      %95 = vector.broadcast %cst_68 : f32 to vector<16x1xf32>
      %96 = arith.addf %94, %95 : vector<16x1xf32>
      %97 = math.rsqrt %96 : vector<16x1xf32>
      %98 = vector.broadcast %97 : vector<16x1xf32> to vector<16x32xf32>
      %99 = arith.mulf %89, %98 : vector<16x32xf32>
      %100 = vector.broadcast %82 : vector<1x32xf32> to vector<16x32xf32>
      %101 = arith.mulf %99, %100 : vector<16x32xf32>
      %102 = vector.broadcast %83 : vector<1x32xf32> to vector<16x32xf32>
      %103 = arith.addf %101, %102 : vector<16x32xf32>
      %104 = arith.truncf %103 : vector<16x32xf32> to vector<16x32xbf16>
      %c0_69 = arith.constant 0 : index
      %c0_70 = arith.constant 0 : index
      %105 = vector.load %arg17[%c0_69, %c0_70] : memref<32x128xbf16, #tpu.memory_space<vmem>>, vector<32x128xbf16>
      %cst_71 = arith.constant dense<0.000000e+00> : vector<16x128xf32>
      %106 = tpu.matmul %104, %105, %cst_71 {dimension_numbers = #tpu.dot_dimension_numbers<[1], [0], [0], [1], [0, 0, 1, 1], [], []>} : vector<16x32xbf16>, vector<32x128xbf16>, vector<16x128xf32> -> vector<16x128xf32>
      %c0_72 = arith.constant 0 : index
      %c0_73 = arith.constant 0 : index
      %107 = vector.load %arg18[%c0_72, %c0_73] : memref<1x128xf32, #tpu.memory_space<vmem>>, vector<1x128xf32>
      %108 = vector.broadcast %107 : vector<1x128xf32> to vector<16x128xf32>
      %109 = arith.addf %106, %108 : vector<16x128xf32>
      %cst_74 = arith.constant 0.000000e+00 : f32
      %110 = vector.broadcast %cst_74 : f32 to vector<16x128xf32>
      %111 = arith.maximumf %109, %110 : vector<16x128xf32>
      %112 = arith.truncf %111 : vector<16x128xf32> to vector<16x128xbf16>
      %c0_75 = arith.constant 0 : index
      %c0_76 = arith.constant 0 : index
      %113 = vector.load %arg19[%c0_75, %c0_76] : memref<128x32xbf16, #tpu.memory_space<vmem>>, vector<128x32xbf16>
      %cst_77 = arith.constant dense<0.000000e+00> : vector<16x32xf32>
      %114 = tpu.matmul %112, %113, %cst_77 {dimension_numbers = #tpu.dot_dimension_numbers<[1], [0], [0], [1], [0, 0, 1, 1], [], []>} : vector<16x128xbf16>, vector<128x32xbf16>, vector<16x32xf32> -> vector<16x32xf32>
      %c0_78 = arith.constant 0 : index
      %c0_79 = arith.constant 0 : index
      %115 = vector.load %arg20[%c0_78, %c0_79] : memref<1x32xf32, #tpu.memory_space<vmem>>, vector<1x32xf32>
      %116 = vector.broadcast %115 : vector<1x32xf32> to vector<16x32xf32>
      %117 = arith.addf %114, %116 : vector<16x32xf32>
      %118 = arith.addf %117, %103 : vector<16x32xf32>
      %c0_80 = arith.constant 0 : index
      %c0_81 = arith.constant 0 : index
      %119 = vector.load %arg21[%c0_80, %c0_81] : memref<1x32xf32, #tpu.memory_space<vmem>>, vector<1x32xf32>
      %c0_82 = arith.constant 0 : index
      %c0_83 = arith.constant 0 : index
      %120 = vector.load %arg22[%c0_82, %c0_83] : memref<1x32xf32, #tpu.memory_space<vmem>>, vector<1x32xf32>
      %cst_84 = arith.constant dense<0.000000e+00> : vector<16xf32>
      %121 = vector.multi_reduction <add>, %118, %cst_84 [1] : vector<16x32xf32> to vector<16xf32>
      %122 = vector.shape_cast %121 : vector<16xf32> to vector<16x1xf32>
      %cst_85 = arith.constant 3.200000e+01 : f32
      %123 = vector.broadcast %cst_85 : f32 to vector<16x1xf32>
      %124 = arith.divf %122, %123 : vector<16x1xf32>
      %125 = vector.broadcast %124 : vector<16x1xf32> to vector<16x32xf32>
      %126 = arith.subf %118, %125 : vector<16x32xf32>
      %127 = arith.mulf %126, %126 : vector<16x32xf32>
      %cst_86 = arith.constant dense<0.000000e+00> : vector<16xf32>
      %128 = vector.multi_reduction <add>, %127, %cst_86 [1] : vector<16x32xf32> to vector<16xf32>
      %129 = vector.shape_cast %128 : vector<16xf32> to vector<16x1xf32>
      %cst_87 = arith.constant 3.200000e+01 : f32
      %130 = vector.broadcast %cst_87 : f32 to vector<16x1xf32>
      %131 = arith.divf %129, %130 : vector<16x1xf32>
      %cst_88 = arith.constant 9.99999974E-6 : f32
      %132 = vector.broadcast %cst_88 : f32 to vector<16x1xf32>
      %133 = arith.addf %131, %132 : vector<16x1xf32>
      %134 = math.rsqrt %133 : vector<16x1xf32>
      %135 = vector.broadcast %134 : vector<16x1xf32> to vector<16x32xf32>
      %136 = arith.mulf %126, %135 : vector<16x32xf32>
      %137 = vector.broadcast %119 : vector<1x32xf32> to vector<16x32xf32>
      %138 = arith.mulf %136, %137 : vector<16x32xf32>
      %139 = vector.broadcast %120 : vector<1x32xf32> to vector<16x32xf32>
      %140 = arith.addf %138, %139 : vector<16x32xf32>
      %141 = vector.shape_cast %140 : vector<16x32xf32> to vector<2x8x32xf32>
      %c0_89 = arith.constant 0 : index
      %c0_90 = arith.constant 0 : index
      %c0_91 = arith.constant 0 : index
      %142 = vector.load %arg23[%c0_89, %c0_90, %c0_91] : memref<2x8x32xf32, #tpu.memory_space<vmem>>, vector<2x8x32xf32>
      tpu.vector_store %arg23[%c0_89, %c0_90, %c0_91], %141 {strides = array<i32>} : memref<2x8x32xf32, #tpu.memory_space<vmem>>, vector<2x8x32xf32>,
    } else {
    }
    return
  }
  func.func @transform_0(%arg0: i32, %arg1: i32, %arg2: i32) -> (i32, i32, i32) {
    %c0_i32 = arith.constant 0 : i32
    %c0_i32_0 = arith.constant 0 : i32
    return %arg0, %arg2, %c0_i32 : i32, i32, i32
  }
  func.func @transform_1(%arg0: i32, %arg1: i32, %arg2: i32) -> (i32, i32, i32) {
    %c0_i32 = arith.constant 0 : i32
    %c0_i32_0 = arith.constant 0 : i32
    return %arg0, %arg2, %c0_i32 : i32, i32, i32
  }
  func.func @transform_2(%arg0: i32, %arg1: i32, %arg2: i32) -> (i32, i32, i32) {
    %c0_i32 = arith.constant 0 : i32
    %c0_i32_0 = arith.constant 0 : i32
    return %arg0, %arg1, %c0_i32 : i32, i32, i32
  }
  func.func @transform_3(%arg0: i32, %arg1: i32, %arg2: i32) -> (i32, i32, i32) {
    %c0_i32 = arith.constant 0 : i32
    return %arg0, %arg1, %arg2 : i32, i32, i32
  }
  func.func @transform_4(%arg0: i32, %arg1: i32, %arg2: i32) -> (i32, i32) {
    %c0_i32 = arith.constant 0 : i32
    %c0_i32_0 = arith.constant 0 : i32
    %c0_i32_1 = arith.constant 0 : i32
    return %c0_i32, %c0_i32_0 : i32, i32
  }
  func.func @transform_5(%arg0: i32, %arg1: i32, %arg2: i32) -> (i32, i32) {
    %c0_i32 = arith.constant 0 : i32
    %c0_i32_0 = arith.constant 0 : i32
    %c0_i32_1 = arith.constant 0 : i32
    return %c0_i32, %c0_i32_0 : i32, i32
  }
  func.func @transform_6(%arg0: i32, %arg1: i32, %arg2: i32) -> (i32, i32) {
    %c0_i32 = arith.constant 0 : i32
    %c0_i32_0 = arith.constant 0 : i32
    %c0_i32_1 = arith.constant 0 : i32
    return %c0_i32, %c0_i32_0 : i32, i32
  }
  func.func @transform_7(%arg0: i32, %arg1: i32, %arg2: i32) -> (i32, i32) {
    %c0_i32 = arith.constant 0 : i32
    %c0_i32_0 = arith.constant 0 : i32
    %c0_i32_1 = arith.constant 0 : i32
    return %c0_i32, %c0_i32_0 : i32, i32
  }
  func.func @transform_8(%arg0: i32, %arg1: i32, %arg2: i32) -> (i32, i32) {
    %c0_i32 = arith.constant 0 : i32
    %c0_i32_0 = arith.constant 0 : i32
    %c0_i32_1 = arith.constant 0 : i32
    return %c0_i32, %c0_i32_0 : i32, i32
  }
  func.func @transform_9(%arg0: i32, %arg1: i32, %arg2: i32) -> (i32, i32) {
    %c0_i32 = arith.constant 0 : i32
    %c0_i32_0 = arith.constant 0 : i32
    %c0_i32_1 = arith.constant 0 : i32
    return %c0_i32, %c0_i32_0 : i32, i32
  }
  func.func @transform_10(%arg0: i32, %arg1: i32, %arg2: i32) -> (i32, i32) {
    %c0_i32 = arith.constant 0 : i32
    %c0_i32_0 = arith.constant 0 : i32
    %c0_i32_1 = arith.constant 0 : i32
    return %c0_i32, %c0_i32_0 : i32, i32
  }
  func.func @transform_11(%arg0: i32, %arg1: i32, %arg2: i32) -> (i32, i32) {
    %c0_i32 = arith.constant 0 : i32
    %c0_i32_0 = arith.constant 0 : i32
    %c0_i32_1 = arith.constant 0 : i32
    return %c0_i32, %c0_i32_0 : i32, i32
  }
  func.func @transform_12(%arg0: i32, %arg1: i32, %arg2: i32) -> (i32, i32) {
    %c0_i32 = arith.constant 0 : i32
    %c0_i32_0 = arith.constant 0 : i32
    %c0_i32_1 = arith.constant 0 : i32
    return %c0_i32, %c0_i32_0 : i32, i32
  }
  func.func @transform_13(%arg0: i32, %arg1: i32, %arg2: i32) -> (i32, i32) {
    %c0_i32 = arith.constant 0 : i32
    %c0_i32_0 = arith.constant 0 : i32
    %c0_i32_1 = arith.constant 0 : i32
    return %c0_i32, %c0_i32_0 : i32, i32
  }
  func.func @transform_14(%arg0: i32, %arg1: i32, %arg2: i32) -> (i32, i32) {
    %c0_i32 = arith.constant 0 : i32
    %c0_i32_0 = arith.constant 0 : i32
    %c0_i32_1 = arith.constant 0 : i32
    return %c0_i32, %c0_i32_0 : i32, i32
  }
  func.func @transform_15(%arg0: i32, %arg1: i32, %arg2: i32) -> (i32, i32) {
    %c0_i32 = arith.constant 0 : i32
    %c0_i32_0 = arith.constant 0 : i32
    %c0_i32_1 = arith.constant 0 : i32
    return %c0_i32, %c0_i32_0 : i32, i32
  }
  func.func @transform_16(%arg0: i32, %arg1: i32, %arg2: i32) -> (i32, i32) {
    %c0_i32 = arith.constant 0 : i32
    %c0_i32_0 = arith.constant 0 : i32
    %c0_i32_1 = arith.constant 0 : i32
    return %c0_i32, %c0_i32_0 : i32, i32
  }
  func.func @transform_17(%arg0: i32, %arg1: i32, %arg2: i32) -> (i32, i32) {
    %c0_i32 = arith.constant 0 : i32
    %c0_i32_0 = arith.constant 0 : i32
    %c0_i32_1 = arith.constant 0 : i32
    return %c0_i32, %c0_i32_0 : i32, i32
  }
  func.func @transform_18(%arg0: i32, %arg1: i32, %arg2: i32) -> (i32, i32) {
    %c0_i32 = arith.constant 0 : i32
    %c0_i32_0 = arith.constant 0 : i32
    %c0_i32_1 = arith.constant 0 : i32
    return %c0_i32, %c0_i32_0 : i32, i32
  }
  func.func @transform_19(%arg0: i32, %arg1: i32, %arg2: i32) -> (i32, i32) {
    %c0_i32 = arith.constant 0 : i32
    %c0_i32_0 = arith.constant 0 : i32
    %c0_i32_1 = arith.constant 0 : i32
    return %c0_i32, %c0_i32_0 : i32, i32
  }
  func.func @transform_20(%arg0: i32, %arg1: i32, %arg2: i32) -> (i32, i32, i32) {
    %c0_i32 = arith.constant 0 : i32
    %c0_i32_0 = arith.constant 0 : i32
    return %arg0, %arg1, %c0_i32 : i32, i32, i32
  }
}

</mosaic_0001>

<llo_original>
// kernel: tpu_custom_call.1
$region0: #{tpu_custom_call.1}
  #allocation0 [shape = 'u32[]', space=smem, size = 0x4, offset = 0x4, fixed_abs, tag = 'smem constant byte address 0x4 - core index']
  #allocation1 [shape = 'u32[144,128]{1,0:T(1,128)}', space=vmem, size = 0x12000, scoped, tag = 'internal scratch']
  #allocation2 [shape = 'bf16[8,8,8]{2,1,0:T(8,128)(2,1)}', space=vmem, size = 0x4000, scoped, tag = 'scratch operand']
  #allocation3 [shape = 'f32[8,8,1]{2,1,0:T(8,128)}', space=vmem, size = 0x8000, scoped, tag = 'scratch operand']
  #allocation4 [shape = 'f32[8,8,1]{2,1,0:T(8,128)}', space=vmem, size = 0x8000, scoped, tag = 'scratch operand']
  #allocation5 [shape = 'f32[8,8,8]{2,1,0:T(8,128)}', space=vmem, size = 0x8000, scoped, tag = 'scratch operand']
  %s0 = inlined_call_operand.vmem [shape: f32[2,8,32], index: 0, kind: input, shape index: {}]
  %s1 = inlined_call_operand.vmem [shape: f32[2,8,32], index: 1, kind: input, shape index: {}]
  %s2 = inlined_call_operand.vmem [shape: f32[2,8,32], index: 2, kind: input, shape index: {}]
  %s3 = inlined_call_operand.hbm [shape: s8[2,8,8], index: 3, kind: input, shape index: {}]
  %s4 = inlined_call_operand.vmem [shape: bf16[32,32], index: 4, kind: input, shape index: {}]
  %s5 = inlined_call_operand.vmem [shape: f32[1,32], index: 5, kind: input, shape index: {}]
  %s6 = inlined_call_operand.vmem [shape: bf16[32,32], index: 6, kind: input, shape index: {}]
  %s7 = inlined_call_operand.hbm [shape: f32[1,32], index: 7, kind: input, shape index: {}]
  %s8 = inlined_call_operand.hbm [shape: bf16[32,32], index: 8, kind: input, shape index: {}]
  %s9 = inlined_call_operand.hbm [shape: f32[1,32], index: 9, kind: input, shape index: {}]
  %s10 = inlined_call_operand.vmem [shape: bf16[32,32], index: 10, kind: input, shape index: {}]
  %s11 = inlined_call_operand.hbm [shape: f32[1,32], index: 11, kind: input, shape index: {}]
  %s12 = inlined_call_operand.hbm [shape: f32[1,32], index: 12, kind: input, shape index: {}]
  %s13 = inlined_call_operand.hbm [shape: f32[1,32], index: 13, kind: input, shape index: {}]
  %s14 = inlined_call_operand.vmem [shape: bf16[32,128], index: 14, kind: input, shape index: {}]
  %s15 = inlined_call_operand.vmem [shape: f32[1,128], index: 15, kind: input, shape index: {}]
  %s16 = inlined_call_operand.vmem [shape: bf16[128,32], index: 16, kind: input, shape index: {}]
  %s17 = inlined_call_operand.vmem [shape: f32[1,32], index: 17, kind: input, shape index: {}]
  %s18 = inlined_call_operand.vmem [shape: f32[1,32], index: 18, kind: input, shape index: {}]
  %s19 = inlined_call_operand.vmem [shape: f32[1,32], index: 19, kind: input, shape index: {}]
  %s20 = inlined_call_operand.hbm [shape: f32[2,8,32], index: 20, kind: output, shape index: {}]
  %s21 = sld [smem:[#allocation0]]
  $region126: #{tpu_custom_call.1} parent=0
    _
  %s23 = ssub.s32 1, %s21
  %s24 = scalar_select 0, %s23, %s21
  $region1: #{tpu_custom_call.1} parent=0
    #allocation6 [shape = 'u8[2048]{0}', space=vmem, size = 0x800, scoped, tag = 'input window, operand 3, single buffered']
    #allocation7 [shape = 's32[1]{0}', space=sflag, size = 0x4, scoped, tag = 'scoped memory for tpu_custom_call.1']
    #allocation8 [shape = 's32[1]{0}', space=sflag, size = 0x4, scoped, tag = 'scoped memory for tpu_custom_call.1']
    #allocation9 [shape = 'u8[512]{0}', space=vmem, size = 0x400, scoped, tag = 'input window, operand 7, single buffered']
    #allocation10 [shape = 's32[1]{0}', space=sflag, size = 0x4, scoped, tag = 'scoped memory for tpu_custom_call.1']
    #allocation11 [shape = 'u8[8192]{0}', space=vmem, size = 0x2000, scoped, tag = 'input window, operand 8, single buffered']
    #allocation12 [shape = 'u8[512]{0}', space=vmem, size = 0x400, scoped, tag = 'input window, operand 9, single buffered']
    #allocation13 [shape = 's32[1]{0}', space=sflag, size = 0x4, scoped, tag = 'scoped memory for tpu_custom_call.1']
    #allocation14 [shape = 'u8[512]{0}', space=vmem, size = 0x400, scoped, tag = 'input window, operand 11, single buffered']
    #allocation15 [shape = 'u8[512]{0}', space=vmem, size = 0x400, scoped, tag = 'input window, operand 12, single buffered']
    #allocation16 [shape = 's32[1]{0}', space=sflag, size = 0x4, scoped, tag = 'scoped memory for tpu_custom_call.1']
    #allocation17 [shape = 'u8[512]{0}', space=vmem, size = 0x400, scoped, tag = 'input window, operand 13, single buffered']
    #allocation18 [shape = 'u8[8192]{0}', space=vmem, size = 0x2000, scoped, tag = 'output window, operand 0, single buffered']
    %25 = vsyncpa [#allocation7], 0
    %26 = vsyncpa [#allocation10], 0
    %27 = vsyncpa [#allocation13], 0
    %28 = vsyncpa [#allocation16], 0
    %29 = vsyncpa [#allocation8], 0
    // Predicated region
    $region2: #{tpu_custom_call.1} parent=1 // pred_check
      _
    $region3: #{tpu_custom_call.1} parent=1 // pred_check_branch
      %31 = sbr.rel (0) target = $region5
    $region4: #{tpu_custom_call.1} parent=1 // pred_region
      _
    $region5: #{tpu_custom_call.1} parent=1 // pred_fallthru
      _
    // Predicated region
    $region6: #{tpu_custom_call.1} parent=1 // pred_check
      _
    $region7: #{tpu_custom_call.1} parent=1 // pred_check_branch
      %33 = sbr.rel (0) target = $region9
    $region8: #{tpu_custom_call.1} parent=1 // pred_region
      _
    $region9: #{tpu_custom_call.1} parent=1 // pred_fallthru
      _
    // Predicated region
    $region10: #{tpu_custom_call.1} parent=1 // pred_check
      _
    $region11: #{tpu_custom_call.1} parent=1 // pred_check_branch
      %35 = sbr.rel (0) target = $region13
    $region12: #{tpu_custom_call.1} parent=1 // pred_region
      _
    $region13: #{tpu_custom_call.1} parent=1 // pred_fallthru
      _
    // Predicated region
    $region14: #{tpu_custom_call.1} parent=1 // pred_check
      _
    $region15: #{tpu_custom_call.1} parent=1 // pred_check_branch
      %37 = sbr.rel (0) target = $region17
    $region16: #{tpu_custom_call.1} parent=1 // pred_region
      %s39 = ssub.s32 64, 64
      %40 = vsyncadd [#allocation7], %s39
      %s41 = sshll.u32 [#allocation6], 4
      %s42 = int_to_ptr.vmem [resolvable:$true] %s41
      %47 = dma.hbm_to_vmem [thread:$0]  %s3, 64, %s42, [#allocation7], 32, 32, 2
    $region17: #{tpu_custom_call.1} parent=1 // pred_fallthru
      _
    // Predicated region
    $region18: #{tpu_custom_call.1} parent=1 // pred_check
      _
    $region19: #{tpu_custom_call.1} parent=1 // pred_check_branch
      %49 = sbr.rel (0) target = $region21
    $region20: #{tpu_custom_call.1} parent=1 // pred_region
      _
    $region21: #{tpu_custom_call.1} parent=1 // pred_fallthru
      _
    // Predicated region
    $region22: #{tpu_custom_call.1} parent=1 // pred_check
      _
    $region23: #{tpu_custom_call.1} parent=1 // pred_check_branch
      %51 = sbr.rel (0) target = $region25
    $region24: #{tpu_custom_call.1} parent=1 // pred_region
      _
    $region25: #{tpu_custom_call.1} parent=1 // pred_fallthru
      _
    // Predicated region
    $region26: #{tpu_custom_call.1} parent=1 // pred_check
      _
    $region27: #{tpu_custom_call.1} parent=1 // pred_check_branch
      %53 = sbr.rel (0) target = $region29
    $region28: #{tpu_custom_call.1} parent=1 // pred_region
      _
    $region29: #{tpu_custom_call.1} parent=1 // pred_fallthru
      _
    // Predicated region
    $region30: #{tpu_custom_call.1} parent=1 // pred_check
      _
    $region31: #{tpu_custom_call.1} parent=1 // pred_check_branch
      %55 = sbr.rel (0) target = $region33
    $region32: #{tpu_custom_call.1} parent=1 // pred_region
      %s57 = ssub.s32 16, 16
      %58 = vsyncadd [#allocation10], %s57
      %s60 = sshll.u32 [#allocation9], 4
      %s61 = int_to_ptr.vmem [resolvable:$true] %s60
      %63 = dma.hbm_to_vmem [thread:$0]  %s7, 16, %s61, [#allocation10]
    $region33: #{tpu_custom_call.1} parent=1 // pred_fallthru
      _
    // Predicated region
    $region34: #{tpu_custom_call.1} parent=1 // pred_check
      _
    $region35: #{tpu_custom_call.1} parent=1 // pred_check_branch
      %65 = sbr.rel (0) target = $region37
    $region36: #{tpu_custom_call.1} parent=1 // pred_region
      %s67 = ssub.s32 256, 256
      %68 = vsyncadd [#allocation10], %s67
      %s69 = sshll.u32 [#allocation11], 4
      %s70 = int_to_ptr.vmem [resolvable:$true] %s69
      %75 = dma.hbm_to_vmem [thread:$0]  %s8, 256, %s70, [#allocation10], 64, 64, 4
    $region37: #{tpu_custom_call.1} parent=1 // pred_fallthru
      _
    // Predicated region
    $region38: #{tpu_custom_call.1} parent=1 // pred_check
      _
    $region39: #{tpu_custom_call.1} parent=1 // pred_check_branch
      %77 = sbr.rel (0) target = $region41
    $region40: #{tpu_custom_call.1} parent=1 // pred_region
      %s79 = ssub.s32 16, 16
      %80 = vsyncadd [#allocation13], %s79
      %s82 = sshll.u32 [#allocation12], 4
      %s83 = int_to_ptr.vmem [resolvable:$true] %s82
      %85 = dma.hbm_to_vmem [thread:$0]  %s9, 16, %s83, [#allocation13]
    $region41: #{tpu_custom_call.1} parent=1 // pred_fallthru
      _
    // Predicated region
    $region42: #{tpu_custom_call.1} parent=1 // pred_check
      _
    $region43: #{tpu_custom_call.1} parent=1 // pred_check_branch
      %87 = sbr.rel (0) target = $region45
    $region44: #{tpu_custom_call.1} parent=1 // pred_region
      _
    $region45: #{tpu_custom_call.1} parent=1 // pred_fallthru
      _
    // Predicated region
    $region46: #{tpu_custom_call.1} parent=1 // pred_check
      _
    $region47: #{tpu_custom_call.1} parent=1 // pred_check_branch
      %89 = sbr.rel (0) target = $region49
    $region48: #{tpu_custom_call.1} parent=1 // pred_region
      %s91 = ssub.s32 16, 16
      %92 = vsyncadd [#allocation13], %s91
      %s94 = sshll.u32 [#allocation14], 4
      %s95 = int_to_ptr.vmem [resolvable:$true] %s94
      %97 = dma.hbm_to_vmem [thread:$0]  %s11, 16, %s95, [#allocation13]
    $region49: #{tpu_custom_call.1} parent=1 // pred_fallthru
      _
    // Predicated region
    $region50: #{tpu_custom_call.1} parent=1 // pred_check
      _
    $region51: #{tpu_custom_call.1} parent=1 // pred_check_branch
      %99 = sbr.rel (0) target = $region53
    $region52: #{tpu_custom_call.1} parent=1 // pred_region
      %s101 = ssub.s32 16, 16
      %102 = vsyncadd [#allocation16], %s101
      %s104 = sshll.u32 [#allocation15], 4
      %s105 = int_to_ptr.vmem [resolvable:$true] %s104
      %107 = dma.hbm_to_vmem [thread:$0]  %s12, 16, %s105, [#allocation16]
    $region53: #{tpu_custom_call.1} parent=1 // pred_fallthru
      _
    // Predicated region
    $region54: #{tpu_custom_call.1} parent=1 // pred_check
      _
    $region55: #{tpu_custom_call.1} parent=1 // pred_check_branch
      %109 = sbr.rel (0) target = $region57
    $region56: #{tpu_custom_call.1} parent=1 // pred_region
      %s111 = ssub.s32 16, 16
      %112 = vsyncadd [#allocation16], %s111
      %s114 = sshll.u32 [#allocation17], 4
      %s115 = int_to_ptr.vmem [resolvable:$true] %s114
      %117 = dma.hbm_to_vmem [thread:$0]  %s13, 16, %s115, [#allocation16]
    $region57: #{tpu_custom_call.1} parent=1 // pred_fallthru
      _
    // Predicated region
    $region58: #{tpu_custom_call.1} parent=1 // pred_check
      _
    $region59: #{tpu_custom_call.1} parent=1 // pred_check_branch
      %119 = sbr.rel (0) target = $region61
    $region60: #{tpu_custom_call.1} parent=1 // pred_region
      _
    $region61: #{tpu_custom_call.1} parent=1 // pred_fallthru
      _
    // Predicated region
    $region62: #{tpu_custom_call.1} parent=1 // pred_check
      _
    $region63: #{tpu_custom_call.1} parent=1 // pred_check_branch
      %121 = sbr.rel (0) target = $region65
    $region64: #{tpu_custom_call.1} parent=1 // pred_region
      _
    $region65: #{tpu_custom_call.1} parent=1 // pred_fallthru
      _
    // Predicated region
    $region66: #{tpu_custom_call.1} parent=1 // pred_check
      _
    $region67: #{tpu_custom_call.1} parent=1 // pred_check_branch
      %123 = sbr.rel (0) target = $region69
    $region68: #{tpu_custom_call.1} parent=1 // pred_region
      _
    $region69: #{tpu_custom_call.1} parent=1 // pred_fallthru
      _
    // Predicated region
    $region70: #{tpu_custom_call.1} parent=1 // pred_check
      _
    $region71: #{tpu_custom_call.1} parent=1 // pred_check_branch
      %125 = sbr.rel (0) target = $region73
    $region72: #{tpu_custom_call.1} parent=1 // pred_region
      _
    $region73: #{tpu_custom_call.1} parent=1 // pred_fallthru
      _
    // Predicated region
    $region74: #{tpu_custom_call.1} parent=1 // pred_check
      _
    $region75: #{tpu_custom_call.1} parent=1 // pred_check_branch
      %127 = sbr.rel (0) target = $region77
    $region76: #{tpu_custom_call.1} parent=1 // pred_region
      _
    $region77: #{tpu_custom_call.1} parent=1 // pred_fallthru
      _
    // Predicated region
    $region78: #{tpu_custom_call.1} parent=1 // pred_check
      _
    $region79: #{tpu_custom_call.1} parent=1 // pred_check_branch
      %129 = sbr.rel (0) target = $region81
    $region80: #{tpu_custom_call.1} parent=1 // pred_region
      _
    $region81: #{tpu_custom_call.1} parent=1 // pred_fallthru
      _
    // Predicated region
    $region82: #{tpu_custom_call.1} parent=1 // pred_check
      _
    $region83: #{tpu_custom_call.1} parent=1 // pred_check_branch
      %131 = sbr.rel (0) target = $region85
    $region84: #{tpu_custom_call.1} parent=1 // pred_region
      %132 = dma.done [#allocation7], 64
    $region85: #{tpu_custom_call.1} parent=1 // pred_fallthru
      _
    // Predicated region
    $region86: #{tpu_custom_call.1} parent=1 // pred_check
      _
    $region87: #{tpu_custom_call.1} parent=1 // pred_check_branch
      %134 = sbr.rel (0) target = $region89
    $region88: #{tpu_custom_call.1} parent=1 // pred_region
      %135 = dma.done [#allocation10], 16
    $region89: #{tpu_custom_call.1} parent=1 // pred_fallthru
      _
    // Predicated region
    $region90: #{tpu_custom_call.1} parent=1 // pred_check
      _
    $region91: #{tpu_custom_call.1} parent=1 // pred_check_branch
      %137 = sbr.rel (0) target = $region93
    $region92: #{tpu_custom_call.1} parent=1 // pred_region
      %138 = dma.done [#allocation10], 256
    $region93: #{tpu_custom_call.1} parent=1 // pred_fallthru
      _
    // Predicated region
    $region94: #{tpu_custom_call.1} parent=1 // pred_check
      _
    $region95: #{tpu_custom_call.1} parent=1 // pred_check_branch
      %140 = sbr.rel (0) target = $region97
    $region96: #{tpu_custom_call.1} parent=1 // pred_region
      %141 = dma.done [#allocation13], 16
    $region97: #{tpu_custom_call.1} parent=1 // pred_fallthru
      _
    // Predicated region
    $region98: #{tpu_custom_call.1} parent=1 // pred_check
      _
    $region99: #{tpu_custom_call.1} parent=1 // pred_check_branch
      %143 = sbr.rel (0) target = $region101
    $region100: #{tpu_custom_call.1} parent=1 // pred_region
      %144 = dma.done [#allocation13], 16
    $region101: #{tpu_custom_call.1} parent=1 // pred_fallthru
      _
    // Predicated region
    $region102: #{tpu_custom_call.1} parent=1 // pred_check
      _
    $region103: #{tpu_custom_call.1} parent=1 // pred_check_branch
      %146 = sbr.rel (0) target = $region105
    $region104: #{tpu_custom_call.1} parent=1 // pred_region
      %147 = dma.done [#allocation16], 16
    $region105: #{tpu_custom_call.1} parent=1 // pred_fallthru
      _
    // Predicated region
    $region106: #{tpu_custom_call.1} parent=1 // pred_check
      _
    $region107: #{tpu_custom_call.1} parent=1 // pred_check_branch
      %149 = sbr.rel (0) target = $region109
    $region108: #{tpu_custom_call.1} parent=1 // pred_region
      %150 = dma.done [#allocation16], 16
    $region109: #{tpu_custom_call.1} parent=1 // pred_fallthru
      _
    %p154 = scmp.eq.s32.totalorder 0, 0
    // Predicated region
    $region110: #{tpu_custom_call.1} parent=1 // pred_check
      %p155 = pneg %p154
    $region111: #{tpu_custom_call.1} parent=1 // pred_check_branch
      %157 = sbr.rel (%p155) target = $region113
    $region112: #{tpu_custom_call.1} parent=1 // pred_region
      %v158 = vld [vmem:[%s2] sm:$0xff]
      %v159 = vld [vmem:[%s2 + $0x8] sm:$0xff]
      %v160 = vpack.c.bf16 %v159, %v158
      %v161 = vld [vmem:[#allocation11] sm:$0xf]
      %v162 = vld [vmem:[#allocation11 + $0x4] sm:$0xf]
      %v163 = vld [vmem:[#allocation11 + $0x8] sm:$0xf]
      %v164 = vld [vmem:[#allocation11 + $0xc] sm:$0xf]
      %v165 = vld [vmem:[#allocation12] sm:$0x1]
      %v167 = vlaneseq
      %v168 = vshrl.u32 %v167, 7
      %v169 = vsub.s32 0, %v168
      %v170 = vrot.slane %v165, %v169
      %v176 = vunpack.c.l.b16 %v161
      %v177 = vunpack.c.l.b16 %v162
      %v178 = vunpack.c.l.b16 %v163
      %v179 = vunpack.c.l.b16 %v164
      %v180 = vpack.c.b16 %v177, %v176
      %v181 = vpack.c.b16 %v179, %v178
      %vm184 = vcmask 261120
      %v186 = vsel %vm184, %v160, 0
      %188 = vmatprep.subr.bf16.mxu0 0
      %189 = vmatpush1.bf16.msra.mxu0 %v180
      %190 = vmatprep.subr.bf16.mxu0 0
      %191 = vmatpush1.bf16.msra.mxu0 %v181
      %192 = vmatprep.subr.bf16.mxu0 0
      %193 = vmatpush1.bf16.msra.mxu0 0
      %194 = vmatprep.subr.bf16.mxu0 0
      %195 = vmatpush1.bf16.msra.mxu0 0
      %196 = vmatprep.subr.bf16.mxu0 0
      %197 = vmatpush1.bf16.msra.mxu0 0
      %198 = vmatprep.subr.bf16.mxu0 0
      %199 = vmatpush1.bf16.msra.mxu0 0
      %200 = vmatprep.subr.bf16.mxu0 0
      %201 = vmatpush1.bf16.msra.mxu0 0
      %202 = vmatprep.subr.bf16.mxu0 0
      %203 = vmatpush1.bf16.msra.mxu0 0
      %204 = vmatprep.subr.bf16.mxu0 0
      %205 = vmatpush1.bf16.msra.mxu0 0
      %206 = vmatprep.subr.bf16.mxu0 0
      %207 = vmatpush1.bf16.msra.mxu0 0
      %208 = vmatprep.subr.bf16.mxu0 0
      %209 = vmatpush1.bf16.msra.mxu0 0
      %210 = vmatprep.subr.bf16.mxu0 0
      %211 = vmatpush1.bf16.msra.mxu0 0
      %212 = vmatprep.subr.bf16.mxu0 0
      %213 = vmatpush1.bf16.msra.mxu0 0
      %214 = vmatprep.subr.bf16.mxu0 0
      %215 = vmatpush1.bf16.msra.mxu0 0
      %216 = vmatprep.subr.bf16.mxu0 0
      %217 = vmatpush1.bf16.msra.mxu0 0
      %218 = vmatprep.subr.bf16.mxu0 0
      %219 = vmatpush1.bf16.msra.mxu0 0
      %220 = vmatprep.mubr.bf16.mxu0 0
      %221 = vmatmul.mubr.bf16.gmra.mrb[0].mxu0 %v186
      %v222 = vpop.f32.mrb[0].mxu0
      %v223 = vadd.f32 %v170, %v222
      %v224 = vpop.f32.mrb[0].mxu0
      %v225 = vpop.f32.mrb[0].mxu0
      %v226 = vadd.f32 %v170, %v225
      %v227 = vpop.f32.mrb[0].mxu0
      %228 = vdwg.mxu0
      %231 = vrot.lane.b32.xlu0 %v223, 120
      %v232 = vpop.permute.xlu0 %231
      %233 = vrot.lane.b32.xlu0 %v226, 120
      %v234 = vpop.permute.xlu0 %233
      %237 = vrot.lane.b32.xlu0 %v223, 112
      %v238 = vpop.permute.xlu0 %237
      %239 = vrot.lane.b32.xlu0 %v226, 112
      %v240 = vpop.permute.xlu0 %239
      %243 = vrot.lane.b32.xlu0 %v223, 104
      %v244 = vpop.permute.xlu0 %243
      %245 = vrot.lane.b32.xlu0 %v226, 104
      %v246 = vpop.permute.xlu0 %245
      %v249 = vcombine.low %v223, %v238
      %v250 = vcombine.high %v223, %v238
      %v252 = vunpack.c.l.s4 1983009808
      %v253 = vunpack.c.0.s8 %v252
      %v254 = vlaneseq
      %v255 = vshrl.u32 %v254, 7
      %v256 = vsub.s32 %v253, %v255
      %v257 = vrot.slane %v249, %v256
      %v259 = vunpack.c.l.s4 1983009808
      %v260 = vunpack.c.0.s8 %v259
      %v261 = vlaneseq
      %v262 = vshrl.u32 %v261, 7
      %v263 = vsub.s32 %v260, %v262
      %v264 = vrot.slane %v250, %v263
      %v265 = vcombine.low %v232, %v244
      %v266 = vcombine.high %v232, %v244
      %v268 = vunpack.c.l.s4 1983009808
      %v269 = vunpack.c.0.s8 %v268
      %v270 = vlaneseq
      %v271 = vshrl.u32 %v270, 7
      %v272 = vsub.s32 %v269, %v271
      %v273 = vrot.slane %v265, %v272
      %v275 = vunpack.c.l.s4 1983009808
      %v276 = vunpack.c.0.s8 %v275
      %v277 = vlaneseq
      %v278 = vshrl.u32 %v277, 7
      %v279 = vsub.s32 %v276, %v278
      %v280 = vrot.slane %v266, %v279
      %v281 = vcombine.low %v257, %v273
      %v282 = vcombine.high %v257, %v273
      %v284 = vunpack.c.l.s4 1934713408
      %v285 = vunpack.c.0.s8 %v284
      %v286 = vlaneseq
      %v287 = vshrl.u32 %v286, 7
      %v288 = vsub.s32 %v285, %v287
      %v289 = vrot.slane %v281, %v288
      %v291 = vunpack.c.l.s4 1934713408
      %v292 = vunpack.c.0.s8 %v291
      %v293 = vlaneseq
      %v294 = vshrl.u32 %v293, 7
      %v295 = vsub.s32 %v292, %v294
      %v296 = vrot.slane %v282, %v295
      %v297 = vcombine.low %v264, %v280
      %v298 = vcombine.high %v264, %v280
      %v300 = vunpack.c.l.s4 1934713408
      %v301 = vunpack.c.0.s8 %v300
      %v302 = vlaneseq
      %v303 = vshrl.u32 %v302, 7
      %v304 = vsub.s32 %v301, %v303
      %v305 = vrot.slane %v297, %v304
      %v307 = vunpack.c.l.s4 1934713408
      %v308 = vunpack.c.0.s8 %v307
      %v309 = vlaneseq
      %v310 = vshrl.u32 %v309, 7
      %v311 = vsub.s32 %v308, %v310
      %v312 = vrot.slane %v298, %v311
      %v313 = vcombine.high %v289, 0.0
      %v314 = vcombine.high %v296, 0.0
      %v315 = vcombine.high %v305, 0.0
      %v316 = vcombine.high %v312, 0.0
      %v317 = vcombine.low %v226, %v240
      %v318 = vcombine.high %v226, %v240
      %v320 = vunpack.c.l.s4 1983009808
      %v321 = vunpack.c.0.s8 %v320
      %v322 = vlaneseq
      %v323 = vshrl.u32 %v322, 7
      %v324 = vsub.s32 %v321, %v323
      %v325 = vrot.slane %v317, %v324
      %v327 = vunpack.c.l.s4 1983009808
      %v328 = vunpack.c.0.s8 %v327
      %v329 = vlaneseq
      %v330 = vshrl.u32 %v329, 7
      %v331 = vsub.s32 %v328, %v330
      %v332 = vrot.slane %v318, %v331
      %v333 = vcombine.low %v234, %v246
      %v334 = vcombine.high %v234, %v246
      %v336 = vunpack.c.l.s4 1983009808
      %v337 = vunpack.c.0.s8 %v336
      %v338 = vlaneseq
      %v339 = vshrl.u32 %v338, 7
      %v340 = vsub.s32 %v337, %v339
      %v341 = vrot.slane %v333, %v340
      %v343 = vunpack.c.l.s4 1983009808
      %v344 = vunpack.c.0.s8 %v343
      %v345 = vlaneseq
      %v346 = vshrl.u32 %v345, 7
      %v347 = vsub.s32 %v344, %v346
      %v348 = vrot.slane %v334, %v347
      %v349 = vcombine.low %v325, %v341
      %v350 = vcombine.high %v325, %v341
      %v352 = vunpack.c.l.s4 1934713408
      %v353 = vunpack.c.0.s8 %v352
      %v354 = vlaneseq
      %v355 = vshrl.u32 %v354, 7
      %v356 = vsub.s32 %v353, %v355
      %v357 = vrot.slane %v349, %v356
      %v359 = vunpack.c.l.s4 1934713408
      %v360 = vunpack.c.0.s8 %v359
      %v361 = vlaneseq
      %v362 = vshrl.u32 %v361, 7
      %v363 = vsub.s32 %v360, %v362
      %v364 = vrot.slane %v350, %v363
      %v365 = vcombine.low %v332, %v348
      %v366 = vcombine.high %v332, %v348
      %v368 = vunpack.c.l.s4 1934713408
      %v369 = vunpack.c.0.s8 %v368
      %v370 = vlaneseq
      %v371 = vshrl.u32 %v370, 7
      %v372 = vsub.s32 %v369, %v371
      %v373 = vrot.slane %v365, %v372
      %v375 = vunpack.c.l.s4 1934713408
      %v376 = vunpack.c.0.s8 %v375
      %v377 = vlaneseq
      %v378 = vshrl.u32 %v377, 7
      %v379 = vsub.s32 %v376, %v378
      %v380 = vrot.slane %v366, %v379
      %v381 = vcombine.high %v357, 0.0
      %v382 = vcombine.high %v364, 0.0
      %v383 = vcombine.high %v373, 0.0
      %v384 = vcombine.high %v380, 0.0
      %v385 = vcombine.low %v289, %v296
      %v387 = vunpack.c.l.s4 1983009808
      %v388 = vunpack.c.0.s8 %v387
      %v389 = vlaneseq
      %v390 = vshrl.u32 %v389, 7
      %v391 = vsub.s32 %v388, %v390
      %v392 = vrot.slane %v385, %v391
      %v393 = vcombine.low %v313, %v314
      %v395 = vunpack.c.l.s4 1983009808
      %v396 = vunpack.c.0.s8 %v395
      %v397 = vlaneseq
      %v398 = vshrl.u32 %v397, 7
      %v399 = vsub.s32 %v396, %v398
      %v400 = vrot.slane %v393, %v399
      %v401 = vcombine.low %v305, %v312
      %v403 = vunpack.c.l.s4 1983009808
      %v404 = vunpack.c.0.s8 %v403
      %v405 = vlaneseq
      %v406 = vshrl.u32 %v405, 7
      %v407 = vsub.s32 %v404, %v406
      %v408 = vrot.slane %v401, %v407
      %v409 = vcombine.low %v315, %v316
      %v411 = vunpack.c.l.s4 1983009808
      %v412 = vunpack.c.0.s8 %v411
      %v413 = vlaneseq
      %v414 = vshrl.u32 %v413, 7
      %v415 = vsub.s32 %v412, %v414
      %v416 = vrot.slane %v409, %v415
      %v417 = vcombine.low %v392, %v400
      %v418 = vcombine.high %v392, %v400
      %v420 = vunpack.c.l.s4 1934713408
      %v421 = vunpack.c.0.s8 %v420
      %v422 = vlaneseq
      %v423 = vshrl.u32 %v422, 7
      %v424 = vsub.s32 %v421, %v423
      %v425 = vrot.slane %v417, %v424
      %v427 = vunpack.c.l.s4 1934713408
      %v428 = vunpack.c.0.s8 %v427
      %v429 = vlaneseq
      %v430 = vshrl.u32 %v429, 7
      %v431 = vsub.s32 %v428, %v430
      %v432 = vrot.slane %v418, %v431
      %v433 = vcombine.low %v408, %v416
      %v434 = vcombine.high %v408, %v416
      %v436 = vunpack.c.l.s4 1934713408
      %v437 = vunpack.c.0.s8 %v436
      %v438 = vlaneseq
      %v439 = vshrl.u32 %v438, 7
      %v440 = vsub.s32 %v437, %v439
      %v441 = vrot.slane %v433, %v440
      %v443 = vunpack.c.l.s4 1934713408
      %v444 = vunpack.c.0.s8 %v443
      %v445 = vlaneseq
      %v446 = vshrl.u32 %v445, 7
      %v447 = vsub.s32 %v444, %v446
      %v448 = vrot.slane %v434, %v447
      %v449 = vcombine.low %v425, %v441
      %v450 = vcombine.high %v425, %v441
      %v451 = vcombine.low %v432, %v448
      %v452 = vcombine.high %v432, %v448
      %v453 = vcombine.low %v357, %v364
      %v455 = vunpack.c.l.s4 1983009808
      %v456 = vunpack.c.0.s8 %v455
      %v457 = vlaneseq
      %v458 = vshrl.u32 %v457, 7
      %v459 = vsub.s32 %v456, %v458
      %v460 = vrot.slane %v453, %v459
      %v461 = vcombine.low %v381, %v382
      %v463 = vunpack.c.l.s4 1983009808
      %v464 = vunpack.c.0.s8 %v463
      %v465 = vlaneseq
      %v466 = vshrl.u32 %v465, 7
      %v467 = vsub.s32 %v464, %v466
      %v468 = vrot.slane %v461, %v467
      %v469 = vcombine.low %v373, %v380
      %v471 = vunpack.c.l.s4 1983009808
      %v472 = vunpack.c.0.s8 %v471
      %v473 = vlaneseq
      %v474 = vshrl.u32 %v473, 7
      %v475 = vsub.s32 %v472, %v474
      %v476 = vrot.slane %v469, %v475
      %v477 = vcombine.low %v383, %v384
      %v479 = vunpack.c.l.s4 1983009808
      %v480 = vunpack.c.0.s8 %v479
      %v481 = vlaneseq
      %v482 = vshrl.u32 %v481, 7
      %v483 = vsub.s32 %v480, %v482
      %v484 = vrot.slane %v477, %v483
      %v485 = vcombine.low %v460, %v468
      %v486 = vcombine.high %v460, %v468
      %v488 = vunpack.c.l.s4 1934713408
      %v489 = vunpack.c.0.s8 %v488
      %v490 = vlaneseq
      %v491 = vshrl.u32 %v490, 7
      %v492 = vsub.s32 %v489, %v491
      %v493 = vrot.slane %v485, %v492
      %v495 = vunpack.c.l.s4 1934713408
      %v496 = vunpack.c.0.s8 %v495
      %v497 = vlaneseq
      %v498 = vshrl.u32 %v497, 7
      %v499 = vsub.s32 %v496, %v498
      %v500 = vrot.slane %v486, %v499
      %v501 = vcombine.low %v476, %v484
      %v502 = vcombine.high %v476, %v484
      %v504 = vunpack.c.l.s4 1934713408
      %v505 = vunpack.c.0.s8 %v504
      %v506 = vlaneseq
      %v507 = vshrl.u32 %v506, 7
      %v508 = vsub.s32 %v505, %v507
      %v509 = vrot.slane %v501, %v508
      %v511 = vunpack.c.l.s4 1934713408
      %v512 = vunpack.c.0.s8 %v511
      %v513 = vlaneseq
      %v514 = vshrl.u32 %v513, 7
      %v515 = vsub.s32 %v512, %v514
      %v516 = vrot.slane %v502, %v515
      %v517 = vcombine.low %v493, %v509
      %v518 = vcombine.high %v493, %v509
      %v519 = vcombine.low %v500, %v516
      %v520 = vcombine.high %v500, %v516
      %v521 = vpack.c.bf16 %v449, %v449
      %v522 = vpack.c.bf16 %v450, %v450
      %v523 = vpack.c.bf16 %v451, %v451
      %v524 = vpack.c.bf16 %v452, %v452
      %v525 = vpack.c.bf16 %v517, %v517
      %v526 = vpack.c.bf16 %v518, %v518
      %v527 = vpack.c.bf16 %v519, %v519
      %v528 = vpack.c.bf16 %v520, %v520
      %vm529 = vcmask 60416
      %530 = vst.msk [vmem:[#allocation2] sm:$0xf] %vm529, %v521
      %531 = vst.msk [vmem:[#allocation2 + $0x4] sm:$0xf] %vm529, %v522
      %532 = vst.msk [vmem:[#allocation2 + $0x8] sm:$0xf] %vm529, %v523
      %533 = vst.msk [vmem:[#allocation2 + $0xc] sm:$0xf] %vm529, %v524
      %534 = vst.msk [vmem:[#allocation2 + $0x10] sm:$0xf] %vm529, %v525
      %535 = vst.msk [vmem:[#allocation2 + $0x14] sm:$0xf] %vm529, %v526
      %536 = vst.msk [vmem:[#allocation2 + $0x18] sm:$0xf] %vm529, %v527
      %537 = vst.msk [vmem:[#allocation2 + $0x1c] sm:$0xf] %vm529, %v528
      %vm538 = vcmask 7168
      %539 = vst.msk [vmem:[#allocation3] sm:$0xff] %vm538, -inf
      %540 = vst.msk [vmem:[#allocation3 + $0x8] sm:$0xff] %vm538, -inf
      %541 = vst.msk [vmem:[#allocation3 + $0x10] sm:$0xff] %vm538, -inf
      %542 = vst.msk [vmem:[#allocation3 + $0x18] sm:$0xff] %vm538, -inf
      %543 = vst.msk [vmem:[#allocation3 + $0x20] sm:$0xff] %vm538, -inf
      %544 = vst.msk [vmem:[#allocation3 + $0x28] sm:$0xff] %vm538, -inf
      %545 = vst.msk [vmem:[#allocation3 + $0x30] sm:$0xff] %vm538, -inf
      %546 = vst.msk [vmem:[#allocation3 + $0x38] sm:$0xff] %vm538, -inf
      %547 = vst.msk [vmem:[#allocation4] sm:$0xff] %vm538, 0.0
      %548 = vst.msk [vmem:[#allocation4 + $0x8] sm:$0xff] %vm538, 0.0
      %549 = vst.msk [vmem:[#allocation4 + $0x10] sm:$0xff] %vm538, 0.0
      %550 = vst.msk [vmem:[#allocation4 + $0x18] sm:$0xff] %vm538, 0.0
      %551 = vst.msk [vmem:[#allocation4 + $0x20] sm:$0xff] %vm538, 0.0
      %552 = vst.msk [vmem:[#allocation4 + $0x28] sm:$0xff] %vm538, 0.0
      %553 = vst.msk [vmem:[#allocation4 + $0x30] sm:$0xff] %vm538, 0.0
      %554 = vst.msk [vmem:[#allocation4 + $0x38] sm:$0xff] %vm538, 0.0
      %vm555 = vcmask 64512
      %556 = vst.msk [vmem:[#allocation5] sm:$0xff] %vm555, 0.0
      %557 = vst.msk [vmem:[#allocation5 + $0x8] sm:$0xff] %vm555, 0.0
      %558 = vst.msk [vmem:[#allocation5 + $0x10] sm:$0xff] %vm555, 0.0
      %559 = vst.msk [vmem:[#allocation5 + $0x18] sm:$0xff] %vm555, 0.0
      %560 = vst.msk [vmem:[#allocation5 + $0x20] sm:$0xff] %vm555, 0.0
      %561 = vst.msk [vmem:[#allocation5 + $0x28] sm:$0xff] %vm555, 0.0
      %562 = vst.msk [vmem:[#allocation5 + $0x30] sm:$0xff] %vm555, 0.0
      %563 = vst.msk [vmem:[#allocation5 + $0x38] sm:$0xff] %vm555, 0.0
    $region113: #{tpu_custom_call.1} parent=1 // pred_fallthru
      _
    %v564 = vld [vmem:[%s1] sm:$0xff]
    %v565 = vld [vmem:[%s1 + $0x8] sm:$0xff]
    %v566 = vld [vmem:[%s0] sm:$0xff]
    %v567 = vld [vmem:[%s0 + $0x8] sm:$0xff]
    %v568 = vpack.c.bf16 %v565, %v564
    %v569 = vld [vmem:[%s6] sm:$0xf]
    %v570 = vld [vmem:[%s6 + $0x4] sm:$0xf]
    %v571 = vld [vmem:[%s6 + $0x8] sm:$0xf]
    %v572 = vld [vmem:[%s6 + $0xc] sm:$0xf]
    %v573 = vld [vmem:[#allocation9] sm:$0x1]
    %v575 = vlaneseq
    %v576 = vshrl.u32 %v575, 7
    %v577 = vsub.s32 0, %v576
    %v578 = vrot.slane %v573, %v577
    %v584 = vunpack.c.l.b16 %v569
    %v585 = vunpack.c.l.b16 %v570
    %v586 = vunpack.c.l.b16 %v571
    %v587 = vunpack.c.l.b16 %v572
    %v588 = vpack.c.b16 %v585, %v584
    %v589 = vpack.c.b16 %v587, %v586
    %vm592 = vcmask 261120
    %v594 = vsel %vm592, %v568, 0
    %596 = vmatprep.subr.bf16.mxu0 0
    %597 = vmatpush1.bf16.msra.mxu0 %v588
    %598 = vmatprep.subr.bf16.mxu0 0
    %599 = vmatpush1.bf16.msra.mxu0 %v589
    %600 = vmatprep.subr.bf16.mxu0 0
    %601 = vmatpush1.bf16.msra.mxu0 0
    %602 = vmatprep.subr.bf16.mxu0 0
    %603 = vmatpush1.bf16.msra.mxu0 0
    %604 = vmatprep.subr.bf16.mxu0 0
    %605 = vmatpush1.bf16.msra.mxu0 0
    %606 = vmatprep.subr.bf16.mxu0 0
    %607 = vmatpush1.bf16.msra.mxu0 0
    %608 = vmatprep.subr.bf16.mxu0 0
    %609 = vmatpush1.bf16.msra.mxu0 0
    %610 = vmatprep.subr.bf16.mxu0 0
    %611 = vmatpush1.bf16.msra.mxu0 0
    %612 = vmatprep.subr.bf16.mxu0 0
    %613 = vmatpush1.bf16.msra.mxu0 0
    %614 = vmatprep.subr.bf16.mxu0 0
    %615 = vmatpush1.bf16.msra.mxu0 0
    %616 = vmatprep.subr.bf16.mxu0 0
    %617 = vmatpush1.bf16.msra.mxu0 0
    %618 = vmatprep.subr.bf16.mxu0 0
    %619 = vmatpush1.bf16.msra.mxu0 0
    %620 = vmatprep.subr.bf16.mxu0 0
    %621 = vmatpush1.bf16.msra.mxu0 0
    %622 = vmatprep.subr.bf16.mxu0 0
    %623 = vmatpush1.bf16.msra.mxu0 0
    %624 = vmatprep.subr.bf16.mxu0 0
    %625 = vmatpush1.bf16.msra.mxu0 0
    %626 = vmatprep.subr.bf16.mxu0 0
    %627 = vmatpush1.bf16.msra.mxu0 0
    %628 = vmatprep.mubr.bf16.mxu0 0
    %629 = vmatmul.mubr.bf16.gmra.mrb[0].mxu0 %v594
    %v630 = vpop.f32.mrb[0].mxu0
    %v631 = vadd.f32 %v578, %v630
    %v632 = vpop.f32.mrb[0].mxu0
    %v633 = vpop.f32.mrb[0].mxu0
    %v634 = vadd.f32 %v578, %v633
    %v635 = vpop.f32.mrb[0].mxu0
    %636 = vdwg.mxu0
    %v637 = vpack.c.bf16 %v567, %v566
    %v638 = vld [vmem:[%s4] sm:$0xf]
    %v639 = vld [vmem:[%s4 + $0x4] sm:$0xf]
    %v640 = vld [vmem:[%s4 + $0x8] sm:$0xf]
    %v641 = vld [vmem:[%s4 + $0xc] sm:$0xf]
    %v642 = vld [vmem:[%s5] sm:$0x1]
    %v644 = vlaneseq
    %v645 = vshrl.u32 %v644, 7
    %v646 = vsub.s32 0, %v645
    %v647 = vrot.slane %v642, %v646
    %v653 = vunpack.c.l.b16 %v638
    %v654 = vunpack.c.l.b16 %v639
    %v655 = vunpack.c.l.b16 %v640
    %v656 = vunpack.c.l.b16 %v641
    %v657 = vpack.c.b16 %v654, %v653
    %v658 = vpack.c.b16 %v656, %v655
    %v662 = vsel %vm592, %v637, 0
    %664 = vmatprep.subr.bf16.mxu0 0
    %665 = vmatpush1.bf16.msra.mxu0 %v657
    %666 = vmatprep.subr.bf16.mxu0 0
    %667 = vmatpush1.bf16.msra.mxu0 %v658
    %668 = vmatprep.subr.bf16.mxu0 0
    %669 = vmatpush1.bf16.msra.mxu0 0
    %670 = vmatprep.subr.bf16.mxu0 0
    %671 = vmatpush1.bf16.msra.mxu0 0
    %672 = vmatprep.subr.bf16.mxu0 0
    %673 = vmatpush1.bf16.msra.mxu0 0
    %674 = vmatprep.subr.bf16.mxu0 0
    %675 = vmatpush1.bf16.msra.mxu0 0
    %676 = vmatprep.subr.bf16.mxu0 0
    %677 = vmatpush1.bf16.msra.mxu0 0
    %678 = vmatprep.subr.bf16.mxu0 0
    %679 = vmatpush1.bf16.msra.mxu0 0
    %680 = vmatprep.subr.bf16.mxu0 0
    %681 = vmatpush1.bf16.msra.mxu0 0
    %682 = vmatprep.subr.bf16.mxu0 0
    %683 = vmatpush1.bf16.msra.mxu0 0
    %684 = vmatprep.subr.bf16.mxu0 0
    %685 = vmatpush1.bf16.msra.mxu0 0
    %686 = vmatprep.subr.bf16.mxu0 0
    %687 = vmatpush1.bf16.msra.mxu0 0
    %688 = vmatprep.subr.bf16.mxu0 0
    %689 = vmatpush1.bf16.msra.mxu0 0
    %690 = vmatprep.subr.bf16.mxu0 0
    %691 = vmatpush1.bf16.msra.mxu0 0
    %692 = vmatprep.subr.bf16.mxu0 0
    %693 = vmatpush1.bf16.msra.mxu0 0
    %694 = vmatprep.subr.bf16.mxu0 0
    %695 = vmatpush1.bf16.msra.mxu0 0
    %696 = vmatprep.mubr.bf16.mxu0 0
    %697 = vmatmul.mubr.bf16.gmra.mrb[0].mxu0 %v662
    %v698 = vpop.f32.mrb[0].mxu0
    %v699 = vadd.f32 %v647, %v698
    %v700 = vpop.f32.mrb[0].mxu0
    %v701 = vpop.f32.mrb[0].mxu0
    %v702 = vadd.f32 %v647, %v701
    %v703 = vpop.f32.mrb[0].mxu0
    %704 = vdwg.mxu0
    %707 = vrot.lane.b32.xlu0 %v631, 120
    %v708 = vpop.permute.xlu0 %707
    %709 = vrot.lane.b32.xlu0 %v634, 120
    %v710 = vpop.permute.xlu0 %709
    %713 = vrot.lane.b32.xlu0 %v631, 112
    %v714 = vpop.permute.xlu0 %713
    %715 = vrot.lane.b32.xlu0 %v634, 112
    %v716 = vpop.permute.xlu0 %715
    %719 = vrot.lane.b32.xlu0 %v631, 104
    %v720 = vpop.permute.xlu0 %719
    %721 = vrot.lane.b32.xlu0 %v634, 104
    %v722 = vpop.permute.xlu0 %721
    %v725 = vcombine.low %v631, %v714
    %v726 = vcombine.high %v631, %v714
    %v728 = vunpack.c.l.s4 1983009808
    %v729 = vunpack.c.0.s8 %v728
    %v730 = vlaneseq
    %v731 = vshrl.u32 %v730, 7
    %v732 = vsub.s32 %v729, %v731
    %v733 = vrot.slane %v725, %v732
    %v735 = vunpack.c.l.s4 1983009808
    %v736 = vunpack.c.0.s8 %v735
    %v737 = vlaneseq
    %v738 = vshrl.u32 %v737, 7
    %v739 = vsub.s32 %v736, %v738
    %v740 = vrot.slane %v726, %v739
    %v741 = vcombine.low %v708, %v720
    %v742 = vcombine.high %v708, %v720
    %v744 = vunpack.c.l.s4 1983009808
    %v745 = vunpack.c.0.s8 %v744
    %v746 = vlaneseq
    %v747 = vshrl.u32 %v746, 7
    %v748 = vsub.s32 %v745, %v747
    %v749 = vrot.slane %v741, %v748
    %v751 = vunpack.c.l.s4 1983009808
    %v752 = vunpack.c.0.s8 %v751
    %v753 = vlaneseq
    %v754 = vshrl.u32 %v753, 7
    %v755 = vsub.s32 %v752, %v754
    %v756 = vrot.slane %v742, %v755
    %v757 = vcombine.low %v733, %v749
    %v758 = vcombine.high %v733, %v749
    %v760 = vunpack.c.l.s4 1934713408
    %v761 = vunpack.c.0.s8 %v760
    %v762 = vlaneseq
    %v763 = vshrl.u32 %v762, 7
    %v764 = vsub.s32 %v761, %v763
    %v765 = vrot.slane %v757, %v764
    %v767 = vunpack.c.l.s4 1934713408
    %v768 = vunpack.c.0.s8 %v767
    %v769 = vlaneseq
    %v770 = vshrl.u32 %v769, 7
    %v771 = vsub.s32 %v768, %v770
    %v772 = vrot.slane %v758, %v771
    %v773 = vcombine.low %v740, %v756
    %v774 = vcombine.high %v740, %v756
    %v776 = vunpack.c.l.s4 1934713408
    %v777 = vunpack.c.0.s8 %v776
    %v778 = vlaneseq
    %v779 = vshrl.u32 %v778, 7
    %v780 = vsub.s32 %v777, %v779
    %v781 = vrot.slane %v773, %v780
    %v783 = vunpack.c.l.s4 1934713408
    %v784 = vunpack.c.0.s8 %v783
    %v785 = vlaneseq
    %v786 = vshrl.u32 %v785, 7
    %v787 = vsub.s32 %v784, %v786
    %v788 = vrot.slane %v774, %v787
    %v789 = vcombine.high %v765, 0.0
    %v790 = vcombine.high %v772, 0.0
    %v791 = vcombine.high %v781, 0.0
    %v792 = vcombine.high %v788, 0.0
    %v793 = vcombine.low %v634, %v716
    %v794 = vcombine.high %v634, %v716
    %v796 = vunpack.c.l.s4 1983009808
    %v797 = vunpack.c.0.s8 %v796
    %v798 = vlaneseq
    %v799 = vshrl.u32 %v798, 7
    %v800 = vsub.s32 %v797, %v799
    %v801 = vrot.slane %v793, %v800
    %v803 = vunpack.c.l.s4 1983009808
    %v804 = vunpack.c.0.s8 %v803
    %v805 = vlaneseq
    %v806 = vshrl.u32 %v805, 7
    %v807 = vsub.s32 %v804, %v806
    %v808 = vrot.slane %v794, %v807
    %v809 = vcombine.low %v710, %v722
    %v810 = vcombine.high %v710, %v722
    %v812 = vunpack.c.l.s4 1983009808
    %v813 = vunpack.c.0.s8 %v812
    %v814 = vlaneseq
    %v815 = vshrl.u32 %v814, 7
    %v816 = vsub.s32 %v813, %v815
    %v817 = vrot.slane %v809, %v816
    %v819 = vunpack.c.l.s4 1983009808
    %v820 = vunpack.c.0.s8 %v819
    %v821 = vlaneseq
    %v822 = vshrl.u32 %v821, 7
    %v823 = vsub.s32 %v820, %v822
    %v824 = vrot.slane %v810, %v823
    %v825 = vcombine.low %v801, %v817
    %v826 = vcombine.high %v801, %v817
    %v828 = vunpack.c.l.s4 1934713408
    %v829 = vunpack.c.0.s8 %v828
    %v830 = vlaneseq
    %v831 = vshrl.u32 %v830, 7
    %v832 = vsub.s32 %v829, %v831
    %v833 = vrot.slane %v825, %v832
    %v835 = vunpack.c.l.s4 1934713408
    %v836 = vunpack.c.0.s8 %v835
    %v837 = vlaneseq
    %v838 = vshrl.u32 %v837, 7
    %v839 = vsub.s32 %v836, %v838
    %v840 = vrot.slane %v826, %v839
    %v841 = vcombine.low %v808, %v824
    %v842 = vcombine.high %v808, %v824
    %v844 = vunpack.c.l.s4 1934713408
    %v845 = vunpack.c.0.s8 %v844
    %v846 = vlaneseq
    %v847 = vshrl.u32 %v846, 7
    %v848 = vsub.s32 %v845, %v847
    %v849 = vrot.slane %v841, %v848
    %v851 = vunpack.c.l.s4 1934713408
    %v852 = vunpack.c.0.s8 %v851
    %v853 = vlaneseq
    %v854 = vshrl.u32 %v853, 7
    %v855 = vsub.s32 %v852, %v854
    %v856 = vrot.slane %v842, %v855
    %v857 = vcombine.high %v833, 0.0
    %v858 = vcombine.high %v840, 0.0
    %v859 = vcombine.high %v849, 0.0
    %v860 = vcombine.high %v856, 0.0
    %v861 = vcombine.low %v765, %v772
    %v863 = vunpack.c.l.s4 1983009808
    %v864 = vunpack.c.0.s8 %v863
    %v865 = vlaneseq
    %v866 = vshrl.u32 %v865, 7
    %v867 = vsub.s32 %v864, %v866
    %v868 = vrot.slane %v861, %v867
    %v869 = vcombine.low %v789, %v790
    %v871 = vunpack.c.l.s4 1983009808
    %v872 = vunpack.c.0.s8 %v871
    %v873 = vlaneseq
    %v874 = vshrl.u32 %v873, 7
    %v875 = vsub.s32 %v872, %v874
    %v876 = vrot.slane %v869, %v875
    %v877 = vcombine.low %v781, %v788
    %v879 = vunpack.c.l.s4 1983009808
    %v880 = vunpack.c.0.s8 %v879
    %v881 = vlaneseq
    %v882 = vshrl.u32 %v881, 7
    %v883 = vsub.s32 %v880, %v882
    %v884 = vrot.slane %v877, %v883
    %v885 = vcombine.low %v791, %v792
    %v887 = vunpack.c.l.s4 1983009808
    %v888 = vunpack.c.0.s8 %v887
    %v889 = vlaneseq
    %v890 = vshrl.u32 %v889, 7
    %v891 = vsub.s32 %v888, %v890
    %v892 = vrot.slane %v885, %v891
    %v893 = vcombine.low %v868, %v876
    %v894 = vcombine.high %v868, %v876
    %v896 = vunpack.c.l.s4 1934713408
    %v897 = vunpack.c.0.s8 %v896
    %v898 = vlaneseq
    %v899 = vshrl.u32 %v898, 7
    %v900 = vsub.s32 %v897, %v899
    %v901 = vrot.slane %v893, %v900
    %v903 = vunpack.c.l.s4 1934713408
    %v904 = vunpack.c.0.s8 %v903
    %v905 = vlaneseq
    %v906 = vshrl.u32 %v905, 7
    %v907 = vsub.s32 %v904, %v906
    %v908 = vrot.slane %v894, %v907
    %v909 = vcombine.low %v884, %v892
    %v910 = vcombine.high %v884, %v892
    %v912 = vunpack.c.l.s4 1934713408
    %v913 = vunpack.c.0.s8 %v912
    %v914 = vlaneseq
    %v915 = vshrl.u32 %v914, 7
    %v916 = vsub.s32 %v913, %v915
    %v917 = vrot.slane %v909, %v916
    %v919 = vunpack.c.l.s4 1934713408
    %v920 = vunpack.c.0.s8 %v919
    %v921 = vlaneseq
    %v922 = vshrl.u32 %v921, 7
    %v923 = vsub.s32 %v920, %v922
    %v924 = vrot.slane %v910, %v923
    %v925 = vcombine.low %v901, %v917
    %v926 = vcombine.high %v901, %v917
    %v927 = vcombine.low %v908, %v924
    %v928 = vcombine.high %v908, %v924
    %v929 = vcombine.low %v833, %v840
    %v931 = vunpack.c.l.s4 1983009808
    %v932 = vunpack.c.0.s8 %v931
    %v933 = vlaneseq
    %v934 = vshrl.u32 %v933, 7
    %v935 = vsub.s32 %v932, %v934
    %v936 = vrot.slane %v929, %v935
    %v937 = vcombine.low %v857, %v858
    %v939 = vunpack.c.l.s4 1983009808
    %v940 = vunpack.c.0.s8 %v939
    %v941 = vlaneseq
    %v942 = vshrl.u32 %v941, 7
    %v943 = vsub.s32 %v940, %v942
    %v944 = vrot.slane %v937, %v943
    %v945 = vcombine.low %v849, %v856
    %v947 = vunpack.c.l.s4 1983009808
    %v948 = vunpack.c.0.s8 %v947
    %v949 = vlaneseq
    %v950 = vshrl.u32 %v949, 7
    %v951 = vsub.s32 %v948, %v950
    %v952 = vrot.slane %v945, %v951
    %v953 = vcombine.low %v859, %v860
    %v955 = vunpack.c.l.s4 1983009808
    %v956 = vunpack.c.0.s8 %v955
    %v957 = vlaneseq
    %v958 = vshrl.u32 %v957, 7
    %v959 = vsub.s32 %v956, %v958
    %v960 = vrot.slane %v953, %v959
    %v961 = vcombine.low %v936, %v944
    %v962 = vcombine.high %v936, %v944
    %v964 = vunpack.c.l.s4 1934713408
    %v965 = vunpack.c.0.s8 %v964
    %v966 = vlaneseq
    %v967 = vshrl.u32 %v966, 7
    %v968 = vsub.s32 %v965, %v967
    %v969 = vrot.slane %v961, %v968
    %v971 = vunpack.c.l.s4 1934713408
    %v972 = vunpack.c.0.s8 %v971
    %v973 = vlaneseq
    %v974 = vshrl.u32 %v973, 7
    %v975 = vsub.s32 %v972, %v974
    %v976 = vrot.slane %v962, %v975
    %v977 = vcombine.low %v952, %v960
    %v978 = vcombine.high %v952, %v960
    %v980 = vunpack.c.l.s4 1934713408
    %v981 = vunpack.c.0.s8 %v980
    %v982 = vlaneseq
    %v983 = vshrl.u32 %v982, 7
    %v984 = vsub.s32 %v981, %v983
    %v985 = vrot.slane %v977, %v984
    %v987 = vunpack.c.l.s4 1934713408
    %v988 = vunpack.c.0.s8 %v987
    %v989 = vlaneseq
    %v990 = vshrl.u32 %v989, 7
    %v991 = vsub.s32 %v988, %v990
    %v992 = vrot.slane %v978, %v991
    %v993 = vcombine.low %v969, %v985
    %v994 = vcombine.high %v969, %v985
    %v995 = vcombine.low %v976, %v992
    %v996 = vcombine.high %v976, %v992
    %v997 = vpack.c.bf16 %v925, %v925
    %v998 = vpack.c.bf16 %v926, %v926
    %v999 = vpack.c.bf16 %v927, %v927
    %v1000 = vpack.c.bf16 %v928, %v928
    %v1001 = vpack.c.bf16 %v993, %v993
    %v1002 = vpack.c.bf16 %v994, %v994
    %v1003 = vpack.c.bf16 %v995, %v995
    %v1004 = vpack.c.bf16 %v996, %v996
    %1007 = vrot.lane.b32.xlu0 %v699, 120
    %v1008 = vpop.permute.xlu0 %1007
    %1009 = vrot.lane.b32.xlu0 %v702, 120
    %v1010 = vpop.permute.xlu0 %1009
    %1013 = vrot.lane.b32.xlu0 %v699, 112
    %v1014 = vpop.permute.xlu0 %1013
    %1015 = vrot.lane.b32.xlu0 %v702, 112
    %v1016 = vpop.permute.xlu0 %1015
    %1019 = vrot.lane.b32.xlu0 %v699, 104
    %v1020 = vpop.permute.xlu0 %1019
    %1021 = vrot.lane.b32.xlu0 %v702, 104
    %v1022 = vpop.permute.xlu0 %1021
    %v1025 = vcombine.low %v699, %v1014
    %v1026 = vcombine.high %v699, %v1014
    %v1028 = vunpack.c.l.s4 1983009808
    %v1029 = vunpack.c.0.s8 %v1028
    %v1030 = vlaneseq
    %v1031 = vshrl.u32 %v1030, 7
    %v1032 = vsub.s32 %v1029, %v1031
    %v1033 = vrot.slane %v1025, %v1032
    %v1035 = vunpack.c.l.s4 1983009808
    %v1036 = vunpack.c.0.s8 %v1035
    %v1037 = vlaneseq
    %v1038 = vshrl.u32 %v1037, 7
    %v1039 = vsub.s32 %v1036, %v1038
    %v1040 = vrot.slane %v1026, %v1039
    %v1041 = vcombine.low %v1008, %v1020
    %v1042 = vcombine.high %v1008, %v1020
    %v1044 = vunpack.c.l.s4 1983009808
    %v1045 = vunpack.c.0.s8 %v1044
    %v1046 = vlaneseq
    %v1047 = vshrl.u32 %v1046, 7
    %v1048 = vsub.s32 %v1045, %v1047
    %v1049 = vrot.slane %v1041, %v1048
    %v1051 = vunpack.c.l.s4 1983009808
    %v1052 = vunpack.c.0.s8 %v1051
    %v1053 = vlaneseq
    %v1054 = vshrl.u32 %v1053, 7
    %v1055 = vsub.s32 %v1052, %v1054
    %v1056 = vrot.slane %v1042, %v1055
    %v1057 = vcombine.low %v1033, %v1049
    %v1058 = vcombine.high %v1033, %v1049
    %v1060 = vunpack.c.l.s4 1934713408
    %v1061 = vunpack.c.0.s8 %v1060
    %v1062 = vlaneseq
    %v1063 = vshrl.u32 %v1062, 7
    %v1064 = vsub.s32 %v1061, %v1063
    %v1065 = vrot.slane %v1057, %v1064
    %v1067 = vunpack.c.l.s4 1934713408
    %v1068 = vunpack.c.0.s8 %v1067
    %v1069 = vlaneseq
    %v1070 = vshrl.u32 %v1069, 7
    %v1071 = vsub.s32 %v1068, %v1070
    %v1072 = vrot.slane %v1058, %v1071
    %v1073 = vcombine.low %v1040, %v1056
    %v1074 = vcombine.high %v1040, %v1056
    %v1076 = vunpack.c.l.s4 1934713408
    %v1077 = vunpack.c.0.s8 %v1076
    %v1078 = vlaneseq
    %v1079 = vshrl.u32 %v1078, 7
    %v1080 = vsub.s32 %v1077, %v1079
    %v1081 = vrot.slane %v1073, %v1080
    %v1083 = vunpack.c.l.s4 1934713408
    %v1084 = vunpack.c.0.s8 %v1083
    %v1085 = vlaneseq
    %v1086 = vshrl.u32 %v1085, 7
    %v1087 = vsub.s32 %v1084, %v1086
    %v1088 = vrot.slane %v1074, %v1087
    %v1089 = vcombine.high %v1065, 0.0
    %v1090 = vcombine.high %v1072, 0.0
    %v1091 = vcombine.high %v1081, 0.0
    %v1092 = vcombine.high %v1088, 0.0
    %v1093 = vcombine.low %v702, %v1016
    %v1094 = vcombine.high %v702, %v1016
    %v1096 = vunpack.c.l.s4 1983009808
    %v1097 = vunpack.c.0.s8 %v1096
    %v1098 = vlaneseq
    %v1099 = vshrl.u32 %v1098, 7
    %v1100 = vsub.s32 %v1097, %v1099
    %v1101 = vrot.slane %v1093, %v1100
    %v1103 = vunpack.c.l.s4 1983009808
    %v1104 = vunpack.c.0.s8 %v1103
    %v1105 = vlaneseq
    %v1106 = vshrl.u32 %v1105, 7
    %v1107 = vsub.s32 %v1104, %v1106
    %v1108 = vrot.slane %v1094, %v1107
    %v1109 = vcombine.low %v1010, %v1022
    %v1110 = vcombine.high %v1010, %v1022
    %v1112 = vunpack.c.l.s4 1983009808
    %v1113 = vunpack.c.0.s8 %v1112
    %v1114 = vlaneseq
    %v1115 = vshrl.u32 %v1114, 7
    %v1116 = vsub.s32 %v1113, %v1115
    %v1117 = vrot.slane %v1109, %v1116
    %v1119 = vunpack.c.l.s4 1983009808
    %v1120 = vunpack.c.0.s8 %v1119
    %v1121 = vlaneseq
    %v1122 = vshrl.u32 %v1121, 7
    %v1123 = vsub.s32 %v1120, %v1122
    %v1124 = vrot.slane %v1110, %v1123
    %v1125 = vcombine.low %v1101, %v1117
    %v1126 = vcombine.high %v1101, %v1117
    %v1128 = vunpack.c.l.s4 1934713408
    %v1129 = vunpack.c.0.s8 %v1128
    %v1130 = vlaneseq
    %v1131 = vshrl.u32 %v1130, 7
    %v1132 = vsub.s32 %v1129, %v1131
    %v1133 = vrot.slane %v1125, %v1132
    %v1135 = vunpack.c.l.s4 1934713408
    %v1136 = vunpack.c.0.s8 %v1135
    %v1137 = vlaneseq
    %v1138 = vshrl.u32 %v1137, 7
    %v1139 = vsub.s32 %v1136, %v1138
    %v1140 = vrot.slane %v1126, %v1139
    %v1141 = vcombine.low %v1108, %v1124
    %v1142 = vcombine.high %v1108, %v1124
    %v1144 = vunpack.c.l.s4 1934713408
    %v1145 = vunpack.c.0.s8 %v1144
    %v1146 = vlaneseq
    %v1147 = vshrl.u32 %v1146, 7
    %v1148 = vsub.s32 %v1145, %v1147
    %v1149 = vrot.slane %v1141, %v1148
    %v1151 = vunpack.c.l.s4 1934713408
    %v1152 = vunpack.c.0.s8 %v1151
    %v1153 = vlaneseq
    %v1154 = vshrl.u32 %v1153, 7
    %v1155 = vsub.s32 %v1152, %v1154
    %v1156 = vrot.slane %v1142, %v1155
    %v1157 = vcombine.high %v1133, 0.0
    %v1158 = vcombine.high %v1140, 0.0
    %v1159 = vcombine.high %v1149, 0.0
    %v1160 = vcombine.high %v1156, 0.0
    %v1161 = vcombine.low %v1065, %v1072
    %v1163 = vunpack.c.l.s4 1983009808
    %v1164 = vunpack.c.0.s8 %v1163
    %v1165 = vlaneseq
    %v1166 = vshrl.u32 %v1165, 7
    %v1167 = vsub.s32 %v1164, %v1166
    %v1168 = vrot.slane %v1161, %v1167
    %v1169 = vcombine.low %v1089, %v1090
    %v1171 = vunpack.c.l.s4 1983009808
    %v1172 = vunpack.c.0.s8 %v1171
    %v1173 = vlaneseq
    %v1174 = vshrl.u32 %v1173, 7
    %v1175 = vsub.s32 %v1172, %v1174
    %v1176 = vrot.slane %v1169, %v1175
    %v1177 = vcombine.low %v1081, %v1088
    %v1179 = vunpack.c.l.s4 1983009808
    %v1180 = vunpack.c.0.s8 %v1179
    %v1181 = vlaneseq
    %v1182 = vshrl.u32 %v1181, 7
    %v1183 = vsub.s32 %v1180, %v1182
    %v1184 = vrot.slane %v1177, %v1183
    %v1185 = vcombine.low %v1091, %v1092
    %v1187 = vunpack.c.l.s4 1983009808
    %v1188 = vunpack.c.0.s8 %v1187
    %v1189 = vlaneseq
    %v1190 = vshrl.u32 %v1189, 7
    %v1191 = vsub.s32 %v1188, %v1190
    %v1192 = vrot.slane %v1185, %v1191
    %v1193 = vcombine.low %v1168, %v1176
    %v1194 = vcombine.high %v1168, %v1176
    %v1196 = vunpack.c.l.s4 1934713408
    %v1197 = vunpack.c.0.s8 %v1196
    %v1198 = vlaneseq
    %v1199 = vshrl.u32 %v1198, 7
    %v1200 = vsub.s32 %v1197, %v1199
    %v1201 = vrot.slane %v1193, %v1200
    %v1203 = vunpack.c.l.s4 1934713408
    %v1204 = vunpack.c.0.s8 %v1203
    %v1205 = vlaneseq
    %v1206 = vshrl.u32 %v1205, 7
    %v1207 = vsub.s32 %v1204, %v1206
    %v1208 = vrot.slane %v1194, %v1207
    %v1209 = vcombine.low %v1184, %v1192
    %v1210 = vcombine.high %v1184, %v1192
    %v1212 = vunpack.c.l.s4 1934713408
    %v1213 = vunpack.c.0.s8 %v1212
    %v1214 = vlaneseq
    %v1215 = vshrl.u32 %v1214, 7
    %v1216 = vsub.s32 %v1213, %v1215
    %v1217 = vrot.slane %v1209, %v1216
    %v1219 = vunpack.c.l.s4 1934713408
    %v1220 = vunpack.c.0.s8 %v1219
    %v1221 = vlaneseq
    %v1222 = vshrl.u32 %v1221, 7
    %v1223 = vsub.s32 %v1220, %v1222
    %v1224 = vrot.slane %v1210, %v1223
    %v1225 = vcombine.low %v1201, %v1217
    %v1226 = vcombine.high %v1201, %v1217
    %v1227 = vcombine.low %v1208, %v1224
    %v1228 = vcombine.high %v1208, %v1224
    %v1229 = vcombine.low %v1133, %v1140
    %v1231 = vunpack.c.l.s4 1983009808
    %v1232 = vunpack.c.0.s8 %v1231
    %v1233 = vlaneseq
    %v1234 = vshrl.u32 %v1233, 7
    %v1235 = vsub.s32 %v1232, %v1234
    %v1236 = vrot.slane %v1229, %v1235
    %v1237 = vcombine.low %v1157, %v1158
    %v1239 = vunpack.c.l.s4 1983009808
    %v1240 = vunpack.c.0.s8 %v1239
    %v1241 = vlaneseq
    %v1242 = vshrl.u32 %v1241, 7
    %v1243 = vsub.s32 %v1240, %v1242
    %v1244 = vrot.slane %v1237, %v1243
    %v1245 = vcombine.low %v1149, %v1156
    %v1247 = vunpack.c.l.s4 1983009808
    %v1248 = vunpack.c.0.s8 %v1247
    %v1249 = vlaneseq
    %v1250 = vshrl.u32 %v1249, 7
    %v1251 = vsub.s32 %v1248, %v1250
    %v1252 = vrot.slane %v1245, %v1251
    %v1253 = vcombine.low %v1159, %v1160
    %v1255 = vunpack.c.l.s4 1983009808
    %v1256 = vunpack.c.0.s8 %v1255
    %v1257 = vlaneseq
    %v1258 = vshrl.u32 %v1257, 7
    %v1259 = vsub.s32 %v1256, %v1258
    %v1260 = vrot.slane %v1253, %v1259
    %v1261 = vcombine.low %v1236, %v1244
    %v1262 = vcombine.high %v1236, %v1244
    %v1264 = vunpack.c.l.s4 1934713408
    %v1265 = vunpack.c.0.s8 %v1264
    %v1266 = vlaneseq
    %v1267 = vshrl.u32 %v1266, 7
    %v1268 = vsub.s32 %v1265, %v1267
    %v1269 = vrot.slane %v1261, %v1268
    %v1271 = vunpack.c.l.s4 1934713408
    %v1272 = vunpack.c.0.s8 %v1271
    %v1273 = vlaneseq
    %v1274 = vshrl.u32 %v1273, 7
    %v1275 = vsub.s32 %v1272, %v1274
    %v1276 = vrot.slane %v1262, %v1275
    %v1277 = vcombine.low %v1252, %v1260
    %v1278 = vcombine.high %v1252, %v1260
    %v1280 = vunpack.c.l.s4 1934713408
    %v1281 = vunpack.c.0.s8 %v1280
    %v1282 = vlaneseq
    %v1283 = vshrl.u32 %v1282, 7
    %v1284 = vsub.s32 %v1281, %v1283
    %v1285 = vrot.slane %v1277, %v1284
    %v1287 = vunpack.c.l.s4 1934713408
    %v1288 = vunpack.c.0.s8 %v1287
    %v1289 = vlaneseq
    %v1290 = vshrl.u32 %v1289, 7
    %v1291 = vsub.s32 %v1288, %v1290
    %v1292 = vrot.slane %v1278, %v1291
    %v1293 = vcombine.low %v1269, %v1285
    %v1294 = vcombine.high %v1269, %v1285
    %v1295 = vcombine.low %v1276, %v1292
    %v1296 = vcombine.high %v1276, %v1292
    %v1297 = vpack.c.bf16 %v1225, %v1225
    %v1298 = vpack.c.bf16 %v1226, %v1226
    %v1299 = vpack.c.bf16 %v1227, %v1227
    %v1300 = vpack.c.bf16 %v1228, %v1228
    %v1301 = vpack.c.bf16 %v1293, %v1293
    %v1302 = vpack.c.bf16 %v1294, %v1294
    %v1303 = vpack.c.bf16 %v1295, %v1295
    %v1304 = vpack.c.bf16 %v1296, %v1296
    %v1305 = vld [vmem:[#allocation2] sm:$0xf]
    %v1306 = vld [vmem:[#allocation2 + $0x4] sm:$0xf]
    %v1307 = vld [vmem:[#allocation2 + $0x8] sm:$0xf]
    %v1308 = vld [vmem:[#allocation2 + $0xc] sm:$0xf]
    %v1309 = vld [vmem:[#allocation2 + $0x10] sm:$0xf]
    %v1310 = vld [vmem:[#allocation2 + $0x14] sm:$0xf]
    %v1311 = vld [vmem:[#allocation2 + $0x18] sm:$0xf]
    %v1312 = vld [vmem:[#allocation2 + $0x1c] sm:$0xf]
    %vm1313 = vcmask 64512
    %v1315 = vsel %vm1313, %v1305, 0
    %v1318 = vsel %vm1313, %v997, 0
    %1320 = vmatprep.subr.bf16.mxu0 0
    %1321 = vmatpush1.bf16.xpose.msra.mxu0 %v1318
    %1322 = vmatprep.subr.bf16.mxu0 0
    %1323 = vmatpush1.bf16.xpose.msra.mxu0 0
    %1324 = vmatprep.subr.bf16.mxu0 0
    %1325 = vmatpush1.bf16.xpose.msra.mxu0 0
    %1326 = vmatprep.subr.bf16.mxu0 0
    %1327 = vmatpush1.bf16.xpose.msra.mxu0 0
    %1328 = vmatprep.subr.bf16.mxu0 0
    %1329 = vmatpush1.bf16.xpose.msra.mxu0 0
    %1330 = vmatprep.subr.bf16.mxu0 0
    %1331 = vmatpush1.bf16.xpose.msra.mxu0 0
    %1332 = vmatprep.subr.bf16.mxu0 0
    %1333 = vmatpush1.bf16.xpose.msra.mxu0 0
    %1334 = vmatprep.subr.bf16.mxu0 0
    %1335 = vmatpush1.bf16.xpose.msra.mxu0 0
    %1336 = vmatprep.subr.bf16.mxu0 0
    %1337 = vmatpush1.bf16.xpose.msra.mxu0 0
    %1338 = vmatprep.subr.bf16.mxu0 0
    %1339 = vmatpush1.bf16.xpose.msra.mxu0 0
    %1340 = vmatprep.subr.bf16.mxu0 0
    %1341 = vmatpush1.bf16.xpose.msra.mxu0 0
    %1342 = vmatprep.subr.bf16.mxu0 0
    %1343 = vmatpush1.bf16.xpose.msra.mxu0 0
    %1344 = vmatprep.subr.bf16.mxu0 0
    %1345 = vmatpush1.bf16.xpose.msra.mxu0 0
    %1346 = vmatprep.subr.bf16.mxu0 0
    %1347 = vmatpush1.bf16.xpose.msra.mxu0 0
    %1348 = vmatprep.subr.bf16.mxu0 0
    %1349 = vmatpush1.bf16.xpose.msra.mxu0 0
    %1350 = vmatprep.subr.bf16.mxu0 0
    %1351 = vmatpush1.bf16.xpose.msra.mxu0 0
    %1352 = vmatprep.mubr.bf16.mxu0 0
    %1353 = vmatmul.mubr.bf16.gmra.mrb[0].mxu0 %v1315
    %v1354 = vpop.f32.mrb[0].mxu0
    %v1355 = vadd.f32 0.0, %v1354
    %v1356 = vpop.f32.mrb[0].mxu0
    %v1357 = vpop.f32.mrb[0].mxu0
    %v1358 = vpop.f32.mrb[0].mxu0
    %1359 = vdwg.mxu0
    %v1361 = vsel %vm1313, %v1306, 0
    %v1364 = vsel %vm1313, %v998, 0
    %1366 = vmatprep.subr.bf16.mxu0 0
    %1367 = vmatpush1.bf16.xpose.msra.mxu0 %v1364
    %1368 = vmatprep.subr.bf16.mxu0 0
    %1369 = vmatpush1.bf16.xpose.msra.mxu0 0
    %1370 = vmatprep.subr.bf16.mxu0 0
    %1371 = vmatpush1.bf16.xpose.msra.mxu0 0
    %1372 = vmatprep.subr.bf16.mxu0 0
    %1373 = vmatpush1.bf16.xpose.msra.mxu0 0
    %1374 = vmatprep.subr.bf16.mxu0 0
    %1375 = vmatpush1.bf16.xpose.msra.mxu0 0
    %1376 = vmatprep.subr.bf16.mxu0 0
    %1377 = vmatpush1.bf16.xpose.msra.mxu0 0
    %1378 = vmatprep.subr.bf16.mxu0 0
    %1379 = vmatpush1.bf16.xpose.msra.mxu0 0
    %1380 = vmatprep.subr.bf16.mxu0 0
    %1381 = vmatpush1.bf16.xpose.msra.mxu0 0
    %1382 = vmatprep.subr.bf16.mxu0 0
    %1383 = vmatpush1.bf16.xpose.msra.mxu0 0
    %1384 = vmatprep.subr.bf16.mxu0 0
    %1385 = vmatpush1.bf16.xpose.msra.mxu0 0
    %1386 = vmatprep.subr.bf16.mxu0 0
    %1387 = vmatpush1.bf16.xpose.msra.mxu0 0
    %1388 = vmatprep.subr.bf16.mxu0 0
    %1389 = vmatpush1.bf16.xpose.msra.mxu0 0
    %1390 = vmatprep.subr.bf16.mxu0 0
    %1391 = vmatpush1.bf16.xpose.msra.mxu0 0
    %1392 = vmatprep.subr.bf16.mxu0 0
    %1393 = vmatpush1.bf16.xpose.msra.mxu0 0
    %1394 = vmatprep.subr.bf16.mxu0 0
    %1395 = vmatpush1.bf16.xpose.msra.mxu0 0
    %1396 = vmatprep.subr.bf16.mxu0 0
    %1397 = vmatpush1.bf16.xpose.msra.mxu0 0
    %1398 = vmatprep.mubr.bf16.mxu0 0
    %1399 = vmatmul.mubr.bf16.gmra.mrb[0].mxu0 %v1361
    %v1400 = vpop.f32.mrb[0].mxu0
    %v1401 = vadd.f32 0.0, %v1400
    %v1402 = vpop.f32.mrb[0].mxu0
    %v1403 = vpop.f32.mrb[0].mxu0
    %v1404 = vpop.f32.mrb[0].mxu0
    %1405 = vdwg.mxu0
    %v1407 = vsel %vm1313, %v1307, 0
    %v1410 = vsel %vm1313, %v999, 0
    %1412 = vmatprep.subr.bf16.mxu0 0
    %1413 = vmatpush1.bf16.xpose.msra.mxu0 %v1410
    %1414 = vmatprep.subr.bf16.mxu0 0
    %1415 = vmatpush1.bf16.xpose.msra.mxu0 0
    %1416 = vmatprep.subr.bf16.mxu0 0
    %1417 = vmatpush1.bf16.xpose.msra.mxu0 0
    %1418 = vmatprep.subr.bf16.mxu0 0
    %1419 = vmatpush1.bf16.xpose.msra.mxu0 0
    %1420 = vmatprep.subr.bf16.mxu0 0
    %1421 = vmatpush1.bf16.xpose.msra.mxu0 0
    %1422 = vmatprep.subr.bf16.mxu0 0
    %1423 = vmatpush1.bf16.xpose.msra.mxu0 0
    %1424 = vmatprep.subr.bf16.mxu0 0
    %1425 = vmatpush1.bf16.xpose.msra.mxu0 0
    %1426 = vmatprep.subr.bf16.mxu0 0
    %1427 = vmatpush1.bf16.xpose.msra.mxu0 0
    %1428 = vmatprep.subr.bf16.mxu0 0
    %1429 = vmatpush1.bf16.xpose.msra.mxu0 0
    %1430 = vmatprep.subr.bf16.mxu0 0
    %1431 = vmatpush1.bf16.xpose.msra.mxu0 0
    %1432 = vmatprep.subr.bf16.mxu0 0
    %1433 = vmatpush1.bf16.xpose.msra.mxu0 0
    %1434 = vmatprep.subr.bf16.mxu0 0
    %1435 = vmatpush1.bf16.xpose.msra.mxu0 0
    %1436 = vmatprep.subr.bf16.mxu0 0
    %1437 = vmatpush1.bf16.xpose.msra.mxu0 0
    %1438 = vmatprep.subr.bf16.mxu0 0
    %1439 = vmatpush1.bf16.xpose.msra.mxu0 0
    %1440 = vmatprep.subr.bf16.mxu0 0
    %1441 = vmatpush1.bf16.xpose.msra.mxu0 0
    %1442 = vmatprep.subr.bf16.mxu0 0
    %1443 = vmatpush1.bf16.xpose.msra.mxu0 0
    %1444 = vmatprep.mubr.bf16.mxu0 0
    %1445 = vmatmul.mubr.bf16.gmra.mrb[0].mxu0 %v1407
    %v1446 = vpop.f32.mrb[0].mxu0
    %v1447 = vadd.f32 0.0, %v1446
    %v1448 = vpop.f32.mrb[0].mxu0
    %v1449 = vpop.f32.mrb[0].mxu0
    %v1450 = vpop.f32.mrb[0].mxu0
    %1451 = vdwg.mxu0
    %v1453 = vsel %vm1313, %v1308, 0
    %v1456 = vsel %vm1313, %v1000, 0
    %1458 = vmatprep.subr.bf16.mxu0 0
    %1459 = vmatpush1.bf16.xpose.msra.mxu0 %v1456
    %1460 = vmatprep.subr.bf16.mxu0 0
    %1461 = vmatpush1.bf16.xpose.msra.mxu0 0
    %1462 = vmatprep.subr.bf16.mxu0 0
    %1463 = vmatpush1.bf16.xpose.msra.mxu0 0
    %1464 = vmatprep.subr.bf16.mxu0 0
    %1465 = vmatpush1.bf16.xpose.msra.mxu0 0
    %1466 = vmatprep.subr.bf16.mxu0 0
    %1467 = vmatpush1.bf16.xpose.msra.mxu0 0
    %1468 = vmatprep.subr.bf16.mxu0 0
    %1469 = vmatpush1.bf16.xpose.msra.mxu0 0
    %1470 = vmatprep.subr.bf16.mxu0 0
    %1471 = vmatpush1.bf16.xpose.msra.mxu0 0
    %1472 = vmatprep.subr.bf16.mxu0 0
    %1473 = vmatpush1.bf16.xpose.msra.mxu0 0
    %1474 = vmatprep.subr.bf16.mxu0 0
    %1475 = vmatpush1.bf16.xpose.msra.mxu0 0
    %1476 = vmatprep.subr.bf16.mxu0 0
    %1477 = vmatpush1.bf16.xpose.msra.mxu0 0
    %1478 = vmatprep.subr.bf16.mxu0 0
    %1479 = vmatpush1.bf16.xpose.msra.mxu0 0
    %1480 = vmatprep.subr.bf16.mxu0 0
    %1481 = vmatpush1.bf16.xpose.msra.mxu0 0
    %1482 = vmatprep.subr.bf16.mxu0 0
    %1483 = vmatpush1.bf16.xpose.msra.mxu0 0
    %1484 = vmatprep.subr.bf16.mxu0 0
    %1485 = vmatpush1.bf16.xpose.msra.mxu0 0
    %1486 = vmatprep.subr.bf16.mxu0 0
    %1487 = vmatpush1.bf16.xpose.msra.mxu0 0
    %1488 = vmatprep.subr.bf16.mxu0 0
    %1489 = vmatpush1.bf16.xpose.msra.mxu0 0
    %1490 = vmatprep.mubr.bf16.mxu0 0
    %1491 = vmatmul.mubr.bf16.gmra.mrb[0].mxu0 %v1453
    %v1492 = vpop.f32.mrb[0].mxu0
    %v1493 = vadd.f32 0.0, %v1492
    %v1494 = vpop.f32.mrb[0].mxu0
    %v1495 = vpop.f32.mrb[0].mxu0
    %v1496 = vpop.f32.mrb[0].mxu0
    %1497 = vdwg.mxu0
    %v1499 = vsel %vm1313, %v1309, 0
    %v1502 = vsel %vm1313, %v1001, 0
    %1504 = vmatprep.subr.bf16.mxu0 0
    %1505 = vmatpush1.bf16.xpose.msra.mxu0 %v1502
    %1506 = vmatprep.subr.bf16.mxu0 0
    %1507 = vmatpush1.bf16.xpose.msra.mxu0 0
    %1508 = vmatprep.subr.bf16.mxu0 0
    %1509 = vmatpush1.bf16.xpose.msra.mxu0 0
    %1510 = vmatprep.subr.bf16.mxu0 0
    %1511 = vmatpush1.bf16.xpose.msra.mxu0 0
    %1512 = vmatprep.subr.bf16.mxu0 0
    %1513 = vmatpush1.bf16.xpose.msra.mxu0 0
    %1514 = vmatprep.subr.bf16.mxu0 0
    %1515 = vmatpush1.bf16.xpose.msra.mxu0 0
    %1516 = vmatprep.subr.bf16.mxu0 0
    %1517 = vmatpush1.bf16.xpose.msra.mxu0 0
    %1518 = vmatprep.subr.bf16.mxu0 0
    %1519 = vmatpush1.bf16.xpose.msra.mxu0 0
    %1520 = vmatprep.subr.bf16.mxu0 0
    %1521 = vmatpush1.bf16.xpose.msra.mxu0 0
    %1522 = vmatprep.subr.bf16.mxu0 0
    %1523 = vmatpush1.bf16.xpose.msra.mxu0 0
    %1524 = vmatprep.subr.bf16.mxu0 0
    %1525 = vmatpush1.bf16.xpose.msra.mxu0 0
    %1526 = vmatprep.subr.bf16.mxu0 0
    %1527 = vmatpush1.bf16.xpose.msra.mxu0 0
    %1528 = vmatprep.subr.bf16.mxu0 0
    %1529 = vmatpush1.bf16.xpose.msra.mxu0 0
    %1530 = vmatprep.subr.bf16.mxu0 0
    %1531 = vmatpush1.bf16.xpose.msra.mxu0 0
    %1532 = vmatprep.subr.bf16.mxu0 0
    %1533 = vmatpush1.bf16.xpose.msra.mxu0 0
    %1534 = vmatprep.subr.bf16.mxu0 0
    %1535 = vmatpush1.bf16.xpose.msra.mxu0 0
    %1536 = vmatprep.mubr.bf16.mxu0 0
    %1537 = vmatmul.mubr.bf16.gmra.mrb[0].mxu0 %v1499
    %v1538 = vpop.f32.mrb[0].mxu0
    %v1539 = vadd.f32 0.0, %v1538
    %v1540 = vpop.f32.mrb[0].mxu0
    %v1541 = vpop.f32.mrb[0].mxu0
    %v1542 = vpop.f32.mrb[0].mxu0
    %1543 = vdwg.mxu0
    %v1545 = vsel %vm1313, %v1310, 0
    %v1548 = vsel %vm1313, %v1002, 0
    %1550 = vmatprep.subr.bf16.mxu0 0
    %1551 = vmatpush1.bf16.xpose.msra.mxu0 %v1548
    %1552 = vmatprep.subr.bf16.mxu0 0
    %1553 = vmatpush1.bf16.xpose.msra.mxu0 0
    %1554 = vmatprep.subr.bf16.mxu0 0
    %1555 = vmatpush1.bf16.xpose.msra.mxu0 0
    %1556 = vmatprep.subr.bf16.mxu0 0
    %1557 = vmatpush1.bf16.xpose.msra.mxu0 0
    %1558 = vmatprep.subr.bf16.mxu0 0
    %1559 = vmatpush1.bf16.xpose.msra.mxu0 0
    %1560 = vmatprep.subr.bf16.mxu0 0
    %1561 = vmatpush1.bf16.xpose.msra.mxu0 0
    %1562 = vmatprep.subr.bf16.mxu0 0
    %1563 = vmatpush1.bf16.xpose.msra.mxu0 0
    %1564 = vmatprep.subr.bf16.mxu0 0
    %1565 = vmatpush1.bf16.xpose.msra.mxu0 0
    %1566 = vmatprep.subr.bf16.mxu0 0
    %1567 = vmatpush1.bf16.xpose.msra.mxu0 0
    %1568 = vmatprep.subr.bf16.mxu0 0
    %1569 = vmatpush1.bf16.xpose.msra.mxu0 0
    %1570 = vmatprep.subr.bf16.mxu0 0
    %1571 = vmatpush1.bf16.xpose.msra.mxu0 0
    %1572 = vmatprep.subr.bf16.mxu0 0
    %1573 = vmatpush1.bf16.xpose.msra.mxu0 0
    %1574 = vmatprep.subr.bf16.mxu0 0
    %1575 = vmatpush1.bf16.xpose.msra.mxu0 0
    %1576 = vmatprep.subr.bf16.mxu0 0
    %1577 = vmatpush1.bf16.xpose.msra.mxu0 0
    %1578 = vmatprep.subr.bf16.mxu0 0
    %1579 = vmatpush1.bf16.xpose.msra.mxu0 0
    %1580 = vmatprep.subr.bf16.mxu0 0
    %1581 = vmatpush1.bf16.xpose.msra.mxu0 0
    %1582 = vmatprep.mubr.bf16.mxu0 0
    %1583 = vmatmul.mubr.bf16.gmra.mrb[0].mxu0 %v1545
    %v1584 = vpop.f32.mrb[0].mxu0
    %v1585 = vadd.f32 0.0, %v1584
    %v1586 = vpop.f32.mrb[0].mxu0
    %v1587 = vpop.f32.mrb[0].mxu0
    %v1588 = vpop.f32.mrb[0].mxu0
    %1589 = vdwg.mxu0
    %v1591 = vsel %vm1313, %v1311, 0
    %v1594 = vsel %vm1313, %v1003, 0
    %1596 = vmatprep.subr.bf16.mxu0 0
    %1597 = vmatpush1.bf16.xpose.msra.mxu0 %v1594
    %1598 = vmatprep.subr.bf16.mxu0 0
    %1599 = vmatpush1.bf16.xpose.msra.mxu0 0
    %1600 = vmatprep.subr.bf16.mxu0 0
    %1601 = vmatpush1.bf16.xpose.msra.mxu0 0
    %1602 = vmatprep.subr.bf16.mxu0 0
    %1603 = vmatpush1.bf16.xpose.msra.mxu0 0
    %1604 = vmatprep.subr.bf16.mxu0 0
    %1605 = vmatpush1.bf16.xpose.msra.mxu0 0
    %1606 = vmatprep.subr.bf16.mxu0 0
    %1607 = vmatpush1.bf16.xpose.msra.mxu0 0
    %1608 = vmatprep.subr.bf16.mxu0 0
    %1609 = vmatpush1.bf16.xpose.msra.mxu0 0
    %1610 = vmatprep.subr.bf16.mxu0 0
    %1611 = vmatpush1.bf16.xpose.msra.mxu0 0
    %1612 = vmatprep.subr.bf16.mxu0 0
    %1613 = vmatpush1.bf16.xpose.msra.mxu0 0
    %1614 = vmatprep.subr.bf16.mxu0 0
    %1615 = vmatpush1.bf16.xpose.msra.mxu0 0
    %1616 = vmatprep.subr.bf16.mxu0 0
    %1617 = vmatpush1.bf16.xpose.msra.mxu0 0
    %1618 = vmatprep.subr.bf16.mxu0 0
    %1619 = vmatpush1.bf16.xpose.msra.mxu0 0
    %1620 = vmatprep.subr.bf16.mxu0 0
    %1621 = vmatpush1.bf16.xpose.msra.mxu0 0
    %1622 = vmatprep.subr.bf16.mxu0 0
    %1623 = vmatpush1.bf16.xpose.msra.mxu0 0
    %1624 = vmatprep.subr.bf16.mxu0 0
    %1625 = vmatpush1.bf16.xpose.msra.mxu0 0
    %1626 = vmatprep.subr.bf16.mxu0 0
    %1627 = vmatpush1.bf16.xpose.msra.mxu0 0
    %1628 = vmatprep.mubr.bf16.mxu0 0
    %1629 = vmatmul.mubr.bf16.gmra.mrb[0].mxu0 %v1591
    %v1630 = vpop.f32.mrb[0].mxu0
    %v1631 = vadd.f32 0.0, %v1630
    %v1632 = vpop.f32.mrb[0].mxu0
    %v1633 = vpop.f32.mrb[0].mxu0
    %v1634 = vpop.f32.mrb[0].mxu0
    %1635 = vdwg.mxu0
    %v1637 = vsel %vm1313, %v1312, 0
    %v1640 = vsel %vm1313, %v1004, 0
    %1642 = vmatprep.subr.bf16.mxu0 0
    %1643 = vmatpush1.bf16.xpose.msra.mxu0 %v1640
    %1644 = vmatprep.subr.bf16.mxu0 0
    %1645 = vmatpush1.bf16.xpose.msra.mxu0 0
    %1646 = vmatprep.subr.bf16.mxu0 0
    %1647 = vmatpush1.bf16.xpose.msra.mxu0 0
    %1648 = vmatprep.subr.bf16.mxu0 0
    %1649 = vmatpush1.bf16.xpose.msra.mxu0 0
    %1650 = vmatprep.subr.bf16.mxu0 0
    %1651 = vmatpush1.bf16.xpose.msra.mxu0 0
    %1652 = vmatprep.subr.bf16.mxu0 0
    %1653 = vmatpush1.bf16.xpose.msra.mxu0 0
    %1654 = vmatprep.subr.bf16.mxu0 0
    %1655 = vmatpush1.bf16.xpose.msra.mxu0 0
    %1656 = vmatprep.subr.bf16.mxu0 0
    %1657 = vmatpush1.bf16.xpose.msra.mxu0 0
    %1658 = vmatprep.subr.bf16.mxu0 0
    %1659 = vmatpush1.bf16.xpose.msra.mxu0 0
    %1660 = vmatprep.subr.bf16.mxu0 0
    %1661 = vmatpush1.bf16.xpose.msra.mxu0 0
    %1662 = vmatprep.subr.bf16.mxu0 0
    %1663 = vmatpush1.bf16.xpose.msra.mxu0 0
    %1664 = vmatprep.subr.bf16.mxu0 0
    %1665 = vmatpush1.bf16.xpose.msra.mxu0 0
    %1666 = vmatprep.subr.bf16.mxu0 0
    %1667 = vmatpush1.bf16.xpose.msra.mxu0 0
    %1668 = vmatprep.subr.bf16.mxu0 0
    %1669 = vmatpush1.bf16.xpose.msra.mxu0 0
    %1670 = vmatprep.subr.bf16.mxu0 0
    %1671 = vmatpush1.bf16.xpose.msra.mxu0 0
    %1672 = vmatprep.subr.bf16.mxu0 0
    %1673 = vmatpush1.bf16.xpose.msra.mxu0 0
    %1674 = vmatprep.mubr.bf16.mxu0 0
    %1675 = vmatmul.mubr.bf16.gmra.mrb[0].mxu0 %v1637
    %v1676 = vpop.f32.mrb[0].mxu0
    %v1677 = vadd.f32 0.0, %v1676
    %v1678 = vpop.f32.mrb[0].mxu0
    %v1679 = vpop.f32.mrb[0].mxu0
    %v1680 = vpop.f32.mrb[0].mxu0
    %1681 = vdwg.mxu0
    %v1682 = vld [vmem:[#allocation6] sm:$0x3]
    %v1683 = vld [vmem:[#allocation6 + $0x2] sm:$0x3]
    %vm1684 = vnez %v1682
    %vm1685 = vnez %v1683
    %v1686 = vsel %vm1684, 16843009, 0
    %v1687 = vsel %vm1685, 16843009, 0
    %v1688 = vunpack.c.0.s8 %v1686
    %v1689 = vunpack.c.0.s8 %v1687
    %vm1690 = vcmp.ne.s32.totalorder %v1688, 0
    %vm1691 = vcmp.ne.s32.totalorder %v1689, 0
    %v1692 = vsel %vm1690, 1, 0
    %v1693 = vsel %vm1691, 1, 0
    %vm1694 = vcmp.eq.s32.totalorder %v1692, 1
    %vm1695 = vcmp.eq.s32.totalorder %v1693, 1
    %v1696 = vsel %vm1694, %v1355, -1e+30
    %v1697 = vsel %vm1694, %v1401, -1e+30
    %v1698 = vsel %vm1694, %v1447, -1e+30
    %v1699 = vsel %vm1694, %v1493, -1e+30
    %v1700 = vsel %vm1695, %v1539, -1e+30
    %v1701 = vsel %vm1695, %v1585, -1e+30
    %v1702 = vsel %vm1695, %v1631, -1e+30
    %v1703 = vsel %vm1695, %v1677, -1e+30
    %v1704 = vld [vmem:[#allocation3] sm:$0xff]
    %v1705 = vld [vmem:[#allocation3 + $0x8] sm:$0xff]
    %v1706 = vld [vmem:[#allocation3 + $0x10] sm:$0xff]
    %v1707 = vld [vmem:[#allocation3 + $0x18] sm:$0xff]
    %v1708 = vld [vmem:[#allocation3 + $0x20] sm:$0xff]
    %v1709 = vld [vmem:[#allocation3 + $0x28] sm:$0xff]
    %v1710 = vld [vmem:[#allocation3 + $0x30] sm:$0xff]
    %v1711 = vld [vmem:[#allocation3 + $0x38] sm:$0xff]
    %v1712 = vsel %vm1313, %v1696, -inf
    %1713 = vmax.xlane.f32.xlu0 %v1712
    %v1714 = vpop.xlane.xlu0 %1713
    %v1715 = vsel %vm1313, %v1697, -inf
    %1716 = vmax.xlane.f32.xlu0 %v1715
    %v1717 = vpop.xlane.xlu0 %1716
    %v1718 = vsel %vm1313, %v1698, -inf
    %1719 = vmax.xlane.f32.xlu0 %v1718
    %v1720 = vpop.xlane.xlu0 %1719
    %v1721 = vsel %vm1313, %v1699, -inf
    %1722 = vmax.xlane.f32.xlu0 %v1721
    %v1723 = vpop.xlane.xlu0 %1722
    %v1724 = vsel %vm1313, %v1700, -inf
    %1725 = vmax.xlane.f32.xlu0 %v1724
    %v1726 = vpop.xlane.xlu0 %1725
    %v1727 = vsel %vm1313, %v1701, -inf
    %1728 = vmax.xlane.f32.xlu0 %v1727
    %v1729 = vpop.xlane.xlu0 %1728
    %v1730 = vsel %vm1313, %v1702, -inf
    %1731 = vmax.xlane.f32.xlu0 %v1730
    %v1732 = vpop.xlane.xlu0 %1731
    %v1733 = vsel %vm1313, %v1703, -inf
    %1734 = vmax.xlane.f32.xlu0 %v1733
    %v1735 = vpop.xlane.xlu0 %1734
    %v1736 = vmax.f32 %v1704, %v1714
    %v1737 = vmax.f32 %v1705, %v1717
    %v1738 = vmax.f32 %v1706, %v1720
    %v1739 = vmax.f32 %v1707, %v1723
    %v1740 = vmax.f32 %v1708, %v1726
    %v1741 = vmax.f32 %v1709, %v1729
    %v1742 = vmax.f32 %v1710, %v1732
    %v1743 = vmax.f32 %v1711, %v1735
    %v1744 = vsub.f32 %v1704, %v1736
    %v1745 = vsub.f32 %v1705, %v1737
    %v1746 = vsub.f32 %v1706, %v1738
    %v1747 = vsub.f32 %v1707, %v1739
    %v1748 = vsub.f32 %v1708, %v1740
    %v1749 = vsub.f32 %v1709, %v1741
    %v1750 = vsub.f32 %v1710, %v1742
    %v1751 = vsub.f32 %v1711, %v1743
    %v1752 = vmul.f32 %v1744, 1.442695
    %v1753 = vpow.pop %v1752
    %v1754 = vmul.f32 %v1745, 1.442695
    %v1755 = vpow.pop %v1754
    %v1756 = vmul.f32 %v1746, 1.442695
    %v1757 = vpow.pop %v1756
    %v1758 = vmul.f32 %v1747, 1.442695
    %v1759 = vpow.pop %v1758
    %v1760 = vmul.f32 %v1748, 1.442695
    %v1761 = vpow.pop %v1760
    %v1762 = vmul.f32 %v1749, 1.442695
    %v1763 = vpow.pop %v1762
    %v1764 = vmul.f32 %v1750, 1.442695
    %v1765 = vpow.pop %v1764
    %v1766 = vmul.f32 %v1751, 1.442695
    %v1767 = vpow.pop %v1766
    %1769 = vset.pattern.permute.xlu0 0
    %1770 = vperm.xlu0 %1769, %v1736
    %v1771 = vpop.permute.xlu0 %1770
    %1774 = vset.pattern.permute.xlu0 0
    %1775 = vperm.xlu0 %1774, %v1737
    %v1776 = vpop.permute.xlu0 %1775
    %1779 = vset.pattern.permute.xlu0 0
    %1780 = vperm.xlu0 %1779, %v1738
    %v1781 = vpop.permute.xlu0 %1780
    %1784 = vset.pattern.permute.xlu0 0
    %1785 = vperm.xlu0 %1784, %v1739
    %v1786 = vpop.permute.xlu0 %1785
    %1789 = vset.pattern.permute.xlu0 0
    %1790 = vperm.xlu0 %1789, %v1740
    %v1791 = vpop.permute.xlu0 %1790
    %1794 = vset.pattern.permute.xlu0 0
    %1795 = vperm.xlu0 %1794, %v1741
    %v1796 = vpop.permute.xlu0 %1795
    %1799 = vset.pattern.permute.xlu0 0
    %1800 = vperm.xlu0 %1799, %v1742
    %v1801 = vpop.permute.xlu0 %1800
    %1804 = vset.pattern.permute.xlu0 0
    %1805 = vperm.xlu0 %1804, %v1743
    %v1806 = vpop.permute.xlu0 %1805
    %v1808 = vsub.f32 %v1696, %v1771
    %v1809 = vsub.f32 %v1697, %v1776
    %v1810 = vsub.f32 %v1698, %v1781
    %v1811 = vsub.f32 %v1699, %v1786
    %v1812 = vsub.f32 %v1700, %v1791
    %v1813 = vsub.f32 %v1701, %v1796
    %v1814 = vsub.f32 %v1702, %v1801
    %v1815 = vsub.f32 %v1703, %v1806
    %v1816 = vmul.f32 %v1808, 1.442695
    %v1817 = vpow.pop %v1816
    %v1818 = vmul.f32 %v1809, 1.442695
    %v1819 = vpow.pop %v1818
    %v1820 = vmul.f32 %v1810, 1.442695
    %v1821 = vpow.pop %v1820
    %v1822 = vmul.f32 %v1811, 1.442695
    %v1823 = vpow.pop %v1822
    %v1824 = vmul.f32 %v1812, 1.442695
    %v1825 = vpow.pop %v1824
    %v1826 = vmul.f32 %v1813, 1.442695
    %v1827 = vpow.pop %v1826
    %v1828 = vmul.f32 %v1814, 1.442695
    %v1829 = vpow.pop %v1828
    %v1830 = vmul.f32 %v1815, 1.442695
    %v1831 = vpow.pop %v1830
    %v1832 = vld [vmem:[#allocation4] sm:$0xff]
    %v1833 = vld [vmem:[#allocation4 + $0x8] sm:$0xff]
    %v1834 = vld [vmem:[#allocation4 + $0x10] sm:$0xff]
    %v1835 = vld [vmem:[#allocation4 + $0x18] sm:$0xff]
    %v1836 = vld [vmem:[#allocation4 + $0x20] sm:$0xff]
    %v1837 = vld [vmem:[#allocation4 + $0x28] sm:$0xff]
    %v1838 = vld [vmem:[#allocation4 + $0x30] sm:$0xff]
    %v1839 = vld [vmem:[#allocation4 + $0x38] sm:$0xff]
    %v1840 = vmul.f32 %v1753, %v1832
    %v1841 = vmul.f32 %v1755, %v1833
    %v1842 = vmul.f32 %v1757, %v1834
    %v1843 = vmul.f32 %v1759, %v1835
    %v1844 = vmul.f32 %v1761, %v1836
    %v1845 = vmul.f32 %v1763, %v1837
    %v1846 = vmul.f32 %v1765, %v1838
    %v1847 = vmul.f32 %v1767, %v1839
    %v1848 = vsel %vm1313, %v1817, 0.0
    %1849 = vadd.xlane.f32.xlu0 %v1848
    %v1850 = vpop.xlane.xlu0 %1849
    %v1851 = vsel %vm1313, %v1819, 0.0
    %1852 = vadd.xlane.f32.xlu0 %v1851
    %v1853 = vpop.xlane.xlu0 %1852
    %v1854 = vsel %vm1313, %v1821, 0.0
    %1855 = vadd.xlane.f32.xlu0 %v1854
    %v1856 = vpop.xlane.xlu0 %1855
    %v1857 = vsel %vm1313, %v1823, 0.0
    %1858 = vadd.xlane.f32.xlu0 %v1857
    %v1859 = vpop.xlane.xlu0 %1858
    %v1860 = vsel %vm1313, %v1825, 0.0
    %1861 = vadd.xlane.f32.xlu0 %v1860
    %v1862 = vpop.xlane.xlu0 %1861
    %v1863 = vsel %vm1313, %v1827, 0.0
    %1864 = vadd.xlane.f32.xlu0 %v1863
    %v1865 = vpop.xlane.xlu0 %1864
    %v1866 = vsel %vm1313, %v1829, 0.0
    %1867 = vadd.xlane.f32.xlu0 %v1866
    %v1868 = vpop.xlane.xlu0 %1867
    %v1869 = vsel %vm1313, %v1831, 0.0
    %1870 = vadd.xlane.f32.xlu0 %v1869
    %v1871 = vpop.xlane.xlu0 %1870
    %v1872 = vadd.f32 %v1840, %v1850
    %v1873 = vadd.f32 %v1841, %v1853
    %v1874 = vadd.f32 %v1842, %v1856
    %v1875 = vadd.f32 %v1843, %v1859
    %v1876 = vadd.f32 %v1844, %v1862
    %v1877 = vadd.f32 %v1845, %v1865
    %v1878 = vadd.f32 %v1846, %v1868
    %v1879 = vadd.f32 %v1847, %v1871
    %vm1880 = vcmask 7168
    %1881 = vst.msk [vmem:[#allocation4] sm:$0xff] %vm1880, %v1872
    %1882 = vst.msk [vmem:[#allocation4 + $0x8] sm:$0xff] %vm1880, %v1873
    %1883 = vst.msk [vmem:[#allocation4 + $0x10] sm:$0xff] %vm1880, %v1874
    %1884 = vst.msk [vmem:[#allocation4 + $0x18] sm:$0xff] %vm1880, %v1875
    %1885 = vst.msk [vmem:[#allocation4 + $0x20] sm:$0xff] %vm1880, %v1876
    %1886 = vst.msk [vmem:[#allocation4 + $0x28] sm:$0xff] %vm1880, %v1877
    %1887 = vst.msk [vmem:[#allocation4 + $0x30] sm:$0xff] %vm1880, %v1878
    %1888 = vst.msk [vmem:[#allocation4 + $0x38] sm:$0xff] %vm1880, %v1879
    %v1889 = vld [vmem:[#allocation5] sm:$0xff]
    %v1890 = vld [vmem:[#allocation5 + $0x8] sm:$0xff]
    %v1891 = vld [vmem:[#allocation5 + $0x10] sm:$0xff]
    %v1892 = vld [vmem:[#allocation5 + $0x18] sm:$0xff]
    %v1893 = vld [vmem:[#allocation5 + $0x20] sm:$0xff]
    %v1894 = vld [vmem:[#allocation5 + $0x28] sm:$0xff]
    %v1895 = vld [vmem:[#allocation5 + $0x30] sm:$0xff]
    %v1896 = vld [vmem:[#allocation5 + $0x38] sm:$0xff]
    %1898 = vset.pattern.permute.xlu0 0
    %1899 = vperm.xlu0 %1898, %v1753
    %v1900 = vpop.permute.xlu0 %1899
    %1903 = vset.pattern.permute.xlu0 0
    %1904 = vperm.xlu0 %1903, %v1755
    %v1905 = vpop.permute.xlu0 %1904
    %1908 = vset.pattern.permute.xlu0 0
    %1909 = vperm.xlu0 %1908, %v1757
    %v1910 = vpop.permute.xlu0 %1909
    %1913 = vset.pattern.permute.xlu0 0
    %1914 = vperm.xlu0 %1913, %v1759
    %v1915 = vpop.permute.xlu0 %1914
    %1918 = vset.pattern.permute.xlu0 0
    %1919 = vperm.xlu0 %1918, %v1761
    %v1920 = vpop.permute.xlu0 %1919
    %1923 = vset.pattern.permute.xlu0 0
    %1924 = vperm.xlu0 %1923, %v1763
    %v1925 = vpop.permute.xlu0 %1924
    %1928 = vset.pattern.permute.xlu0 0
    %1929 = vperm.xlu0 %1928, %v1765
    %v1930 = vpop.permute.xlu0 %1929
    %1933 = vset.pattern.permute.xlu0 0
    %1934 = vperm.xlu0 %1933, %v1767
    %v1935 = vpop.permute.xlu0 %1934
    %v1937 = vmul.f32 %v1900, %v1889
    %v1938 = vmul.f32 %v1905, %v1890
    %v1939 = vmul.f32 %v1910, %v1891
    %v1940 = vmul.f32 %v1915, %v1892
    %v1941 = vmul.f32 %v1920, %v1893
    %v1942 = vmul.f32 %v1925, %v1894
    %v1943 = vmul.f32 %v1930, %v1895
    %v1944 = vmul.f32 %v1935, %v1896
    %v1945 = vpack.c.bf16 %v1817, %v1817
    %v1946 = vpack.c.bf16 %v1819, %v1819
    %v1947 = vpack.c.bf16 %v1821, %v1821
    %v1948 = vpack.c.bf16 %v1823, %v1823
    %v1949 = vpack.c.bf16 %v1825, %v1825
    %v1950 = vpack.c.bf16 %v1827, %v1827
    %v1951 = vpack.c.bf16 %v1829, %v1829
    %v1952 = vpack.c.bf16 %v1831, %v1831
    %v1954 = vsel %vm1313, %v1945, 0
    %vm1956 = vcmask 1043456
    %v1958 = vsel %vm1956, %v1297, 0
    %1960 = vmatprep.subr.bf16.mxu0 0
    %1961 = vmatpush1.bf16.msra.mxu0 %v1958
    %1962 = vmatprep.subr.bf16.mxu0 0
    %1963 = vmatpush1.bf16.msra.mxu0 0
    %1964 = vmatprep.subr.bf16.mxu0 0
    %1965 = vmatpush1.bf16.msra.mxu0 0
    %1966 = vmatprep.subr.bf16.mxu0 0
    %1967 = vmatpush1.bf16.msra.mxu0 0
    %1968 = vmatprep.subr.bf16.mxu0 0
    %1969 = vmatpush1.bf16.msra.mxu0 0
    %1970 = vmatprep.subr.bf16.mxu0 0
    %1971 = vmatpush1.bf16.msra.mxu0 0
    %1972 = vmatprep.subr.bf16.mxu0 0
    %1973 = vmatpush1.bf16.msra.mxu0 0
    %1974 = vmatprep.subr.bf16.mxu0 0
    %1975 = vmatpush1.bf16.msra.mxu0 0
    %1976 = vmatprep.subr.bf16.mxu0 0
    %1977 = vmatpush1.bf16.msra.mxu0 0
    %1978 = vmatprep.subr.bf16.mxu0 0
    %1979 = vmatpush1.bf16.msra.mxu0 0
    %1980 = vmatprep.subr.bf16.mxu0 0
    %1981 = vmatpush1.bf16.msra.mxu0 0
    %1982 = vmatprep.subr.bf16.mxu0 0
    %1983 = vmatpush1.bf16.msra.mxu0 0
    %1984 = vmatprep.subr.bf16.mxu0 0
    %1985 = vmatpush1.bf16.msra.mxu0 0
    %1986 = vmatprep.subr.bf16.mxu0 0
    %1987 = vmatpush1.bf16.msra.mxu0 0
    %1988 = vmatprep.subr.bf16.mxu0 0
    %1989 = vmatpush1.bf16.msra.mxu0 0
    %1990 = vmatprep.subr.bf16.mxu0 0
    %1991 = vmatpush1.bf16.msra.mxu0 0
    %1992 = vmatprep.mubr.bf16.mxu0 0
    %1993 = vmatmul.mubr.bf16.gmra.mrb[0].mxu0 %v1954
    %v1994 = vpop.f32.mrb[0].mxu0
    %v1995 = vadd.f32 0.0, %v1994
    %v1996 = vpop.f32.mrb[0].mxu0
    %v1997 = vpop.f32.mrb[0].mxu0
    %v1998 = vpop.f32.mrb[0].mxu0
    %1999 = vdwg.mxu0
    %v2001 = vsel %vm1313, %v1946, 0
    %v2004 = vsel %vm1956, %v1298, 0
    %2006 = vmatprep.subr.bf16.mxu0 0
    %2007 = vmatpush1.bf16.msra.mxu0 %v2004
    %2008 = vmatprep.subr.bf16.mxu0 0
    %2009 = vmatpush1.bf16.msra.mxu0 0
    %2010 = vmatprep.subr.bf16.mxu0 0
    %2011 = vmatpush1.bf16.msra.mxu0 0
    %2012 = vmatprep.subr.bf16.mxu0 0
    %2013 = vmatpush1.bf16.msra.mxu0 0
    %2014 = vmatprep.subr.bf16.mxu0 0
    %2015 = vmatpush1.bf16.msra.mxu0 0
    %2016 = vmatprep.subr.bf16.mxu0 0
    %2017 = vmatpush1.bf16.msra.mxu0 0
    %2018 = vmatprep.subr.bf16.mxu0 0
    %2019 = vmatpush1.bf16.msra.mxu0 0
    %2020 = vmatprep.subr.bf16.mxu0 0
    %2021 = vmatpush1.bf16.msra.mxu0 0
    %2022 = vmatprep.subr.bf16.mxu0 0
    %2023 = vmatpush1.bf16.msra.mxu0 0
    %2024 = vmatprep.subr.bf16.mxu0 0
    %2025 = vmatpush1.bf16.msra.mxu0 0
    %2026 = vmatprep.subr.bf16.mxu0 0
    %2027 = vmatpush1.bf16.msra.mxu0 0
    %2028 = vmatprep.subr.bf16.mxu0 0
    %2029 = vmatpush1.bf16.msra.mxu0 0
    %2030 = vmatprep.subr.bf16.mxu0 0
    %2031 = vmatpush1.bf16.msra.mxu0 0
    %2032 = vmatprep.subr.bf16.mxu0 0
    %2033 = vmatpush1.bf16.msra.mxu0 0
    %2034 = vmatprep.subr.bf16.mxu0 0
    %2035 = vmatpush1.bf16.msra.mxu0 0
    %2036 = vmatprep.subr.bf16.mxu0 0
    %2037 = vmatpush1.bf16.msra.mxu0 0
    %2038 = vmatprep.mubr.bf16.mxu0 0
    %2039 = vmatmul.mubr.bf16.gmra.mrb[0].mxu0 %v2001
    %v2040 = vpop.f32.mrb[0].mxu0
    %v2041 = vadd.f32 0.0, %v2040
    %v2042 = vpop.f32.mrb[0].mxu0
    %v2043 = vpop.f32.mrb[0].mxu0
    %v2044 = vpop.f32.mrb[0].mxu0
    %2045 = vdwg.mxu0
    %v2047 = vsel %vm1313, %v1947, 0
    %v2050 = vsel %vm1956, %v1299, 0
    %2052 = vmatprep.subr.bf16.mxu0 0
    %2053 = vmatpush1.bf16.msra.mxu0 %v2050
    %2054 = vmatprep.subr.bf16.mxu0 0
    %2055 = vmatpush1.bf16.msra.mxu0 0
    %2056 = vmatprep.subr.bf16.mxu0 0
    %2057 = vmatpush1.bf16.msra.mxu0 0
    %2058 = vmatprep.subr.bf16.mxu0 0
    %2059 = vmatpush1.bf16.msra.mxu0 0
    %2060 = vmatprep.subr.bf16.mxu0 0
    %2061 = vmatpush1.bf16.msra.mxu0 0
    %2062 = vmatprep.subr.bf16.mxu0 0
    %2063 = vmatpush1.bf16.msra.mxu0 0
    %2064 = vmatprep.subr.bf16.mxu0 0
    %2065 = vmatpush1.bf16.msra.mxu0 0
    %2066 = vmatprep.subr.bf16.mxu0 0
    %2067 = vmatpush1.bf16.msra.mxu0 0
    %2068 = vmatprep.subr.bf16.mxu0 0
    %2069 = vmatpush1.bf16.msra.mxu0 0
    %2070 = vmatprep.subr.bf16.mxu0 0
    %2071 = vmatpush1.bf16.msra.mxu0 0
    %2072 = vmatprep.subr.bf16.mxu0 0
    %2073 = vmatpush1.bf16.msra.mxu0 0
    %2074 = vmatprep.subr.bf16.mxu0 0
    %2075 = vmatpush1.bf16.msra.mxu0 0
    %2076 = vmatprep.subr.bf16.mxu0 0
    %2077 = vmatpush1.bf16.msra.mxu0 0
    %2078 = vmatprep.subr.bf16.mxu0 0
    %2079 = vmatpush1.bf16.msra.mxu0 0
    %2080 = vmatprep.subr.bf16.mxu0 0
    %2081 = vmatpush1.bf16.msra.mxu0 0
    %2082 = vmatprep.subr.bf16.mxu0 0
    %2083 = vmatpush1.bf16.msra.mxu0 0
    %2084 = vmatprep.mubr.bf16.mxu0 0
    %2085 = vmatmul.mubr.bf16.gmra.mrb[0].mxu0 %v2047
    %v2086 = vpop.f32.mrb[0].mxu0
    %v2087 = vadd.f32 0.0, %v2086
    %v2088 = vpop.f32.mrb[0].mxu0
    %v2089 = vpop.f32.mrb[0].mxu0
    %v2090 = vpop.f32.mrb[0].mxu0
    %2091 = vdwg.mxu0
    %v2093 = vsel %vm1313, %v1948, 0
    %v2096 = vsel %vm1956, %v1300, 0
    %2098 = vmatprep.subr.bf16.mxu0 0
    %2099 = vmatpush1.bf16.msra.mxu0 %v2096
    %2100 = vmatprep.subr.bf16.mxu0 0
    %2101 = vmatpush1.bf16.msra.mxu0 0
    %2102 = vmatprep.subr.bf16.mxu0 0
    %2103 = vmatpush1.bf16.msra.mxu0 0
    %2104 = vmatprep.subr.bf16.mxu0 0
    %2105 = vmatpush1.bf16.msra.mxu0 0
    %2106 = vmatprep.subr.bf16.mxu0 0
    %2107 = vmatpush1.bf16.msra.mxu0 0
    %2108 = vmatprep.subr.bf16.mxu0 0
    %2109 = vmatpush1.bf16.msra.mxu0 0
    %2110 = vmatprep.subr.bf16.mxu0 0
    %2111 = vmatpush1.bf16.msra.mxu0 0
    %2112 = vmatprep.subr.bf16.mxu0 0
    %2113 = vmatpush1.bf16.msra.mxu0 0
    %2114 = vmatprep.subr.bf16.mxu0 0
    %2115 = vmatpush1.bf16.msra.mxu0 0
    %2116 = vmatprep.subr.bf16.mxu0 0
    %2117 = vmatpush1.bf16.msra.mxu0 0
    %2118 = vmatprep.subr.bf16.mxu0 0
    %2119 = vmatpush1.bf16.msra.mxu0 0
    %2120 = vmatprep.subr.bf16.mxu0 0
    %2121 = vmatpush1.bf16.msra.mxu0 0
    %2122 = vmatprep.subr.bf16.mxu0 0
    %2123 = vmatpush1.bf16.msra.mxu0 0
    %2124 = vmatprep.subr.bf16.mxu0 0
    %2125 = vmatpush1.bf16.msra.mxu0 0
    %2126 = vmatprep.subr.bf16.mxu0 0
    %2127 = vmatpush1.bf16.msra.mxu0 0
    %2128 = vmatprep.subr.bf16.mxu0 0
    %2129 = vmatpush1.bf16.msra.mxu0 0
    %2130 = vmatprep.mubr.bf16.mxu0 0
    %2131 = vmatmul.mubr.bf16.gmra.mrb[0].mxu0 %v2093
    %v2132 = vpop.f32.mrb[0].mxu0
    %v2133 = vadd.f32 0.0, %v2132
    %v2134 = vpop.f32.mrb[0].mxu0
    %v2135 = vpop.f32.mrb[0].mxu0
    %v2136 = vpop.f32.mrb[0].mxu0
    %2137 = vdwg.mxu0
    %v2139 = vsel %vm1313, %v1949, 0
    %v2142 = vsel %vm1956, %v1301, 0
    %2144 = vmatprep.subr.bf16.mxu0 0
    %2145 = vmatpush1.bf16.msra.mxu0 %v2142
    %2146 = vmatprep.subr.bf16.mxu0 0
    %2147 = vmatpush1.bf16.msra.mxu0 0
    %2148 = vmatprep.subr.bf16.mxu0 0
    %2149 = vmatpush1.bf16.msra.mxu0 0
    %2150 = vmatprep.subr.bf16.mxu0 0
    %2151 = vmatpush1.bf16.msra.mxu0 0
    %2152 = vmatprep.subr.bf16.mxu0 0
    %2153 = vmatpush1.bf16.msra.mxu0 0
    %2154 = vmatprep.subr.bf16.mxu0 0
    %2155 = vmatpush1.bf16.msra.mxu0 0
    %2156 = vmatprep.subr.bf16.mxu0 0
    %2157 = vmatpush1.bf16.msra.mxu0 0
    %2158 = vmatprep.subr.bf16.mxu0 0
    %2159 = vmatpush1.bf16.msra.mxu0 0
    %2160 = vmatprep.subr.bf16.mxu0 0
    %2161 = vmatpush1.bf16.msra.mxu0 0
    %2162 = vmatprep.subr.bf16.mxu0 0
    %2163 = vmatpush1.bf16.msra.mxu0 0
    %2164 = vmatprep.subr.bf16.mxu0 0
    %2165 = vmatpush1.bf16.msra.mxu0 0
    %2166 = vmatprep.subr.bf16.mxu0 0
    %2167 = vmatpush1.bf16.msra.mxu0 0
    %2168 = vmatprep.subr.bf16.mxu0 0
    %2169 = vmatpush1.bf16.msra.mxu0 0
    %2170 = vmatprep.subr.bf16.mxu0 0
    %2171 = vmatpush1.bf16.msra.mxu0 0
    %2172 = vmatprep.subr.bf16.mxu0 0
    %2173 = vmatpush1.bf16.msra.mxu0 0
    %2174 = vmatprep.subr.bf16.mxu0 0
    %2175 = vmatpush1.bf16.msra.mxu0 0
    %2176 = vmatprep.mubr.bf16.mxu0 0
    %2177 = vmatmul.mubr.bf16.gmra.mrb[0].mxu0 %v2139
    %v2178 = vpop.f32.mrb[0].mxu0
    %v2179 = vadd.f32 0.0, %v2178
    %v2180 = vpop.f32.mrb[0].mxu0
    %v2181 = vpop.f32.mrb[0].mxu0
    %v2182 = vpop.f32.mrb[0].mxu0
    %2183 = vdwg.mxu0
    %v2185 = vsel %vm1313, %v1950, 0
    %v2188 = vsel %vm1956, %v1302, 0
    %2190 = vmatprep.subr.bf16.mxu0 0
    %2191 = vmatpush1.bf16.msra.mxu0 %v2188
    %2192 = vmatprep.subr.bf16.mxu0 0
    %2193 = vmatpush1.bf16.msra.mxu0 0
    %2194 = vmatprep.subr.bf16.mxu0 0
    %2195 = vmatpush1.bf16.msra.mxu0 0
    %2196 = vmatprep.subr.bf16.mxu0 0
    %2197 = vmatpush1.bf16.msra.mxu0 0
    %2198 = vmatprep.subr.bf16.mxu0 0
    %2199 = vmatpush1.bf16.msra.mxu0 0
    %2200 = vmatprep.subr.bf16.mxu0 0
    %2201 = vmatpush1.bf16.msra.mxu0 0
    %2202 = vmatprep.subr.bf16.mxu0 0
    %2203 = vmatpush1.bf16.msra.mxu0 0
    %2204 = vmatprep.subr.bf16.mxu0 0
    %2205 = vmatpush1.bf16.msra.mxu0 0
    %2206 = vmatprep.subr.bf16.mxu0 0
    %2207 = vmatpush1.bf16.msra.mxu0 0
    %2208 = vmatprep.subr.bf16.mxu0 0
    %2209 = vmatpush1.bf16.msra.mxu0 0
    %2210 = vmatprep.subr.bf16.mxu0 0
    %2211 = vmatpush1.bf16.msra.mxu0 0
    %2212 = vmatprep.subr.bf16.mxu0 0
    %2213 = vmatpush1.bf16.msra.mxu0 0
    %2214 = vmatprep.subr.bf16.mxu0 0
    %2215 = vmatpush1.bf16.msra.mxu0 0
    %2216 = vmatprep.subr.bf16.mxu0 0
    %2217 = vmatpush1.bf16.msra.mxu0 0
    %2218 = vmatprep.subr.bf16.mxu0 0
    %2219 = vmatpush1.bf16.msra.mxu0 0
    %2220 = vmatprep.subr.bf16.mxu0 0
    %2221 = vmatpush1.bf16.msra.mxu0 0
    %2222 = vmatprep.mubr.bf16.mxu0 0
    %2223 = vmatmul.mubr.bf16.gmra.mrb[0].mxu0 %v2185
    %v2224 = vpop.f32.mrb[0].mxu0
    %v2225 = vadd.f32 0.0, %v2224
    %v2226 = vpop.f32.mrb[0].mxu0
    %v2227 = vpop.f32.mrb[0].mxu0
    %v2228 = vpop.f32.mrb[0].mxu0
    %2229 = vdwg.mxu0
    %v2231 = vsel %vm1313, %v1951, 0
    %v2234 = vsel %vm1956, %v1303, 0
    %2236 = vmatprep.subr.bf16.mxu0 0
    %2237 = vmatpush1.bf16.msra.mxu0 %v2234
    %2238 = vmatprep.subr.bf16.mxu0 0
    %2239 = vmatpush1.bf16.msra.mxu0 0
    %2240 = vmatprep.subr.bf16.mxu0 0
    %2241 = vmatpush1.bf16.msra.mxu0 0
    %2242 = vmatprep.subr.bf16.mxu0 0
    %2243 = vmatpush1.bf16.msra.mxu0 0
    %2244 = vmatprep.subr.bf16.mxu0 0
    %2245 = vmatpush1.bf16.msra.mxu0 0
    %2246 = vmatprep.subr.bf16.mxu0 0
    %2247 = vmatpush1.bf16.msra.mxu0 0
    %2248 = vmatprep.subr.bf16.mxu0 0
    %2249 = vmatpush1.bf16.msra.mxu0 0
    %2250 = vmatprep.subr.bf16.mxu0 0
    %2251 = vmatpush1.bf16.msra.mxu0 0
    %2252 = vmatprep.subr.bf16.mxu0 0
    %2253 = vmatpush1.bf16.msra.mxu0 0
    %2254 = vmatprep.subr.bf16.mxu0 0
    %2255 = vmatpush1.bf16.msra.mxu0 0
    %2256 = vmatprep.subr.bf16.mxu0 0
    %2257 = vmatpush1.bf16.msra.mxu0 0
    %2258 = vmatprep.subr.bf16.mxu0 0
    %2259 = vmatpush1.bf16.msra.mxu0 0
    %2260 = vmatprep.subr.bf16.mxu0 0
    %2261 = vmatpush1.bf16.msra.mxu0 0
    %2262 = vmatprep.subr.bf16.mxu0 0
    %2263 = vmatpush1.bf16.msra.mxu0 0
    %2264 = vmatprep.subr.bf16.mxu0 0
    %2265 = vmatpush1.bf16.msra.mxu0 0
    %2266 = vmatprep.subr.bf16.mxu0 0
    %2267 = vmatpush1.bf16.msra.mxu0 0
    %2268 = vmatprep.mubr.bf16.mxu0 0
    %2269 = vmatmul.mubr.bf16.gmra.mrb[0].mxu0 %v2231
    %v2270 = vpop.f32.mrb[0].mxu0
    %v2271 = vadd.f32 0.0, %v2270
    %v2272 = vpop.f32.mrb[0].mxu0
    %v2273 = vpop.f32.mrb[0].mxu0
    %v2274 = vpop.f32.mrb[0].mxu0
    %2275 = vdwg.mxu0
    %v2277 = vsel %vm1313, %v1952, 0
    %v2280 = vsel %vm1956, %v1304, 0
    %2282 = vmatprep.subr.bf16.mxu0 0
    %2283 = vmatpush1.bf16.msra.mxu0 %v2280
    %2284 = vmatprep.subr.bf16.mxu0 0
    %2285 = vmatpush1.bf16.msra.mxu0 0
    %2286 = vmatprep.subr.bf16.mxu0 0
    %2287 = vmatpush1.bf16.msra.mxu0 0
    %2288 = vmatprep.subr.bf16.mxu0 0
    %2289 = vmatpush1.bf16.msra.mxu0 0
    %2290 = vmatprep.subr.bf16.mxu0 0
    %2291 = vmatpush1.bf16.msra.mxu0 0
    %2292 = vmatprep.subr.bf16.mxu0 0
    %2293 = vmatpush1.bf16.msra.mxu0 0
    %2294 = vmatprep.subr.bf16.mxu0 0
    %2295 = vmatpush1.bf16.msra.mxu0 0
    %2296 = vmatprep.subr.bf16.mxu0 0
    %2297 = vmatpush1.bf16.msra.mxu0 0
    %2298 = vmatprep.subr.bf16.mxu0 0
    %2299 = vmatpush1.bf16.msra.mxu0 0
    %2300 = vmatprep.subr.bf16.mxu0 0
    %2301 = vmatpush1.bf16.msra.mxu0 0
    %2302 = vmatprep.subr.bf16.mxu0 0
    %2303 = vmatpush1.bf16.msra.mxu0 0
    %2304 = vmatprep.subr.bf16.mxu0 0
    %2305 = vmatpush1.bf16.msra.mxu0 0
    %2306 = vmatprep.subr.bf16.mxu0 0
    %2307 = vmatpush1.bf16.msra.mxu0 0
    %2308 = vmatprep.subr.bf16.mxu0 0
    %2309 = vmatpush1.bf16.msra.mxu0 0
    %2310 = vmatprep.subr.bf16.mxu0 0
    %2311 = vmatpush1.bf16.msra.mxu0 0
    %2312 = vmatprep.subr.bf16.mxu0 0
    %2313 = vmatpush1.bf16.msra.mxu0 0
    %2314 = vmatprep.mubr.bf16.mxu0 0
    %2315 = vmatmul.mubr.bf16.gmra.mrb[0].mxu0 %v2277
    %v2316 = vpop.f32.mrb[0].mxu0
    %v2317 = vadd.f32 0.0, %v2316
    %v2318 = vpop.f32.mrb[0].mxu0
    %v2319 = vpop.f32.mrb[0].mxu0
    %v2320 = vpop.f32.mrb[0].mxu0
    %2321 = vdwg.mxu0
    %v2322 = vadd.f32 %v1937, %v1995
    %v2323 = vadd.f32 %v1938, %v2041
    %v2324 = vadd.f32 %v1939, %v2087
    %v2325 = vadd.f32 %v1940, %v2133
    %v2326 = vadd.f32 %v1941, %v2179
    %v2327 = vadd.f32 %v1942, %v2225
    %v2328 = vadd.f32 %v1943, %v2271
    %v2329 = vadd.f32 %v1944, %v2317
    %2330 = vst.msk [vmem:[#allocation5] sm:$0xff] %vm1313, %v2322
    %2331 = vst.msk [vmem:[#allocation5 + $0x8] sm:$0xff] %vm1313, %v2323
    %2332 = vst.msk [vmem:[#allocation5 + $0x10] sm:$0xff] %vm1313, %v2324
    %2333 = vst.msk [vmem:[#allocation5 + $0x18] sm:$0xff] %vm1313, %v2325
    %2334 = vst.msk [vmem:[#allocation5 + $0x20] sm:$0xff] %vm1313, %v2326
    %2335 = vst.msk [vmem:[#allocation5 + $0x28] sm:$0xff] %vm1313, %v2327
    %2336 = vst.msk [vmem:[#allocation5 + $0x30] sm:$0xff] %vm1313, %v2328
    %2337 = vst.msk [vmem:[#allocation5 + $0x38] sm:$0xff] %vm1313, %v2329
    %2338 = vst.msk [vmem:[#allocation3] sm:$0xff] %vm1880, %v1736
    %2339 = vst.msk [vmem:[#allocation3 + $0x8] sm:$0xff] %vm1880, %v1737
    %2340 = vst.msk [vmem:[#allocation3 + $0x10] sm:$0xff] %vm1880, %v1738
    %2341 = vst.msk [vmem:[#allocation3 + $0x18] sm:$0xff] %vm1880, %v1739
    %2342 = vst.msk [vmem:[#allocation3 + $0x20] sm:$0xff] %vm1880, %v1740
    %2343 = vst.msk [vmem:[#allocation3 + $0x28] sm:$0xff] %vm1880, %v1741
    %2344 = vst.msk [vmem:[#allocation3 + $0x30] sm:$0xff] %vm1880, %v1742
    %2345 = vst.msk [vmem:[#allocation3 + $0x38] sm:$0xff] %vm1880, %v1743
    // Predicated region
    $region114: #{tpu_custom_call.1} parent=1 // pred_check
      %p2346 = pneg %p154
    $region115: #{tpu_custom_call.1} parent=1 // pred_check_branch
      %2348 = sbr.rel (%p2346) target = $region117
    $region116: #{tpu_custom_call.1} parent=1 // pred_region
      %v2349 = vld [vmem:[#allocation5] sm:$0xff]
      %v2350 = vld [vmem:[#allocation5 + $0x8] sm:$0xff]
      %v2351 = vld [vmem:[#allocation5 + $0x10] sm:$0xff]
      %v2352 = vld [vmem:[#allocation5 + $0x18] sm:$0xff]
      %v2353 = vld [vmem:[#allocation5 + $0x20] sm:$0xff]
      %v2354 = vld [vmem:[#allocation5 + $0x28] sm:$0xff]
      %v2355 = vld [vmem:[#allocation5 + $0x30] sm:$0xff]
      %v2356 = vld [vmem:[#allocation5 + $0x38] sm:$0xff]
      %v2357 = vld [vmem:[#allocation4] sm:$0xff]
      %v2358 = vld [vmem:[#allocation4 + $0x8] sm:$0xff]
      %v2359 = vld [vmem:[#allocation4 + $0x10] sm:$0xff]
      %v2360 = vld [vmem:[#allocation4 + $0x18] sm:$0xff]
      %v2361 = vld [vmem:[#allocation4 + $0x20] sm:$0xff]
      %v2362 = vld [vmem:[#allocation4 + $0x28] sm:$0xff]
      %v2363 = vld [vmem:[#allocation4 + $0x30] sm:$0xff]
      %v2364 = vld [vmem:[#allocation4 + $0x38] sm:$0xff]
      %v2365 = vrcp.pop %v2357
      %v2366 = vrcp.pop %v2358
      %v2367 = vrcp.pop %v2359
      %v2368 = vrcp.pop %v2360
      %v2369 = vrcp.pop %v2361
      %v2370 = vrcp.pop %v2362
      %v2371 = vrcp.pop %v2363
      %v2372 = vrcp.pop %v2364
      %2374 = vset.pattern.permute.xlu0 0
      %2375 = vperm.xlu0 %2374, %v2365
      %v2376 = vpop.permute.xlu0 %2375
      %2379 = vset.pattern.permute.xlu0 0
      %2380 = vperm.xlu0 %2379, %v2366
      %v2381 = vpop.permute.xlu0 %2380
      %2384 = vset.pattern.permute.xlu0 0
      %2385 = vperm.xlu0 %2384, %v2367
      %v2386 = vpop.permute.xlu0 %2385
      %2389 = vset.pattern.permute.xlu0 0
      %2390 = vperm.xlu0 %2389, %v2368
      %v2391 = vpop.permute.xlu0 %2390
      %2394 = vset.pattern.permute.xlu0 0
      %2395 = vperm.xlu0 %2394, %v2369
      %v2396 = vpop.permute.xlu0 %2395
      %2399 = vset.pattern.permute.xlu0 0
      %2400 = vperm.xlu0 %2399, %v2370
      %v2401 = vpop.permute.xlu0 %2400
      %2404 = vset.pattern.permute.xlu0 0
      %2405 = vperm.xlu0 %2404, %v2371
      %v2406 = vpop.permute.xlu0 %2405
      %2409 = vset.pattern.permute.xlu0 0
      %2410 = vperm.xlu0 %2409, %v2372
      %v2411 = vpop.permute.xlu0 %2410
      %v2413 = vmul.f32 %v2349, %v2376
      %v2414 = vmul.f32 %v2350, %v2381
      %v2415 = vmul.f32 %v2351, %v2386
      %v2416 = vmul.f32 %v2352, %v2391
      %v2417 = vmul.f32 %v2353, %v2396
      %v2418 = vmul.f32 %v2354, %v2401
      %v2419 = vmul.f32 %v2355, %v2406
      %v2420 = vmul.f32 %v2356, %v2411
      %v2421 = vcombine.low %v2413, %v2415
      %v2422 = vcombine.high %v2413, %v2415
      %v2424 = vunpack.c.l.s4 1983009808
      %v2425 = vunpack.c.0.s8 %v2424
      %v2426 = vlaneseq
      %v2427 = vshrl.u32 %v2426, 7
      %v2428 = vsub.s32 %v2425, %v2427
      %v2429 = vrot.slane %v2421, %v2428
      %v2431 = vunpack.c.l.s4 1983009808
      %v2432 = vunpack.c.0.s8 %v2431
      %v2433 = vlaneseq
      %v2434 = vshrl.u32 %v2433, 7
      %v2435 = vsub.s32 %v2432, %v2434
      %v2436 = vrot.slane %v2422, %v2435
      %v2437 = vcombine.low %v2414, %v2416
      %v2438 = vcombine.high %v2414, %v2416
      %v2440 = vunpack.c.l.s4 1983009808
      %v2441 = vunpack.c.0.s8 %v2440
      %v2442 = vlaneseq
      %v2443 = vshrl.u32 %v2442, 7
      %v2444 = vsub.s32 %v2441, %v2443
      %v2445 = vrot.slane %v2437, %v2444
      %v2447 = vunpack.c.l.s4 1983009808
      %v2448 = vunpack.c.0.s8 %v2447
      %v2449 = vlaneseq
      %v2450 = vshrl.u32 %v2449, 7
      %v2451 = vsub.s32 %v2448, %v2450
      %v2452 = vrot.slane %v2438, %v2451
      %v2453 = vcombine.low %v2429, %v2445
      %v2454 = vcombine.high %v2429, %v2445
      %v2456 = vunpack.c.l.s4 1934713408
      %v2457 = vunpack.c.0.s8 %v2456
      %v2458 = vlaneseq
      %v2459 = vshrl.u32 %v2458, 7
      %v2460 = vsub.s32 %v2457, %v2459
      %v2461 = vrot.slane %v2453, %v2460
      %v2463 = vunpack.c.l.s4 1934713408
      %v2464 = vunpack.c.0.s8 %v2463
      %v2465 = vlaneseq
      %v2466 = vshrl.u32 %v2465, 7
      %v2467 = vsub.s32 %v2464, %v2466
      %v2468 = vrot.slane %v2454, %v2467
      %v2469 = vcombine.low %v2436, %v2452
      %v2470 = vcombine.high %v2436, %v2452
      %v2472 = vunpack.c.l.s4 1934713408
      %v2473 = vunpack.c.0.s8 %v2472
      %v2474 = vlaneseq
      %v2475 = vshrl.u32 %v2474, 7
      %v2476 = vsub.s32 %v2473, %v2475
      %v2477 = vrot.slane %v2469, %v2476
      %v2479 = vunpack.c.l.s4 1934713408
      %v2480 = vunpack.c.0.s8 %v2479
      %v2481 = vlaneseq
      %v2482 = vshrl.u32 %v2481, 7
      %v2483 = vsub.s32 %v2480, %v2482
      %v2484 = vrot.slane %v2470, %v2483
      %v2485 = vcombine.high %v2461, 0.0
      %v2486 = vcombine.high %v2468, 0.0
      %v2487 = vcombine.high %v2477, 0.0
      %v2488 = vcombine.high %v2484, 0.0
      %v2489 = vcombine.low %v2417, %v2419
      %v2490 = vcombine.high %v2417, %v2419
      %v2492 = vunpack.c.l.s4 1983009808
      %v2493 = vunpack.c.0.s8 %v2492
      %v2494 = vlaneseq
      %v2495 = vshrl.u32 %v2494, 7
      %v2496 = vsub.s32 %v2493, %v2495
      %v2497 = vrot.slane %v2489, %v2496
      %v2499 = vunpack.c.l.s4 1983009808
      %v2500 = vunpack.c.0.s8 %v2499
      %v2501 = vlaneseq
      %v2502 = vshrl.u32 %v2501, 7
      %v2503 = vsub.s32 %v2500, %v2502
      %v2504 = vrot.slane %v2490, %v2503
      %v2505 = vcombine.low %v2418, %v2420
      %v2506 = vcombine.high %v2418, %v2420
      %v2508 = vunpack.c.l.s4 1983009808
      %v2509 = vunpack.c.0.s8 %v2508
      %v2510 = vlaneseq
      %v2511 = vshrl.u32 %v2510, 7
      %v2512 = vsub.s32 %v2509, %v2511
      %v2513 = vrot.slane %v2505, %v2512
      %v2515 = vunpack.c.l.s4 1983009808
      %v2516 = vunpack.c.0.s8 %v2515
      %v2517 = vlaneseq
      %v2518 = vshrl.u32 %v2517, 7
      %v2519 = vsub.s32 %v2516, %v2518
      %v2520 = vrot.slane %v2506, %v2519
      %v2521 = vcombine.low %v2497, %v2513
      %v2522 = vcombine.high %v2497, %v2513
      %v2524 = vunpack.c.l.s4 1934713408
      %v2525 = vunpack.c.0.s8 %v2524
      %v2526 = vlaneseq
      %v2527 = vshrl.u32 %v2526, 7
      %v2528 = vsub.s32 %v2525, %v2527
      %v2529 = vrot.slane %v2521, %v2528
      %v2531 = vunpack.c.l.s4 1934713408
      %v2532 = vunpack.c.0.s8 %v2531
      %v2533 = vlaneseq
      %v2534 = vshrl.u32 %v2533, 7
      %v2535 = vsub.s32 %v2532, %v2534
      %v2536 = vrot.slane %v2522, %v2535
      %v2537 = vcombine.low %v2504, %v2520
      %v2538 = vcombine.high %v2504, %v2520
      %v2540 = vunpack.c.l.s4 1934713408
      %v2541 = vunpack.c.0.s8 %v2540
      %v2542 = vlaneseq
      %v2543 = vshrl.u32 %v2542, 7
      %v2544 = vsub.s32 %v2541, %v2543
      %v2545 = vrot.slane %v2537, %v2544
      %v2547 = vunpack.c.l.s4 1934713408
      %v2548 = vunpack.c.0.s8 %v2547
      %v2549 = vlaneseq
      %v2550 = vshrl.u32 %v2549, 7
      %v2551 = vsub.s32 %v2548, %v2550
      %v2552 = vrot.slane %v2538, %v2551
      %v2553 = vcombine.high %v2529, 0.0
      %v2554 = vcombine.high %v2536, 0.0
      %v2555 = vcombine.high %v2545, 0.0
      %v2556 = vcombine.high %v2552, 0.0
      %v2557 = vcombine.low %v2461, %v2468
      %v2559 = vunpack.c.l.s4 1983009808
      %v2560 = vunpack.c.0.s8 %v2559
      %v2561 = vlaneseq
      %v2562 = vshrl.u32 %v2561, 7
      %v2563 = vsub.s32 %v2560, %v2562
      %v2564 = vrot.slane %v2557, %v2563
      %v2565 = vcombine.low %v2485, %v2486
      %v2567 = vunpack.c.l.s4 1983009808
      %v2568 = vunpack.c.0.s8 %v2567
      %v2569 = vlaneseq
      %v2570 = vshrl.u32 %v2569, 7
      %v2571 = vsub.s32 %v2568, %v2570
      %v2572 = vrot.slane %v2565, %v2571
      %v2573 = vcombine.low %v2477, %v2484
      %v2575 = vunpack.c.l.s4 1983009808
      %v2576 = vunpack.c.0.s8 %v2575
      %v2577 = vlaneseq
      %v2578 = vshrl.u32 %v2577, 7
      %v2579 = vsub.s32 %v2576, %v2578
      %v2580 = vrot.slane %v2573, %v2579
      %v2581 = vcombine.low %v2487, %v2488
      %v2583 = vunpack.c.l.s4 1983009808
      %v2584 = vunpack.c.0.s8 %v2583
      %v2585 = vlaneseq
      %v2586 = vshrl.u32 %v2585, 7
      %v2587 = vsub.s32 %v2584, %v2586
      %v2588 = vrot.slane %v2581, %v2587
      %v2589 = vcombine.low %v2564, %v2572
      %v2590 = vcombine.high %v2564, %v2572
      %v2592 = vunpack.c.l.s4 1934713408
      %v2593 = vunpack.c.0.s8 %v2592
      %v2594 = vlaneseq
      %v2595 = vshrl.u32 %v2594, 7
      %v2596 = vsub.s32 %v2593, %v2595
      %v2597 = vrot.slane %v2589, %v2596
      %v2599 = vunpack.c.l.s4 1934713408
      %v2600 = vunpack.c.0.s8 %v2599
      %v2601 = vlaneseq
      %v2602 = vshrl.u32 %v2601, 7
      %v2603 = vsub.s32 %v2600, %v2602
      %v2604 = vrot.slane %v2590, %v2603
      %v2605 = vcombine.low %v2580, %v2588
      %v2606 = vcombine.high %v2580, %v2588
      %v2608 = vunpack.c.l.s4 1934713408
      %v2609 = vunpack.c.0.s8 %v2608
      %v2610 = vlaneseq
      %v2611 = vshrl.u32 %v2610, 7
      %v2612 = vsub.s32 %v2609, %v2611
      %v2613 = vrot.slane %v2605, %v2612
      %v2615 = vunpack.c.l.s4 1934713408
      %v2616 = vunpack.c.0.s8 %v2615
      %v2617 = vlaneseq
      %v2618 = vshrl.u32 %v2617, 7
      %v2619 = vsub.s32 %v2616, %v2618
      %v2620 = vrot.slane %v2606, %v2619
      %v2621 = vcombine.low %v2597, %v2613
      %v2622 = vcombine.high %v2597, %v2613
      %v2623 = vcombine.low %v2604, %v2620
      %v2624 = vcombine.high %v2604, %v2620
      %v2625 = vcombine.low %v2529, %v2536
      %v2627 = vunpack.c.l.s4 1983009808
      %v2628 = vunpack.c.0.s8 %v2627
      %v2629 = vlaneseq
      %v2630 = vshrl.u32 %v2629, 7
      %v2631 = vsub.s32 %v2628, %v2630
      %v2632 = vrot.slane %v2625, %v2631
      %v2633 = vcombine.low %v2553, %v2554
      %v2635 = vunpack.c.l.s4 1983009808
      %v2636 = vunpack.c.0.s8 %v2635
      %v2637 = vlaneseq
      %v2638 = vshrl.u32 %v2637, 7
      %v2639 = vsub.s32 %v2636, %v2638
      %v2640 = vrot.slane %v2633, %v2639
      %v2641 = vcombine.low %v2545, %v2552
      %v2643 = vunpack.c.l.s4 1983009808
      %v2644 = vunpack.c.0.s8 %v2643
      %v2645 = vlaneseq
      %v2646 = vshrl.u32 %v2645, 7
      %v2647 = vsub.s32 %v2644, %v2646
      %v2648 = vrot.slane %v2641, %v2647
      %v2649 = vcombine.low %v2555, %v2556
      %v2651 = vunpack.c.l.s4 1983009808
      %v2652 = vunpack.c.0.s8 %v2651
      %v2653 = vlaneseq
      %v2654 = vshrl.u32 %v2653, 7
      %v2655 = vsub.s32 %v2652, %v2654
      %v2656 = vrot.slane %v2649, %v2655
      %v2657 = vcombine.low %v2632, %v2640
      %v2658 = vcombine.high %v2632, %v2640
      %v2660 = vunpack.c.l.s4 1934713408
      %v2661 = vunpack.c.0.s8 %v2660
      %v2662 = vlaneseq
      %v2663 = vshrl.u32 %v2662, 7
      %v2664 = vsub.s32 %v2661, %v2663
      %v2665 = vrot.slane %v2657, %v2664
      %v2667 = vunpack.c.l.s4 1934713408
      %v2668 = vunpack.c.0.s8 %v2667
      %v2669 = vlaneseq
      %v2670 = vshrl.u32 %v2669, 7
      %v2671 = vsub.s32 %v2668, %v2670
      %v2672 = vrot.slane %v2658, %v2671
      %v2673 = vcombine.low %v2648, %v2656
      %v2674 = vcombine.high %v2648, %v2656
      %v2676 = vunpack.c.l.s4 1934713408
      %v2677 = vunpack.c.0.s8 %v2676
      %v2678 = vlaneseq
      %v2679 = vshrl.u32 %v2678, 7
      %v2680 = vsub.s32 %v2677, %v2679
      %v2681 = vrot.slane %v2673, %v2680
      %v2683 = vunpack.c.l.s4 1934713408
      %v2684 = vunpack.c.0.s8 %v2683
      %v2685 = vlaneseq
      %v2686 = vshrl.u32 %v2685, 7
      %v2687 = vsub.s32 %v2684, %v2686
      %v2688 = vrot.slane %v2674, %v2687
      %v2689 = vcombine.low %v2665, %v2681
      %v2690 = vcombine.high %v2665, %v2681
      %v2691 = vcombine.low %v2672, %v2688
      %v2692 = vcombine.high %v2672, %v2688
      %2695 = vrot.lane.b32.xlu0 %v2622, 8
      %v2696 = vpop.permute.xlu0 %2695
      %2697 = vrot.lane.b32.xlu0 %v2690, 8
      %v2698 = vpop.permute.xlu0 %2697
      %2703 = vrot.lane.b32.xlu0 %v2623, 16
      %v2704 = vpop.permute.xlu0 %2703
      %2705 = vrot.lane.b32.xlu0 %v2691, 16
      %v2706 = vpop.permute.xlu0 %2705
      %2711 = vrot.lane.b32.xlu0 %v2624, 24
      %v2712 = vpop.permute.xlu0 %2711
      %2713 = vrot.lane.b32.xlu0 %v2692, 24
      %v2714 = vpop.permute.xlu0 %2713
      %v2717 = vsel %vm1313, %v2621, %v2696
      %v2718 = vsel %vm1313, %v2689, %v2698
      %vm2719 = vcmask 130048
      %v2720 = vsel %vm2719, %v2717, %v2704
      %v2721 = vsel %vm2719, %v2718, %v2706
      %vm2722 = vcmask 195584
      %v2723 = vsel %vm2722, %v2720, %v2712
      %v2724 = vsel %vm2722, %v2721, %v2714
      %v2725 = vpack.c.bf16 %v2724, %v2723
      %v2726 = vld [vmem:[%s10] sm:$0xf]
      %v2727 = vld [vmem:[%s10 + $0x4] sm:$0xf]
      %v2728 = vld [vmem:[%s10 + $0x8] sm:$0xf]
      %v2729 = vld [vmem:[%s10 + $0xc] sm:$0xf]
      %v2730 = vld [vmem:[#allocation14] sm:$0x1]
      %v2732 = vlaneseq
      %v2733 = vshrl.u32 %v2732, 7
      %v2734 = vsub.s32 0, %v2733
      %v2735 = vrot.slane %v2730, %v2734
      %v2741 = vunpack.c.l.b16 %v2726
      %v2742 = vunpack.c.l.b16 %v2727
      %v2743 = vunpack.c.l.b16 %v2728
      %v2744 = vunpack.c.l.b16 %v2729
      %v2745 = vpack.c.b16 %v2742, %v2741
      %v2746 = vpack.c.b16 %v2744, %v2743
      %v2750 = vsel %vm592, %v2725, 0
      %2752 = vmatprep.subr.bf16.mxu0 0
      %2753 = vmatpush1.bf16.msra.mxu0 %v2745
      %2754 = vmatprep.subr.bf16.mxu0 0
      %2755 = vmatpush1.bf16.msra.mxu0 %v2746
      %2756 = vmatprep.subr.bf16.mxu0 0
      %2757 = vmatpush1.bf16.msra.mxu0 0
      %2758 = vmatprep.subr.bf16.mxu0 0
      %2759 = vmatpush1.bf16.msra.mxu0 0
      %2760 = vmatprep.subr.bf16.mxu0 0
      %2761 = vmatpush1.bf16.msra.mxu0 0
      %2762 = vmatprep.subr.bf16.mxu0 0
      %2763 = vmatpush1.bf16.msra.mxu0 0
      %2764 = vmatprep.subr.bf16.mxu0 0
      %2765 = vmatpush1.bf16.msra.mxu0 0
      %2766 = vmatprep.subr.bf16.mxu0 0
      %2767 = vmatpush1.bf16.msra.mxu0 0
      %2768 = vmatprep.subr.bf16.mxu0 0
      %2769 = vmatpush1.bf16.msra.mxu0 0
      %2770 = vmatprep.subr.bf16.mxu0 0
      %2771 = vmatpush1.bf16.msra.mxu0 0
      %2772 = vmatprep.subr.bf16.mxu0 0
      %2773 = vmatpush1.bf16.msra.mxu0 0
      %2774 = vmatprep.subr.bf16.mxu0 0
      %2775 = vmatpush1.bf16.msra.mxu0 0
      %2776 = vmatprep.subr.bf16.mxu0 0
      %2777 = vmatpush1.bf16.msra.mxu0 0
      %2778 = vmatprep.subr.bf16.mxu0 0
      %2779 = vmatpush1.bf16.msra.mxu0 0
      %2780 = vmatprep.subr.bf16.mxu0 0
      %2781 = vmatpush1.bf16.msra.mxu0 0
      %2782 = vmatprep.subr.bf16.mxu0 0
      %2783 = vmatpush1.bf16.msra.mxu0 0
      %2784 = vmatprep.mubr.bf16.mxu0 0
      %2785 = vmatmul.mubr.bf16.gmra.mrb[0].mxu0 %v2750
      %v2786 = vpop.f32.mrb[0].mxu0
      %v2787 = vadd.f32 %v2735, %v2786
      %v2788 = vpop.f32.mrb[0].mxu0
      %v2789 = vpop.f32.mrb[0].mxu0
      %v2790 = vadd.f32 %v2735, %v2789
      %v2791 = vpop.f32.mrb[0].mxu0
      %2792 = vdwg.mxu0
      %v2793 = vld [vmem:[%s2] sm:$0xff]
      %v2794 = vld [vmem:[%s2 + $0x8] sm:$0xff]
      %v2795 = vadd.f32 %v2793, %v2787
      %v2796 = vadd.f32 %v2794, %v2790
      %v2797 = vld [vmem:[#allocation15] sm:$0x1]
      %v2798 = vld [vmem:[#allocation17] sm:$0x1]
      %v2799 = vsel %vm592, %v2795, 0.0
      %2800 = vadd.xlane.f32.xlu0 %v2799
      %v2801 = vpop.xlane.xlu0 %2800
      %v2802 = vsel %vm592, %v2796, 0.0
      %2803 = vadd.xlane.f32.xlu0 %v2802
      %v2804 = vpop.xlane.xlu0 %2803
      %v2805 = vrcp.pop 32.0
      %v2806 = vmul.f32 %v2801, %v2805
      %v2807 = vmul.f32 %v2804, %v2805
      %v2808 = vsub.f32 %v2795, %v2806
      %v2809 = vsub.f32 %v2796, %v2807
      %v2810 = vmul.f32 %v2808, %v2808
      %v2811 = vmul.f32 %v2809, %v2809
      %v2812 = vsel %vm592, %v2810, 0.0
      %2813 = vadd.xlane.f32.xlu0 %v2812
      %v2814 = vpop.xlane.xlu0 %2813
      %v2815 = vsel %vm592, %v2811, 0.0
      %2816 = vadd.xlane.f32.xlu0 %v2815
      %v2817 = vpop.xlane.xlu0 %2816
      %v2818 = vmul.f32 %v2814, %v2805
      %v2819 = vmul.f32 %v2817, %v2805
      %v2820 = vadd.f32 %v2818, 1e-05
      %v2821 = vadd.f32 %v2819, 1e-05
      %v2822 = vrsqrt.pop %v2820
      %v2823 = vrsqrt.pop %v2821
      %v2824 = vmul.f32 %v2808, %v2822
      %v2825 = vmul.f32 %v2809, %v2823
      %v2827 = vlaneseq
      %v2828 = vshrl.u32 %v2827, 7
      %v2829 = vsub.s32 0, %v2828
      %v2830 = vrot.slane %v2797, %v2829
      %v2832 = vmul.f32 %v2824, %v2830
      %v2833 = vmul.f32 %v2825, %v2830
      %v2835 = vlaneseq
      %v2836 = vshrl.u32 %v2835, 7
      %v2837 = vsub.s32 0, %v2836
      %v2838 = vrot.slane %v2798, %v2837
      %v2840 = vadd.f32 %v2832, %v2838
      %v2841 = vadd.f32 %v2833, %v2838
      %v2842 = vpack.c.bf16 %v2841, %v2840
      %v2843 = vld [vmem:[%s14] sm:$0xf]
      %v2844 = vld [vmem:[%s14 + $0x4] sm:$0xf]
      %v2845 = vld [vmem:[%s14 + $0x8] sm:$0xf]
      %v2846 = vld [vmem:[%s14 + $0xc] sm:$0xf]
      %v2847 = vld [vmem:[%s15] sm:$0x1]
      %v2849 = vlaneseq
      %v2850 = vshrl.u32 %v2849, 7
      %v2851 = vsub.s32 0, %v2850
      %v2852 = vrot.slane %v2847, %v2851
      %v2858 = vunpack.c.l.b16 %v2843
      %v2859 = vunpack.c.l.b16 %v2844
      %v2860 = vunpack.c.l.b16 %v2845
      %v2861 = vunpack.c.l.b16 %v2846
      %v2862 = vpack.c.b16 %v2859, %v2858
      %v2863 = vpack.c.b16 %v2861, %v2860
      %v2867 = vsel %vm592, %v2842, 0
      %2869 = vmatprep.subr.bf16.mxu0 0
      %2870 = vmatpush1.bf16.msra.mxu0 %v2862
      %2871 = vmatprep.subr.bf16.mxu0 0
      %2872 = vmatpush1.bf16.msra.mxu0 %v2863
      %2873 = vmatprep.subr.bf16.mxu0 0
      %2874 = vmatpush1.bf16.msra.mxu0 0
      %2875 = vmatprep.subr.bf16.mxu0 0
      %2876 = vmatpush1.bf16.msra.mxu0 0
      %2877 = vmatprep.subr.bf16.mxu0 0
      %2878 = vmatpush1.bf16.msra.mxu0 0
      %2879 = vmatprep.subr.bf16.mxu0 0
      %2880 = vmatpush1.bf16.msra.mxu0 0
      %2881 = vmatprep.subr.bf16.mxu0 0
      %2882 = vmatpush1.bf16.msra.mxu0 0
      %2883 = vmatprep.subr.bf16.mxu0 0
      %2884 = vmatpush1.bf16.msra.mxu0 0
      %2885 = vmatprep.subr.bf16.mxu0 0
      %2886 = vmatpush1.bf16.msra.mxu0 0
      %2887 = vmatprep.subr.bf16.mxu0 0
      %2888 = vmatpush1.bf16.msra.mxu0 0
      %2889 = vmatprep.subr.bf16.mxu0 0
      %2890 = vmatpush1.bf16.msra.mxu0 0
      %2891 = vmatprep.subr.bf16.mxu0 0
      %2892 = vmatpush1.bf16.msra.mxu0 0
      %2893 = vmatprep.subr.bf16.mxu0 0
      %2894 = vmatpush1.bf16.msra.mxu0 0
      %2895 = vmatprep.subr.bf16.mxu0 0
      %2896 = vmatpush1.bf16.msra.mxu0 0
      %2897 = vmatprep.subr.bf16.mxu0 0
      %2898 = vmatpush1.bf16.msra.mxu0 0
      %2899 = vmatprep.subr.bf16.mxu0 0
      %2900 = vmatpush1.bf16.msra.mxu0 0
      %2901 = vmatprep.mubr.bf16.mxu0 0
      %2902 = vmatmul.mubr.bf16.gmra.mrb[0].mxu0 %v2867
      %v2903 = vpop.f32.mrb[0].mxu0
      %v2904 = vadd.f32 %v2852, %v2903
      %v2905 = vpop.f32.mrb[0].mxu0
      %v2906 = vpop.f32.mrb[0].mxu0
      %v2907 = vadd.f32 %v2852, %v2906
      %v2908 = vpop.f32.mrb[0].mxu0
      %2909 = vdwg.mxu0
      %v2910 = vmax.f32 %v2904, 0.0
      %v2911 = vmax.f32 %v2907, 0.0
      %v2912 = vpack.c.bf16 %v2911, %v2910
      %v2913 = vld [vmem:[%s16] sm:$0xf]
      %v2914 = vld [vmem:[%s16 + $0x4] sm:$0xf]
      %v2915 = vld [vmem:[%s16 + $0x8] sm:$0xf]
      %v2916 = vld [vmem:[%s16 + $0xc] sm:$0xf]
      %v2917 = vld [vmem:[%s16 + $0x10] sm:$0xf]
      %v2918 = vld [vmem:[%s16 + $0x14] sm:$0xf]
      %v2919 = vld [vmem:[%s16 + $0x18] sm:$0xf]
      %v2920 = vld [vmem:[%s16 + $0x1c] sm:$0xf]
      %v2921 = vld [vmem:[%s16 + $0x20] sm:$0xf]
      %v2922 = vld [vmem:[%s16 + $0x24] sm:$0xf]
      %v2923 = vld [vmem:[%s16 + $0x28] sm:$0xf]
      %v2924 = vld [vmem:[%s16 + $0x2c] sm:$0xf]
      %v2925 = vld [vmem:[%s16 + $0x30] sm:$0xf]
      %v2926 = vld [vmem:[%s16 + $0x34] sm:$0xf]
      %v2927 = vld [vmem:[%s16 + $0x38] sm:$0xf]
      %v2928 = vld [vmem:[%s16 + $0x3c] sm:$0xf]
      %v2929 = vld [vmem:[%s17] sm:$0x1]
      %v2931 = vlaneseq
      %v2932 = vshrl.u32 %v2931, 7
      %v2933 = vsub.s32 0, %v2932
      %v2934 = vrot.slane %v2929, %v2933
      %v2952 = vunpack.c.l.b16 %v2913
      %v2953 = vunpack.c.l.b16 %v2914
      %v2954 = vunpack.c.l.b16 %v2915
      %v2955 = vunpack.c.l.b16 %v2916
      %v2956 = vunpack.c.l.b16 %v2917
      %v2957 = vunpack.c.l.b16 %v2918
      %v2958 = vunpack.c.l.b16 %v2919
      %v2959 = vunpack.c.l.b16 %v2920
      %v2960 = vunpack.c.l.b16 %v2921
      %v2961 = vunpack.c.l.b16 %v2922
      %v2962 = vunpack.c.l.b16 %v2923
      %v2963 = vunpack.c.l.b16 %v2924
      %v2964 = vunpack.c.l.b16 %v2925
      %v2965 = vunpack.c.l.b16 %v2926
      %v2966 = vunpack.c.l.b16 %v2927
      %v2967 = vunpack.c.l.b16 %v2928
      %v2968 = vpack.c.b16 %v2953, %v2952
      %v2969 = vpack.c.b16 %v2955, %v2954
      %v2970 = vpack.c.b16 %v2957, %v2956
      %v2971 = vpack.c.b16 %v2959, %v2958
      %v2972 = vpack.c.b16 %v2961, %v2960
      %v2973 = vpack.c.b16 %v2963, %v2962
      %v2974 = vpack.c.b16 %v2965, %v2964
      %v2975 = vpack.c.b16 %v2967, %v2966
      %2984 = vmatprep.subr.bf16.mxu0 0
      %2985 = vmatpush1.bf16.msra.mxu0 %v2968
      %2986 = vmatprep.subr.bf16.mxu0 0
      %2987 = vmatpush1.bf16.msra.mxu0 %v2969
      %2988 = vmatprep.subr.bf16.mxu0 0
      %2989 = vmatpush1.bf16.msra.mxu0 %v2970
      %2990 = vmatprep.subr.bf16.mxu0 0
      %2991 = vmatpush1.bf16.msra.mxu0 %v2971
      %2992 = vmatprep.subr.bf16.mxu0 0
      %2993 = vmatpush1.bf16.msra.mxu0 %v2972
      %2994 = vmatprep.subr.bf16.mxu0 0
      %2995 = vmatpush1.bf16.msra.mxu0 %v2973
      %2996 = vmatprep.subr.bf16.mxu0 0
      %2997 = vmatpush1.bf16.msra.mxu0 %v2974
      %2998 = vmatprep.subr.bf16.mxu0 0
      %2999 = vmatpush1.bf16.msra.mxu0 %v2975
      %3000 = vmatprep.subr.bf16.mxu0 0
      %3001 = vmatpush1.bf16.msra.mxu0 0
      %3002 = vmatprep.subr.bf16.mxu0 0
      %3003 = vmatpush1.bf16.msra.mxu0 0
      %3004 = vmatprep.subr.bf16.mxu0 0
      %3005 = vmatpush1.bf16.msra.mxu0 0
      %3006 = vmatprep.subr.bf16.mxu0 0
      %3007 = vmatpush1.bf16.msra.mxu0 0
      %3008 = vmatprep.subr.bf16.mxu0 0
      %3009 = vmatpush1.bf16.msra.mxu0 0
      %3010 = vmatprep.subr.bf16.mxu0 0
      %3011 = vmatpush1.bf16.msra.mxu0 0
      %3012 = vmatprep.subr.bf16.mxu0 0
      %3013 = vmatpush1.bf16.msra.mxu0 0
      %3014 = vmatprep.subr.bf16.mxu0 0
      %3015 = vmatpush1.bf16.msra.mxu0 0
      %3016 = vmatprep.mubr.bf16.mxu0 0
      %3017 = vmatmul.mubr.bf16.gmra.mrb[0].mxu0 %v2912
      %v3018 = vpop.f32.mrb[0].mxu0
      %v3019 = vadd.f32 %v2934, %v3018
      %v3020 = vpop.f32.mrb[0].mxu0
      %v3021 = vpop.f32.mrb[0].mxu0
      %v3022 = vadd.f32 %v2934, %v3021
      %v3023 = vpop.f32.mrb[0].mxu0
      %3024 = vdwg.mxu0
      %v3025 = vadd.f32 %v3019, %v2840
      %v3026 = vadd.f32 %v3022, %v2841
      %v3027 = vld [vmem:[%s18] sm:$0x1]
      %v3028 = vld [vmem:[%s19] sm:$0x1]
      %v3029 = vsel %vm592, %v3025, 0.0
      %3030 = vadd.xlane.f32.xlu0 %v3029
      %v3031 = vpop.xlane.xlu0 %3030
      %v3032 = vsel %vm592, %v3026, 0.0
      %3033 = vadd.xlane.f32.xlu0 %v3032
      %v3034 = vpop.xlane.xlu0 %3033
      %v3035 = vmul.f32 %v3031, %v2805
      %v3036 = vmul.f32 %v3034, %v2805
      %v3037 = vsub.f32 %v3025, %v3035
      %v3038 = vsub.f32 %v3026, %v3036
      %v3039 = vmul.f32 %v3037, %v3037
      %v3040 = vmul.f32 %v3038, %v3038
      %v3041 = vsel %vm592, %v3039, 0.0
      %3042 = vadd.xlane.f32.xlu0 %v3041
      %v3043 = vpop.xlane.xlu0 %3042
      %v3044 = vsel %vm592, %v3040, 0.0
      %3045 = vadd.xlane.f32.xlu0 %v3044
      %v3046 = vpop.xlane.xlu0 %3045
      %v3047 = vmul.f32 %v3043, %v2805
      %v3048 = vmul.f32 %v3046, %v2805
      %v3049 = vadd.f32 %v3047, 1e-05
      %v3050 = vadd.f32 %v3048, 1e-05
      %v3051 = vrsqrt.pop %v3049
      %v3052 = vrsqrt.pop %v3050
      %v3053 = vmul.f32 %v3037, %v3051
      %v3054 = vmul.f32 %v3038, %v3052
      %v3056 = vlaneseq
      %v3057 = vshrl.u32 %v3056, 7
      %v3058 = vsub.s32 0, %v3057
      %v3059 = vrot.slane %v3027, %v3058
      %v3061 = vmul.f32 %v3053, %v3059
      %v3062 = vmul.f32 %v3054, %v3059
      %v3064 = vlaneseq
      %v3065 = vshrl.u32 %v3064, 7
      %v3066 = vsub.s32 0, %v3065
      %v3067 = vrot.slane %v3028, %v3066
      %v3069 = vadd.f32 %v3061, %v3067
      %v3070 = vadd.f32 %v3062, %v3067
      %3071 = vst.msk [vmem:[#allocation18] sm:$0xff] %vm592, %v3069
      %3072 = vst.msk [vmem:[#allocation18 + $0x8] sm:$0xff] %vm592, %v3070
    $region117: #{tpu_custom_call.1} parent=1 // pred_fallthru
      _
    // Predicated region
    $region118: #{tpu_custom_call.1} parent=1 // pred_check
      _
    $region119: #{tpu_custom_call.1} parent=1 // pred_check_branch
      %3074 = sbr.rel (0) target = $region121
    $region120: #{tpu_custom_call.1} parent=1 // pred_region
      %s3076 = ssub.s32 256, 256
      %3077 = vsyncadd [#allocation8], %s3076
      %s3078 = sshll.u32 [#allocation18], 4
      %s3079 = int_to_ptr.vmem [resolvable:$true] %s3078
      %3084 = dma.vmem_to_hbm [thread:$0]  %s3079, 256, %s20, [#allocation8], 128, 128, 8
    $region121: #{tpu_custom_call.1} parent=1 // pred_fallthru
      _
    // Predicated region
    $region122: #{tpu_custom_call.1} parent=1 // pred_check
      _
    $region123: #{tpu_custom_call.1} parent=1 // pred_check_branch
      %3086 = sbr.rel (0) target = $region125
    $region124: #{tpu_custom_call.1} parent=1 // pred_region
      %3087 = dma.done [#allocation8], 256
    $region125: #{tpu_custom_call.1} parent=1 // pred_fallthru
      _
    %3088 = vsyncpa [#allocation7], 1
    %3089 = vsyncpa [#allocation10], 1
    %3090 = vsyncpa [#allocation13], 1
    %3091 = vsyncpa [#allocation16], 1
    %3092 = vsyncpa [#allocation8], 1

</llo_original>
